<compile_context>
chip_gen: v6e
topology: v6e:2x2x1
jax: 0.10.0
libtpu: 0.0.40
codegen_flags: <defaults>
</compile_context>

<pallas_src>
import jax
import jax.numpy as jnp
from jax import lax
from jax.experimental import pallas as pl
from jax.experimental.pallas import tpu as pltpu  # noqa: F401  (TPU backend assumed)

# ---- model hyper-parameters (small, consistent with the module) ----
B = 2          # batch
S = 8          # decoder (target) length
S_ENC = 8      # encoder (source) length
E = 32         # d_model
H = 4          # decoder_attention_heads
HD = E // H    # head_dim
FFN = 64       # decoder_ffn_dim
LN_EPS = 1e-5
NEG_MASK = -10000.0   # value used by masked_fill / causal mask in the module
NEG_BLOCK = -1e9      # cross-batch block killer (underflows to exactly 0)

# column offsets inside the packed weight slab (64, 384)
C_QKV_S = 0            # (E, 3E)
C_O_S = 96             # (E, E)
C_Q_C = 128            # (E, E)
C_KV_C = 160           # (E, 2E)
C_O_C = 224            # (E, E)
C_FC1 = 256            # (E, FFN)
C_FC2 = 320            # (FFN, E)
W_COLS = 384

# column offsets inside the packed small-param slab (16, 256)
SB_COL = 128           # self-attention additive bias (B*S, B*S)
CB_COL = SB_COL + B * S  # cross-attention additive bias (B*S, B*S_ENC)
SP_COLS = 256


def _gelu_exact(x):
    # torch.nn.functional.gelu default (erf-based, exact)
    return 0.5 * x * (1.0 + lax.erf(x * 0.7071067811865476))


# ---------------------------------------------------------------------------
# Kernel
# ---------------------------------------------------------------------------
def decoder_layer_kernel(x_ref, enc_ref, w_ref, sp_ref, out_ref):
    x = x_ref[...]                       # (B*S, E), rows in (batch, seq) order
    enc = enc_ref[...]                   # (B*S_ENC, E)
    pp = sp_ref[...]                     # (16, 256) packed small params + masks

    self_bias = pp[:, SB_COL:SB_COL + B * S]          # (B*S, B*S)
    cross_bias = pp[:, CB_COL:CB_COL + B * S_ENC]     # (B*S, B*S_ENC)

    scaling = jnp.float32(HD ** -0.5)

    def layer_norm(t, g_row, b_row):
        g = pp[g_row:g_row + 1, :E]
        b = pp[b_row:b_row + 1, :E]
        mu = jnp.mean(t, axis=-1, keepdims=True)
        var = jnp.mean((t - mu) ** 2, axis=-1, keepdims=True)
        return (t - mu) * lax.rsqrt(var + LN_EPS) * g + b

    def mha(q, k, v, wo, bias, record_probs):
        """q:(R,E) k,v:(Rk,E) wo:(E,E) bias:(R,Rk) additive (block-diag over batch).
        Returns out-projected attention output (R,E) and per-head probs."""
        ao = jnp.zeros((q.shape[0], E), jnp.float32)
        probs = []
        for h in range(H):
            lo, hi = h * HD, (h + 1) * HD
            s = jnp.dot(q[:, lo:hi], k[:, lo:hi].T,
                        preferred_element_type=jnp.float32) + bias
            s = s - jnp.max(s, axis=-1, keepdims=True)
            e = jnp.exp(s)
            p = e * pl.reciprocal(jnp.sum(e, axis=-1, keepdims=True), approx=True)
            if record_probs:
                probs.append(p)
            ctx = jnp.dot(p, v[:, lo:hi], preferred_element_type=jnp.float32)
            # fold the output projection into the head loop: no concatenate
            ao = ao + jnp.dot(ctx, wo[lo:hi, :], preferred_element_type=jnp.float32)
        return ao, probs

    # ---- self-attention ----
    w_qkv = w_ref[0:E, C_QKV_S:C_QKV_S + 3 * E]
    qkv = jnp.dot(x, w_qkv, preferred_element_type=jnp.float32) + pp[0:1, :3 * E]
    wo_s = w_ref[0:E, C_O_S:C_O_S + E]
    ao_s, probs = mha(qkv[:, :E] * scaling, qkv[:, E:2 * E], qkv[:, 2 * E:],
                      wo_s, self_bias, True)
    x1 = layer_norm(x + ao_s + pp[1:2, :E], 2, 3)

    # ---- cross-attention (encoder-decoder) ----
    w_qc = w_ref[0:E, C_Q_C:C_Q_C + E]
    q_c = (jnp.dot(x1, w_qc, preferred_element_type=jnp.float32)
           + pp[4:5, :E]) * scaling
    w_kvc = w_ref[0:E, C_KV_C:C_KV_C + 2 * E]
    kv = jnp.dot(enc, w_kvc, preferred_element_type=jnp.float32) + pp[5:6, :2 * E]
    wo_c = w_ref[0:E, C_O_C:C_O_C + E]
    ao_c, _ = mha(q_c, kv[:, :E], kv[:, E:], wo_c, cross_bias, False)
    x2 = layer_norm(x1 + ao_c + pp[6:7, :E], 7, 8)

    # ---- feed-forward ----
    w1 = w_ref[0:E, C_FC1:C_FC1 + FFN]
    h1 = _gelu_exact(jnp.dot(x2, w1, preferred_element_type=jnp.float32)
                     + pp[9:10, :FFN])
    w2 = w_ref[:, C_FC2:C_FC2 + E]
    h2 = jnp.dot(h1, w2, preferred_element_type=jnp.float32) + pp[10:11, :E]
    y = layer_norm(x2 + h2, 11, 12)

    # single lane-dense (16,128) store: [hidden | per-head self-attn probs | pad]
    probs_all = jnp.concatenate(probs, axis=1)                       # (B*S, H*B*S)
    pad = jnp.zeros((B * S, 128 - E - H * B * S), jnp.float32)
    out_ref[...] = jnp.concatenate([y, probs_all, pad], axis=1).astype(out_ref.dtype)


# ---------------------------------------------------------------------------
# Packing helpers
# ---------------------------------------------------------------------------
def _pack_row(v):
    v = jnp.asarray(v, jnp.float32).reshape(1, -1)
    return jnp.pad(v, ((0, 0), (0, 128 - v.shape[1])))


def pack_small_params(p, self_bias, cross_bias):
    rows = [
        _pack_row(p["b_qkv_s"]),   # 0
        _pack_row(p["b_o_s"]),     # 1
        _pack_row(p["ln1_g"]),     # 2
        _pack_row(p["ln1_b"]),     # 3
        _pack_row(p["b_q_c"]),     # 4
        _pack_row(p["b_kv_c"]),    # 5
        _pack_row(p["b_o_c"]),     # 6
        _pack_row(p["ln2_g"]),     # 7
        _pack_row(p["ln2_b"]),     # 8
        _pack_row(p["b1"]),        # 9
        _pack_row(p["b2"]),        # 10
        _pack_row(p["ln3_g"]),     # 11
        _pack_row(p["ln3_b"]),     # 12
    ]
    left = jnp.concatenate(rows, axis=0)
    left = jnp.pad(left, ((0, B * S - left.shape[0]), (0, 0)))       # (16, 128)
    right = jnp.concatenate([self_bias, cross_bias], axis=1)         # (16, 32)
    right = jnp.pad(right, ((0, 0), (0, 128 - right.shape[1])))      # (16, 128)
    return jnp.concatenate([left, right], axis=1)                    # (16, 256)


def pack_weights(p):
    top = jnp.concatenate(
        [p["w_qkv_s"], p["w_o_s"], p["w_q_c"], p["w_kv_c"], p["w_o_c"], p["w1"]],
        axis=1).astype(jnp.float32)                                   # (E, 320)
    top = jnp.pad(top, ((0, FFN - E), (0, 0)))                        # (FFN, 320)
    w = jnp.concatenate([top, jnp.asarray(p["w2"], jnp.float32)], axis=1)  # (FFN, 352)
    return jnp.pad(w, ((0, 0), (0, W_COLS - w.shape[1])))             # (FFN, 384)


# ---------------------------------------------------------------------------
# Wrapper
# ---------------------------------------------------------------------------
@jax.jit
def decoder_layer(x_sbe, enc_sbe, attn_mask, enc_pad_mask, params):
    """x_sbe: (S,B,E); enc_sbe: (S_ENC,B,E); attn_mask: (S,S) additive float;
    enc_pad_mask: (B,S_ENC) bool (True = padded encoder key)."""
    x2d = jnp.transpose(x_sbe, (1, 0, 2)).reshape(B * S, E)
    enc2d = jnp.transpose(enc_sbe, (1, 0, 2)).reshape(B * S_ENC, E)

    # block-diagonal additive biases: within-batch blocks carry the real masks,
    # cross-batch blocks get a huge negative so they underflow to exactly 0.
    row_b = jnp.repeat(jnp.arange(B), S)
    col_b_self = jnp.repeat(jnp.arange(B), S)
    col_b_cross = jnp.repeat(jnp.arange(B), S_ENC)

    self_bias = jnp.where(row_b[:, None] == col_b_self[None, :],
                          jnp.tile(attn_mask.astype(jnp.float32), (B, B)),
                          jnp.float32(NEG_BLOCK))
    pad_bias = enc_pad_mask.astype(jnp.float32) * jnp.float32(NEG_MASK)  # (B,S_ENC)
    cross_bias = jnp.where(row_b[:, None] == col_b_cross[None, :],
                           pad_bias.reshape(-1)[None, :],
                           jnp.float32(NEG_BLOCK))

    small = pack_small_params(params, self_bias, cross_bias)   # (16, 256)
    w_all = pack_weights(params)                               # (64, 384)

    res = pl.pallas_call(
        decoder_layer_kernel,
        out_shape=jax.ShapeDtypeStruct((B * S, 128), jnp.float32),
    )(x2d, enc2d, w_all, small)

    out2d = res[:, :E]
    p_flat = res[:, E:E + H * B * S]                           # (B*S, H*B*S)
    p_all = p_flat.reshape(B, S, H, B, S)
    attn = jnp.stack([p_all[b, :, :, b, :] for b in range(B)],
                     axis=0).transpose(0, 2, 1, 3)             # (B,H,S,S)
    out_sbe = out2d.reshape(B, S, E).transpose(1, 0, 2)        # (S,B,E)
    return out_sbe, attn


# ---------------------------------------------------------------------------
# Parameters / reference
# ---------------------------------------------------------------------------
def init_params(key):
    ks = jax.random.split(key, 20)
    s = 0.02

    def w(k, shape):
        return s * jax.random.normal(k, shape, jnp.float32)

    def g(k):
        return 1.0 + 0.1 * jax.random.normal(k, (E,), jnp.float32)

    def b(k):
        return 0.1 * jax.random.normal(k, (E,), jnp.float32)

    return {
        # linear weights stored transposed: y = x @ W + b
        "w_qkv_s": w(ks[0], (E, 3 * E)), "b_qkv_s": w(ks[1], (3 * E,)),
        "w_o_s":   w(ks[2], (E, E)),     "b_o_s":   w(ks[3], (E,)),
        "ln1_g":   g(ks[4]),             "ln1_b":   b(ks[5]),
        "w_q_c":   w(ks[6], (E, E)),     "b_q_c":   w(ks[7], (E,)),
        "w_kv_c":  w(ks[8], (E, 2 * E)), "b_kv_c":  w(ks[9], (2 * E,)),
        "w_o_c":   w(ks[10], (E, E)),    "b_o_c":   w(ks[11], (E,)),
        "ln2_g":   g(ks[12]),            "ln2_b":   b(ks[13]),
        "w1":      w(ks[14], (E, FFN)),  "b1":      w(ks[15], (FFN,)),
        "w2":      w(ks[16], (FFN, E)),  "b2":      w(ks[17], (E,)),
        "ln3_g":   g(ks[18]),            "ln3_b":   b(ks[19]),
    }


def reference(x_sbe, enc_sbe, attn_mask, enc_pad_mask, p):
    """Pure-JAX mirror of the PyTorch DecoderLayer (eval mode, no cache)."""
    scaling = HD ** (-0.5)

    def split_heads(t):                   # (T,B,E) -> (B,H,T,HD)
        T = t.shape[0]
        return t.reshape(T, B, H, HD).transpose(1, 2, 0, 3)

    def merge_heads(t):                   # (B,H,T,HD) -> (T,B,E)
        T = t.shape[2]
        return t.transpose(2, 0, 1, 3).reshape(T, B, E)

    def ln(t, gamma, beta):
        mu = jnp.mean(t, axis=-1, keepdims=True)
        var = jnp.mean((t - mu) ** 2, axis=-1, keepdims=True)
        return (t - mu) / jnp.sqrt(var + LN_EPS) * gamma + beta

    # self-attention (additive attn_mask, no key padding)
    q = (x_sbe @ p["w_qkv_s"][:, :E] + p["b_qkv_s"][:E]) * scaling
    k = x_sbe @ p["w_qkv_s"][:, E:2 * E] + p["b_qkv_s"][E:2 * E]
    v = x_sbe @ p["w_qkv_s"][:, 2 * E:] + p["b_qkv_s"][2 * E:]
    scores = jnp.einsum("bhqd,bhkd->bhqk", split_heads(q), split_heads(k))
    scores = scores + attn_mask[None, None]
    self_w = jax.nn.softmax(scores, axis=-1)                       # (B,H,S,S)
    sa = merge_heads(jnp.einsum("bhqk,bhkd->bhqd", self_w, split_heads(v)))
    x1 = ln(x_sbe + sa @ p["w_o_s"] + p["b_o_s"], p["ln1_g"], p["ln1_b"])

    # cross-attention (key padding mask on encoder states)
    q = (x1 @ p["w_q_c"] + p["b_q_c"]) * scaling
    k = enc_sbe @ p["w_kv_c"][:, :E] + p["b_kv_c"][:E]
    v = enc_sbe @ p["w_kv_c"][:, E:] + p["b_kv_c"][E:]
    scores = jnp.einsum("bhqd,bhkd->bhqk", split_heads(q), split_heads(k))
    scores = jnp.where(enc_pad_mask[:, None, None, :], NEG_MASK, scores)
    cross_w = jax.nn.softmax(scores, axis=-1)
    ca = merge_heads(jnp.einsum("bhqk,bhkd->bhqd", cross_w, split_heads(v)))
    x2 = ln(x1 + ca @ p["w_o_c"] + p["b_o_c"], p["ln2_g"], p["ln2_b"])

    # feed-forward
    hidden = _gelu_exact(x2 @ p["w1"] + p["b1"])
    x3 = ln(x2 + hidden @ p["w2"] + p["b2"], p["ln3_g"], p["ln3_b"])
    return x3, self_w


# TODO(synk): layer_state KV-cache mutation (stateful dict side-effect in the
# PyTorch module) is not modelled; this implements the no-cache forward path.

if __name__ == "__main__":
    key = jax.random.PRNGKey(0)
    k_x, k_enc, k_p = jax.random.split(key, 3)

    x = jax.random.normal(k_x, (S, B, E), jnp.float32)            # (tgt, batch, embed)
    enc = jax.random.normal(k_enc, (S_ENC, B, E), jnp.float32)    # encoder_hidden_states
    idx = jnp.arange(S)
    attn_mask = jnp.where(idx[None, :] > idx[:, None],
                          jnp.float32(NEG_MASK), jnp.float32(0.0))   # causal, additive
    enc_pad_mask = jnp.zeros((B, S_ENC), jnp.bool_).at[1, -2:].set(True)
    params = init_params(k_p)

    out, self_attn_w = decoder_layer(x, enc, attn_mask, enc_pad_mask, params)
    jax.block_until_ready((out, self_attn_w))

    ref_out, ref_attn = reference(x, enc, attn_mask, enc_pad_mask, params)
    assert out.shape == (S, B, E) and self_attn_w.shape == (B, H, S, S)
    assert jnp.allclose(out, ref_out, atol=2e-3, rtol=2e-3), \
        float(jnp.max(jnp.abs(out - ref_out)))
    assert jnp.allclose(self_attn_w, ref_attn, atol=2e-3, rtol=2e-3), \
        float(jnp.max(jnp.abs(self_attn_w - ref_attn)))

    print("KERNEL_OK")
</pallas_src>

<mosaic_0001>
module attributes {stable_mosaic.version = 11 : i64} {
  func.func @decoder_layer_kernel(%arg0: memref<16x32xf32, #tpu.memory_space<vmem>>, %arg1: memref<16x32xf32, #tpu.memory_space<vmem>>, %arg2: memref<64x384xf32, #tpu.memory_space<vmem>>, %arg3: memref<16x256xf32, #tpu.memory_space<vmem>>, %arg4: memref<16x128xf32, #tpu.memory_space<vmem>>) attributes {dimension_semantics = [], scalar_prefetch = 0 : i64, scratch_operands = 0 : i64, tpu.core_type = #tpu.core_type<tc>} {
    %c0 = arith.constant 0 : index
    %c0_0 = arith.constant 0 : index
    %0 = vector.load %arg0[%c0, %c0_0] : memref<16x32xf32, #tpu.memory_space<vmem>>, vector<16x32xf32>
    %c0_1 = arith.constant 0 : index
    %c0_2 = arith.constant 0 : index
    %1 = vector.load %arg1[%c0_1, %c0_2] : memref<16x32xf32, #tpu.memory_space<vmem>>, vector<16x32xf32>
    %c0_3 = arith.constant 0 : index
    %c0_4 = arith.constant 0 : index
    %2 = vector.load %arg3[%c0_3, %c0_4] : memref<16x256xf32, #tpu.memory_space<vmem>>, vector<16x256xf32>
    %3 = vector.extract_strided_slice %2 {offsets = [0, 128], sizes = [16, 16], strides = [1, 1]} : vector<16x256xf32> to vector<16x16xf32>
    %4 = vector.extract_strided_slice %2 {offsets = [0, 144], sizes = [16, 16], strides = [1, 1]} : vector<16x256xf32> to vector<16x16xf32>
    %c0_5 = arith.constant 0 : index
    %c0_6 = arith.constant 0 : index
    %5 = vector.load %arg2[%c0_5, %c0_6] : memref<64x384xf32, #tpu.memory_space<vmem>>, vector<32x96xf32>
    %cst = arith.constant dense<0.000000e+00> : vector<16x96xf32>
    %6 = tpu.matmul %0, %5, %cst {dimension_numbers = #tpu.dot_dimension_numbers<[1], [0], [0], [1], [0, 0, 1, 1], [], []>} : vector<16x32xf32>, vector<32x96xf32>, vector<16x96xf32> -> vector<16x96xf32>
    %7 = vector.extract_strided_slice %2 {offsets = [0, 0], sizes = [1, 96], strides = [1, 1]} : vector<16x256xf32> to vector<1x96xf32>
    %8 = vector.broadcast %7 : vector<1x96xf32> to vector<16x96xf32>
    %9 = arith.addf %6, %8 : vector<16x96xf32>
    %c0_7 = arith.constant 0 : index
    %c96 = arith.constant 96 : index
    %10 = vector.load %arg2[%c0_7, %c96] : memref<64x384xf32, #tpu.memory_space<vmem>>, vector<32x32xf32>
    %11 = vector.extract_strided_slice %9 {offsets = [0, 0], sizes = [16, 32], strides = [1, 1]} : vector<16x96xf32> to vector<16x32xf32>
    %cst_8 = arith.constant 0.353553385 : f32
    %12 = vector.broadcast %cst_8 : f32 to vector<16x32xf32>
    %13 = arith.mulf %11, %12 : vector<16x32xf32>
    %14 = vector.extract_strided_slice %9 {offsets = [0, 32], sizes = [16, 32], strides = [1, 1]} : vector<16x96xf32> to vector<16x32xf32>
    %15 = vector.extract_strided_slice %9 {offsets = [0, 64], sizes = [16, 32], strides = [1, 1]} : vector<16x96xf32> to vector<16x32xf32>
    %cst_9 = arith.constant 0.000000e+00 : f32
    %16 = vector.broadcast %cst_9 : f32 to vector<16x32xf32>
    %17 = vector.extract_strided_slice %13 {offsets = [0, 0], sizes = [16, 8], strides = [1, 1]} : vector<16x32xf32> to vector<16x8xf32>
    %18 = vector.extract_strided_slice %14 {offsets = [0, 0], sizes = [16, 8], strides = [1, 1]} : vector<16x32xf32> to vector<16x8xf32>
    %19 = tpu.transpose %18, [1, 0] : vector<16x8xf32> -> vector<8x16xf32>
    %cst_10 = arith.constant dense<0.000000e+00> : vector<16x16xf32>
    %20 = tpu.matmul %17, %19, %cst_10 {dimension_numbers = #tpu.dot_dimension_numbers<[1], [0], [0], [1], [0, 0, 1, 1], [], []>} : vector<16x8xf32>, vector<8x16xf32>, vector<16x16xf32> -> vector<16x16xf32>
    %21 = arith.addf %20, %3 : vector<16x16xf32>
    %cst_11 = arith.constant dense<0xFF800000> : vector<16xf32>
    %22 = vector.multi_reduction <maximumf>, %21, %cst_11 [1] : vector<16x16xf32> to vector<16xf32>
    %23 = vector.shape_cast %22 : vector<16xf32> to vector<16x1xf32>
    %24 = vector.broadcast %23 : vector<16x1xf32> to vector<16x16xf32>
    %25 = arith.subf %21, %24 : vector<16x16xf32>
    %26 = math.exp %25 : vector<16x16xf32>
    %cst_12 = arith.constant dense<0.000000e+00> : vector<16xf32>
    %27 = vector.multi_reduction <add>, %26, %cst_12 [1] : vector<16x16xf32> to vector<16xf32>
    %28 = vector.shape_cast %27 : vector<16xf32> to vector<16x1xf32>
    %29 = tpu.reciprocal %28 {approx = true} : vector<16x1xf32> -> vector<16x1xf32>
    %30 = vector.broadcast %29 : vector<16x1xf32> to vector<16x16xf32>
    %31 = arith.mulf %26, %30 : vector<16x16xf32>
    %32 = vector.extract_strided_slice %15 {offsets = [0, 0], sizes = [16, 8], strides = [1, 1]} : vector<16x32xf32> to vector<16x8xf32>
    %cst_13 = arith.constant dense<0.000000e+00> : vector<16x8xf32>
    %33 = tpu.matmul %31, %32, %cst_13 {dimension_numbers = #tpu.dot_dimension_numbers<[1], [0], [0], [1], [0, 0, 1, 1], [], []>} : vector<16x16xf32>, vector<16x8xf32>, vector<16x8xf32> -> vector<16x8xf32>
    %34 = vector.extract_strided_slice %10 {offsets = [0, 0], sizes = [8, 32], strides = [1, 1]} : vector<32x32xf32> to vector<8x32xf32>
    %cst_14 = arith.constant dense<0.000000e+00> : vector<16x32xf32>
    %35 = tpu.matmul %33, %34, %cst_14 {dimension_numbers = #tpu.dot_dimension_numbers<[1], [0], [0], [1], [0, 0, 1, 1], [], []>} : vector<16x8xf32>, vector<8x32xf32>, vector<16x32xf32> -> vector<16x32xf32>
    %36 = arith.addf %16, %35 : vector<16x32xf32>
    %37 = vector.extract_strided_slice %13 {offsets = [0, 8], sizes = [16, 8], strides = [1, 1]} : vector<16x32xf32> to vector<16x8xf32>
    %38 = vector.extract_strided_slice %14 {offsets = [0, 8], sizes = [16, 8], strides = [1, 1]} : vector<16x32xf32> to vector<16x8xf32>
    %39 = tpu.transpose %38, [1, 0] : vector<16x8xf32> -> vector<8x16xf32>
    %cst_15 = arith.constant dense<0.000000e+00> : vector<16x16xf32>
    %40 = tpu.matmul %37, %39, %cst_15 {dimension_numbers = #tpu.dot_dimension_numbers<[1], [0], [0], [1], [0, 0, 1, 1], [], []>} : vector<16x8xf32>, vector<8x16xf32>, vector<16x16xf32> -> vector<16x16xf32>
    %41 = arith.addf %40, %3 : vector<16x16xf32>
    %cst_16 = arith.constant dense<0xFF800000> : vector<16xf32>
    %42 = vector.multi_reduction <maximumf>, %41, %cst_16 [1] : vector<16x16xf32> to vector<16xf32>
    %43 = vector.shape_cast %42 : vector<16xf32> to vector<16x1xf32>
    %44 = vector.broadcast %43 : vector<16x1xf32> to vector<16x16xf32>
    %45 = arith.subf %41, %44 : vector<16x16xf32>
    %46 = math.exp %45 : vector<16x16xf32>
    %cst_17 = arith.constant dense<0.000000e+00> : vector<16xf32>
    %47 = vector.multi_reduction <add>, %46, %cst_17 [1] : vector<16x16xf32> to vector<16xf32>
    %48 = vector.shape_cast %47 : vector<16xf32> to vector<16x1xf32>
    %49 = tpu.reciprocal %48 {approx = true} : vector<16x1xf32> -> vector<16x1xf32>
    %50 = vector.broadcast %49 : vector<16x1xf32> to vector<16x16xf32>
    %51 = arith.mulf %46, %50 : vector<16x16xf32>
    %52 = vector.extract_strided_slice %15 {offsets = [0, 8], sizes = [16, 8], strides = [1, 1]} : vector<16x32xf32> to vector<16x8xf32>
    %cst_18 = arith.constant dense<0.000000e+00> : vector<16x8xf32>
    %53 = tpu.matmul %51, %52, %cst_18 {dimension_numbers = #tpu.dot_dimension_numbers<[1], [0], [0], [1], [0, 0, 1, 1], [], []>} : vector<16x16xf32>, vector<16x8xf32>, vector<16x8xf32> -> vector<16x8xf32>
    %54 = vector.extract_strided_slice %10 {offsets = [8, 0], sizes = [8, 32], strides = [1, 1]} : vector<32x32xf32> to vector<8x32xf32>
    %cst_19 = arith.constant dense<0.000000e+00> : vector<16x32xf32>
    %55 = tpu.matmul %53, %54, %cst_19 {dimension_numbers = #tpu.dot_dimension_numbers<[1], [0], [0], [1], [0, 0, 1, 1], [], []>} : vector<16x8xf32>, vector<8x32xf32>, vector<16x32xf32> -> vector<16x32xf32>
    %56 = arith.addf %36, %55 : vector<16x32xf32>
    %57 = vector.extract_strided_slice %13 {offsets = [0, 16], sizes = [16, 8], strides = [1, 1]} : vector<16x32xf32> to vector<16x8xf32>
    %58 = vector.extract_strided_slice %14 {offsets = [0, 16], sizes = [16, 8], strides = [1, 1]} : vector<16x32xf32> to vector<16x8xf32>
    %59 = tpu.transpose %58, [1, 0] : vector<16x8xf32> -> vector<8x16xf32>
    %cst_20 = arith.constant dense<0.000000e+00> : vector<16x16xf32>
    %60 = tpu.matmul %57, %59, %cst_20 {dimension_numbers = #tpu.dot_dimension_numbers<[1], [0], [0], [1], [0, 0, 1, 1], [], []>} : vector<16x8xf32>, vector<8x16xf32>, vector<16x16xf32> -> vector<16x16xf32>
    %61 = arith.addf %60, %3 : vector<16x16xf32>
    %cst_21 = arith.constant dense<0xFF800000> : vector<16xf32>
    %62 = vector.multi_reduction <maximumf>, %61, %cst_21 [1] : vector<16x16xf32> to vector<16xf32>
    %63 = vector.shape_cast %62 : vector<16xf32> to vector<16x1xf32>
    %64 = vector.broadcast %63 : vector<16x1xf32> to vector<16x16xf32>
    %65 = arith.subf %61, %64 : vector<16x16xf32>
    %66 = math.exp %65 : vector<16x16xf32>
    %cst_22 = arith.constant dense<0.000000e+00> : vector<16xf32>
    %67 = vector.multi_reduction <add>, %66, %cst_22 [1] : vector<16x16xf32> to vector<16xf32>
    %68 = vector.shape_cast %67 : vector<16xf32> to vector<16x1xf32>
    %69 = tpu.reciprocal %68 {approx = true} : vector<16x1xf32> -> vector<16x1xf32>
    %70 = vector.broadcast %69 : vector<16x1xf32> to vector<16x16xf32>
    %71 = arith.mulf %66, %70 : vector<16x16xf32>
    %72 = vector.extract_strided_slice %15 {offsets = [0, 16], sizes = [16, 8], strides = [1, 1]} : vector<16x32xf32> to vector<16x8xf32>
    %cst_23 = arith.constant dense<0.000000e+00> : vector<16x8xf32>
    %73 = tpu.matmul %71, %72, %cst_23 {dimension_numbers = #tpu.dot_dimension_numbers<[1], [0], [0], [1], [0, 0, 1, 1], [], []>} : vector<16x16xf32>, vector<16x8xf32>, vector<16x8xf32> -> vector<16x8xf32>
    %74 = vector.extract_strided_slice %10 {offsets = [16, 0], sizes = [8, 32], strides = [1, 1]} : vector<32x32xf32> to vector<8x32xf32>
    %cst_24 = arith.constant dense<0.000000e+00> : vector<16x32xf32>
    %75 = tpu.matmul %73, %74, %cst_24 {dimension_numbers = #tpu.dot_dimension_numbers<[1], [0], [0], [1], [0, 0, 1, 1], [], []>} : vector<16x8xf32>, vector<8x32xf32>, vector<16x32xf32> -> vector<16x32xf32>
    %76 = arith.addf %56, %75 : vector<16x32xf32>
    %77 = vector.extract_strided_slice %13 {offsets = [0, 24], sizes = [16, 8], strides = [1, 1]} : vector<16x32xf32> to vector<16x8xf32>
    %78 = vector.extract_strided_slice %14 {offsets = [0, 24], sizes = [16, 8], strides = [1, 1]} : vector<16x32xf32> to vector<16x8xf32>
    %79 = tpu.transpose %78, [1, 0] : vector<16x8xf32> -> vector<8x16xf32>
    %cst_25 = arith.constant dense<0.000000e+00> : vector<16x16xf32>
    %80 = tpu.matmul %77, %79, %cst_25 {dimension_numbers = #tpu.dot_dimension_numbers<[1], [0], [0], [1], [0, 0, 1, 1], [], []>} : vector<16x8xf32>, vector<8x16xf32>, vector<16x16xf32> -> vector<16x16xf32>
    %81 = arith.addf %80, %3 : vector<16x16xf32>
    %cst_26 = arith.constant dense<0xFF800000> : vector<16xf32>
    %82 = vector.multi_reduction <maximumf>, %81, %cst_26 [1] : vector<16x16xf32> to vector<16xf32>
    %83 = vector.shape_cast %82 : vector<16xf32> to vector<16x1xf32>
    %84 = vector.broadcast %83 : vector<16x1xf32> to vector<16x16xf32>
    %85 = arith.subf %81, %84 : vector<16x16xf32>
    %86 = math.exp %85 : vector<16x16xf32>
    %cst_27 = arith.constant dense<0.000000e+00> : vector<16xf32>
    %87 = vector.multi_reduction <add>, %86, %cst_27 [1] : vector<16x16xf32> to vector<16xf32>
    %88 = vector.shape_cast %87 : vector<16xf32> to vector<16x1xf32>
    %89 = tpu.reciprocal %88 {approx = true} : vector<16x1xf32> -> vector<16x1xf32>
    %90 = vector.broadcast %89 : vector<16x1xf32> to vector<16x16xf32>
    %91 = arith.mulf %86, %90 : vector<16x16xf32>
    %92 = vector.extract_strided_slice %15 {offsets = [0, 24], sizes = [16, 8], strides = [1, 1]} : vector<16x32xf32> to vector<16x8xf32>
    %cst_28 = arith.constant dense<0.000000e+00> : vector<16x8xf32>
    %93 = tpu.matmul %91, %92, %cst_28 {dimension_numbers = #tpu.dot_dimension_numbers<[1], [0], [0], [1], [0, 0, 1, 1], [], []>} : vector<16x16xf32>, vector<16x8xf32>, vector<16x8xf32> -> vector<16x8xf32>
    %94 = vector.extract_strided_slice %10 {offsets = [24, 0], sizes = [8, 32], strides = [1, 1]} : vector<32x32xf32> to vector<8x32xf32>
    %cst_29 = arith.constant dense<0.000000e+00> : vector<16x32xf32>
    %95 = tpu.matmul %93, %94, %cst_29 {dimension_numbers = #tpu.dot_dimension_numbers<[1], [0], [0], [1], [0, 0, 1, 1], [], []>} : vector<16x8xf32>, vector<8x32xf32>, vector<16x32xf32> -> vector<16x32xf32>
    %96 = arith.addf %76, %95 : vector<16x32xf32>
    %97 = arith.addf %0, %96 : vector<16x32xf32>
    %98 = vector.extract_strided_slice %2 {offsets = [1, 0], sizes = [1, 32], strides = [1, 1]} : vector<16x256xf32> to vector<1x32xf32>
    %99 = vector.broadcast %98 : vector<1x32xf32> to vector<16x32xf32>
    %100 = arith.addf %97, %99 : vector<16x32xf32>
    %101 = vector.extract_strided_slice %2 {offsets = [2, 0], sizes = [1, 32], strides = [1, 1]} : vector<16x256xf32> to vector<1x32xf32>
    %102 = vector.extract_strided_slice %2 {offsets = [3, 0], sizes = [1, 32], strides = [1, 1]} : vector<16x256xf32> to vector<1x32xf32>
    %cst_30 = arith.constant dense<0.000000e+00> : vector<16xf32>
    %103 = vector.multi_reduction <add>, %100, %cst_30 [1] : vector<16x32xf32> to vector<16xf32>
    %104 = vector.shape_cast %103 : vector<16xf32> to vector<16x1xf32>
    %cst_31 = arith.constant 3.200000e+01 : f32
    %105 = vector.broadcast %cst_31 : f32 to vector<16x1xf32>
    %106 = arith.divf %104, %105 : vector<16x1xf32>
    %107 = vector.broadcast %106 : vector<16x1xf32> to vector<16x32xf32>
    %108 = arith.subf %100, %107 : vector<16x32xf32>
    %109 = arith.mulf %108, %108 : vector<16x32xf32>
    %cst_32 = arith.constant dense<0.000000e+00> : vector<16xf32>
    %110 = vector.multi_reduction <add>, %109, %cst_32 [1] : vector<16x32xf32> to vector<16xf32>
    %111 = vector.shape_cast %110 : vector<16xf32> to vector<16x1xf32>
    %cst_33 = arith.constant 3.200000e+01 : f32
    %112 = vector.broadcast %cst_33 : f32 to vector<16x1xf32>
    %113 = arith.divf %111, %112 : vector<16x1xf32>
    %114 = vector.broadcast %106 : vector<16x1xf32> to vector<16x32xf32>
    %115 = arith.subf %100, %114 : vector<16x32xf32>
    %cst_34 = arith.constant 9.99999974E-6 : f32
    %116 = vector.broadcast %cst_34 : f32 to vector<16x1xf32>
    %117 = arith.addf %113, %116 : vector<16x1xf32>
    %118 = math.rsqrt %117 : vector<16x1xf32>
    %119 = vector.broadcast %118 : vector<16x1xf32> to vector<16x32xf32>
    %120 = arith.mulf %115, %119 : vector<16x32xf32>
    %121 = vector.broadcast %101 : vector<1x32xf32> to vector<16x32xf32>
    %122 = arith.mulf %120, %121 : vector<16x32xf32>
    %123 = vector.broadcast %102 : vector<1x32xf32> to vector<16x32xf32>
    %124 = arith.addf %122, %123 : vector<16x32xf32>
    %c0_35 = arith.constant 0 : index
    %c128 = arith.constant 128 : index
    %125 = vector.load %arg2[%c0_35, %c128] : memref<64x384xf32, #tpu.memory_space<vmem>>, vector<32x32xf32>
    %cst_36 = arith.constant dense<0.000000e+00> : vector<16x32xf32>
    %126 = tpu.matmul %124, %125, %cst_36 {dimension_numbers = #tpu.dot_dimension_numbers<[1], [0], [0], [1], [0, 0, 1, 1], [], []>} : vector<16x32xf32>, vector<32x32xf32>, vector<16x32xf32> -> vector<16x32xf32>
    %127 = vector.extract_strided_slice %2 {offsets = [4, 0], sizes = [1, 32], strides = [1, 1]} : vector<16x256xf32> to vector<1x32xf32>
    %128 = vector.broadcast %127 : vector<1x32xf32> to vector<16x32xf32>
    %129 = arith.addf %126, %128 : vector<16x32xf32>
    %cst_37 = arith.constant 0.353553385 : f32
    %130 = vector.broadcast %cst_37 : f32 to vector<16x32xf32>
    %131 = arith.mulf %129, %130 : vector<16x32xf32>
    %c0_38 = arith.constant 0 : index
    %c160 = arith.constant 160 : index
    %132 = vector.load %arg2[%c0_38, %c160] : memref<64x384xf32, #tpu.memory_space<vmem>>, vector<32x64xf32>
    %cst_39 = arith.constant dense<0.000000e+00> : vector<16x64xf32>
    %133 = tpu.matmul %1, %132, %cst_39 {dimension_numbers = #tpu.dot_dimension_numbers<[1], [0], [0], [1], [0, 0, 1, 1], [], []>} : vector<16x32xf32>, vector<32x64xf32>, vector<16x64xf32> -> vector<16x64xf32>
    %134 = vector.extract_strided_slice %2 {offsets = [5, 0], sizes = [1, 64], strides = [1, 1]} : vector<16x256xf32> to vector<1x64xf32>
    %135 = vector.broadcast %134 : vector<1x64xf32> to vector<16x64xf32>
    %136 = arith.addf %133, %135 : vector<16x64xf32>
    %c0_40 = arith.constant 0 : index
    %c224 = arith.constant 224 : index
    %137 = vector.load %arg2[%c0_40, %c224] : memref<64x384xf32, #tpu.memory_space<vmem>>, vector<32x32xf32>
    %138 = vector.extract_strided_slice %136 {offsets = [0, 0], sizes = [16, 32], strides = [1, 1]} : vector<16x64xf32> to vector<16x32xf32>
    %139 = vector.extract_strided_slice %136 {offsets = [0, 32], sizes = [16, 32], strides = [1, 1]} : vector<16x64xf32> to vector<16x32xf32>
    %cst_41 = arith.constant 0.000000e+00 : f32
    %140 = vector.broadcast %cst_41 : f32 to vector<16x32xf32>
    %141 = vector.extract_strided_slice %131 {offsets = [0, 0], sizes = [16, 8], strides = [1, 1]} : vector<16x32xf32> to vector<16x8xf32>
    %142 = vector.extract_strided_slice %138 {offsets = [0, 0], sizes = [16, 8], strides = [1, 1]} : vector<16x32xf32> to vector<16x8xf32>
    %143 = tpu.transpose %142, [1, 0] : vector<16x8xf32> -> vector<8x16xf32>
    %cst_42 = arith.constant dense<0.000000e+00> : vector<16x16xf32>
    %144 = tpu.matmul %141, %143, %cst_42 {dimension_numbers = #tpu.dot_dimension_numbers<[1], [0], [0], [1], [0, 0, 1, 1], [], []>} : vector<16x8xf32>, vector<8x16xf32>, vector<16x16xf32> -> vector<16x16xf32>
    %145 = arith.addf %144, %4 : vector<16x16xf32>
    %cst_43 = arith.constant dense<0xFF800000> : vector<16xf32>
    %146 = vector.multi_reduction <maximumf>, %145, %cst_43 [1] : vector<16x16xf32> to vector<16xf32>
    %147 = vector.shape_cast %146 : vector<16xf32> to vector<16x1xf32>
    %148 = vector.broadcast %147 : vector<16x1xf32> to vector<16x16xf32>
    %149 = arith.subf %145, %148 : vector<16x16xf32>
    %150 = math.exp %149 : vector<16x16xf32>
    %cst_44 = arith.constant dense<0.000000e+00> : vector<16xf32>
    %151 = vector.multi_reduction <add>, %150, %cst_44 [1] : vector<16x16xf32> to vector<16xf32>
    %152 = vector.shape_cast %151 : vector<16xf32> to vector<16x1xf32>
    %153 = tpu.reciprocal %152 {approx = true} : vector<16x1xf32> -> vector<16x1xf32>
    %154 = vector.broadcast %153 : vector<16x1xf32> to vector<16x16xf32>
    %155 = arith.mulf %150, %154 : vector<16x16xf32>
    %156 = vector.extract_strided_slice %139 {offsets = [0, 0], sizes = [16, 8], strides = [1, 1]} : vector<16x32xf32> to vector<16x8xf32>
    %cst_45 = arith.constant dense<0.000000e+00> : vector<16x8xf32>
    %157 = tpu.matmul %155, %156, %cst_45 {dimension_numbers = #tpu.dot_dimension_numbers<[1], [0], [0], [1], [0, 0, 1, 1], [], []>} : vector<16x16xf32>, vector<16x8xf32>, vector<16x8xf32> -> vector<16x8xf32>
    %158 = vector.extract_strided_slice %137 {offsets = [0, 0], sizes = [8, 32], strides = [1, 1]} : vector<32x32xf32> to vector<8x32xf32>
    %cst_46 = arith.constant dense<0.000000e+00> : vector<16x32xf32>
    %159 = tpu.matmul %157, %158, %cst_46 {dimension_numbers = #tpu.dot_dimension_numbers<[1], [0], [0], [1], [0, 0, 1, 1], [], []>} : vector<16x8xf32>, vector<8x32xf32>, vector<16x32xf32> -> vector<16x32xf32>
    %160 = arith.addf %140, %159 : vector<16x32xf32>
    %161 = vector.extract_strided_slice %131 {offsets = [0, 8], sizes = [16, 8], strides = [1, 1]} : vector<16x32xf32> to vector<16x8xf32>
    %162 = vector.extract_strided_slice %138 {offsets = [0, 8], sizes = [16, 8], strides = [1, 1]} : vector<16x32xf32> to vector<16x8xf32>
    %163 = tpu.transpose %162, [1, 0] : vector<16x8xf32> -> vector<8x16xf32>
    %cst_47 = arith.constant dense<0.000000e+00> : vector<16x16xf32>
    %164 = tpu.matmul %161, %163, %cst_47 {dimension_numbers = #tpu.dot_dimension_numbers<[1], [0], [0], [1], [0, 0, 1, 1], [], []>} : vector<16x8xf32>, vector<8x16xf32>, vector<16x16xf32> -> vector<16x16xf32>
    %165 = arith.addf %164, %4 : vector<16x16xf32>
    %cst_48 = arith.constant dense<0xFF800000> : vector<16xf32>
    %166 = vector.multi_reduction <maximumf>, %165, %cst_48 [1] : vector<16x16xf32> to vector<16xf32>
    %167 = vector.shape_cast %166 : vector<16xf32> to vector<16x1xf32>
    %168 = vector.broadcast %167 : vector<16x1xf32> to vector<16x16xf32>
    %169 = arith.subf %165, %168 : vector<16x16xf32>
    %170 = math.exp %169 : vector<16x16xf32>
    %cst_49 = arith.constant dense<0.000000e+00> : vector<16xf32>
    %171 = vector.multi_reduction <add>, %170, %cst_49 [1] : vector<16x16xf32> to vector<16xf32>
    %172 = vector.shape_cast %171 : vector<16xf32> to vector<16x1xf32>
    %173 = tpu.reciprocal %172 {approx = true} : vector<16x1xf32> -> vector<16x1xf32>
    %174 = vector.broadcast %173 : vector<16x1xf32> to vector<16x16xf32>
    %175 = arith.mulf %170, %174 : vector<16x16xf32>
    %176 = vector.extract_strided_slice %139 {offsets = [0, 8], sizes = [16, 8], strides = [1, 1]} : vector<16x32xf32> to vector<16x8xf32>
    %cst_50 = arith.constant dense<0.000000e+00> : vector<16x8xf32>
    %177 = tpu.matmul %175, %176, %cst_50 {dimension_numbers = #tpu.dot_dimension_numbers<[1], [0], [0], [1], [0, 0, 1, 1], [], []>} : vector<16x16xf32>, vector<16x8xf32>, vector<16x8xf32> -> vector<16x8xf32>
    %178 = vector.extract_strided_slice %137 {offsets = [8, 0], sizes = [8, 32], strides = [1, 1]} : vector<32x32xf32> to vector<8x32xf32>
    %cst_51 = arith.constant dense<0.000000e+00> : vector<16x32xf32>
    %179 = tpu.matmul %177, %178, %cst_51 {dimension_numbers = #tpu.dot_dimension_numbers<[1], [0], [0], [1], [0, 0, 1, 1], [], []>} : vector<16x8xf32>, vector<8x32xf32>, vector<16x32xf32> -> vector<16x32xf32>
    %180 = arith.addf %160, %179 : vector<16x32xf32>
    %181 = vector.extract_strided_slice %131 {offsets = [0, 16], sizes = [16, 8], strides = [1, 1]} : vector<16x32xf32> to vector<16x8xf32>
    %182 = vector.extract_strided_slice %138 {offsets = [0, 16], sizes = [16, 8], strides = [1, 1]} : vector<16x32xf32> to vector<16x8xf32>
    %183 = tpu.transpose %182, [1, 0] : vector<16x8xf32> -> vector<8x16xf32>
    %cst_52 = arith.constant dense<0.000000e+00> : vector<16x16xf32>
    %184 = tpu.matmul %181, %183, %cst_52 {dimension_numbers = #tpu.dot_dimension_numbers<[1], [0], [0], [1], [0, 0, 1, 1], [], []>} : vector<16x8xf32>, vector<8x16xf32>, vector<16x16xf32> -> vector<16x16xf32>
    %185 = arith.addf %184, %4 : vector<16x16xf32>
    %cst_53 = arith.constant dense<0xFF800000> : vector<16xf32>
    %186 = vector.multi_reduction <maximumf>, %185, %cst_53 [1] : vector<16x16xf32> to vector<16xf32>
    %187 = vector.shape_cast %186 : vector<16xf32> to vector<16x1xf32>
    %188 = vector.broadcast %187 : vector<16x1xf32> to vector<16x16xf32>
    %189 = arith.subf %185, %188 : vector<16x16xf32>
    %190 = math.exp %189 : vector<16x16xf32>
    %cst_54 = arith.constant dense<0.000000e+00> : vector<16xf32>
    %191 = vector.multi_reduction <add>, %190, %cst_54 [1] : vector<16x16xf32> to vector<16xf32>
    %192 = vector.shape_cast %191 : vector<16xf32> to vector<16x1xf32>
    %193 = tpu.reciprocal %192 {approx = true} : vector<16x1xf32> -> vector<16x1xf32>
    %194 = vector.broadcast %193 : vector<16x1xf32> to vector<16x16xf32>
    %195 = arith.mulf %190, %194 : vector<16x16xf32>
    %196 = vector.extract_strided_slice %139 {offsets = [0, 16], sizes = [16, 8], strides = [1, 1]} : vector<16x32xf32> to vector<16x8xf32>
    %cst_55 = arith.constant dense<0.000000e+00> : vector<16x8xf32>
    %197 = tpu.matmul %195, %196, %cst_55 {dimension_numbers = #tpu.dot_dimension_numbers<[1], [0], [0], [1], [0, 0, 1, 1], [], []>} : vector<16x16xf32>, vector<16x8xf32>, vector<16x8xf32> -> vector<16x8xf32>
    %198 = vector.extract_strided_slice %137 {offsets = [16, 0], sizes = [8, 32], strides = [1, 1]} : vector<32x32xf32> to vector<8x32xf32>
    %cst_56 = arith.constant dense<0.000000e+00> : vector<16x32xf32>
    %199 = tpu.matmul %197, %198, %cst_56 {dimension_numbers = #tpu.dot_dimension_numbers<[1], [0], [0], [1], [0, 0, 1, 1], [], []>} : vector<16x8xf32>, vector<8x32xf32>, vector<16x32xf32> -> vector<16x32xf32>
    %200 = arith.addf %180, %199 : vector<16x32xf32>
    %201 = vector.extract_strided_slice %131 {offsets = [0, 24], sizes = [16, 8], strides = [1, 1]} : vector<16x32xf32> to vector<16x8xf32>
    %202 = vector.extract_strided_slice %138 {offsets = [0, 24], sizes = [16, 8], strides = [1, 1]} : vector<16x32xf32> to vector<16x8xf32>
    %203 = tpu.transpose %202, [1, 0] : vector<16x8xf32> -> vector<8x16xf32>
    %cst_57 = arith.constant dense<0.000000e+00> : vector<16x16xf32>
    %204 = tpu.matmul %201, %203, %cst_57 {dimension_numbers = #tpu.dot_dimension_numbers<[1], [0], [0], [1], [0, 0, 1, 1], [], []>} : vector<16x8xf32>, vector<8x16xf32>, vector<16x16xf32> -> vector<16x16xf32>
    %205 = arith.addf %204, %4 : vector<16x16xf32>
    %cst_58 = arith.constant dense<0xFF800000> : vector<16xf32>
    %206 = vector.multi_reduction <maximumf>, %205, %cst_58 [1] : vector<16x16xf32> to vector<16xf32>
    %207 = vector.shape_cast %206 : vector<16xf32> to vector<16x1xf32>
    %208 = vector.broadcast %207 : vector<16x1xf32> to vector<16x16xf32>
    %209 = arith.subf %205, %208 : vector<16x16xf32>
    %210 = math.exp %209 : vector<16x16xf32>
    %cst_59 = arith.constant dense<0.000000e+00> : vector<16xf32>
    %211 = vector.multi_reduction <add>, %210, %cst_59 [1] : vector<16x16xf32> to vector<16xf32>
    %212 = vector.shape_cast %211 : vector<16xf32> to vector<16x1xf32>
    %213 = tpu.reciprocal %212 {approx = true} : vector<16x1xf32> -> vector<16x1xf32>
    %214 = vector.broadcast %213 : vector<16x1xf32> to vector<16x16xf32>
    %215 = arith.mulf %210, %214 : vector<16x16xf32>
    %216 = vector.extract_strided_slice %139 {offsets = [0, 24], sizes = [16, 8], strides = [1, 1]} : vector<16x32xf32> to vector<16x8xf32>
    %cst_60 = arith.constant dense<0.000000e+00> : vector<16x8xf32>
    %217 = tpu.matmul %215, %216, %cst_60 {dimension_numbers = #tpu.dot_dimension_numbers<[1], [0], [0], [1], [0, 0, 1, 1], [], []>} : vector<16x16xf32>, vector<16x8xf32>, vector<16x8xf32> -> vector<16x8xf32>
    %218 = vector.extract_strided_slice %137 {offsets = [24, 0], sizes = [8, 32], strides = [1, 1]} : vector<32x32xf32> to vector<8x32xf32>
    %cst_61 = arith.constant dense<0.000000e+00> : vector<16x32xf32>
    %219 = tpu.matmul %217, %218, %cst_61 {dimension_numbers = #tpu.dot_dimension_numbers<[1], [0], [0], [1], [0, 0, 1, 1], [], []>} : vector<16x8xf32>, vector<8x32xf32>, vector<16x32xf32> -> vector<16x32xf32>
    %220 = arith.addf %200, %219 : vector<16x32xf32>
    %221 = arith.addf %124, %220 : vector<16x32xf32>
    %222 = vector.extract_strided_slice %2 {offsets = [6, 0], sizes = [1, 32], strides = [1, 1]} : vector<16x256xf32> to vector<1x32xf32>
    %223 = vector.broadcast %222 : vector<1x32xf32> to vector<16x32xf32>
    %224 = arith.addf %221, %223 : vector<16x32xf32>
    %225 = vector.extract_strided_slice %2 {offsets = [7, 0], sizes = [1, 32], strides = [1, 1]} : vector<16x256xf32> to vector<1x32xf32>
    %226 = vector.extract_strided_slice %2 {offsets = [8, 0], sizes = [1, 32], strides = [1, 1]} : vector<16x256xf32> to vector<1x32xf32>
    %cst_62 = arith.constant dense<0.000000e+00> : vector<16xf32>
    %227 = vector.multi_reduction <add>, %224, %cst_62 [1] : vector<16x32xf32> to vector<16xf32>
    %228 = vector.shape_cast %227 : vector<16xf32> to vector<16x1xf32>
    %cst_63 = arith.constant 3.200000e+01 : f32
    %229 = vector.broadcast %cst_63 : f32 to vector<16x1xf32>
    %230 = arith.divf %228, %229 : vector<16x1xf32>
    %231 = vector.broadcast %230 : vector<16x1xf32> to vector<16x32xf32>
    %232 = arith.subf %224, %231 : vector<16x32xf32>
    %233 = arith.mulf %232, %232 : vector<16x32xf32>
    %cst_64 = arith.constant dense<0.000000e+00> : vector<16xf32>
    %234 = vector.multi_reduction <add>, %233, %cst_64 [1] : vector<16x32xf32> to vector<16xf32>
    %235 = vector.shape_cast %234 : vector<16xf32> to vector<16x1xf32>
    %cst_65 = arith.constant 3.200000e+01 : f32
    %236 = vector.broadcast %cst_65 : f32 to vector<16x1xf32>
    %237 = arith.divf %235, %236 : vector<16x1xf32>
    %238 = vector.broadcast %230 : vector<16x1xf32> to vector<16x32xf32>
    %239 = arith.subf %224, %238 : vector<16x32xf32>
    %cst_66 = arith.constant 9.99999974E-6 : f32
    %240 = vector.broadcast %cst_66 : f32 to vector<16x1xf32>
    %241 = arith.addf %237, %240 : vector<16x1xf32>
    %242 = math.rsqrt %241 : vector<16x1xf32>
    %243 = vector.broadcast %242 : vector<16x1xf32> to vector<16x32xf32>
    %244 = arith.mulf %239, %243 : vector<16x32xf32>
    %245 = vector.broadcast %225 : vector<1x32xf32> to vector<16x32xf32>
    %246 = arith.mulf %244, %245 : vector<16x32xf32>
    %247 = vector.broadcast %226 : vector<1x32xf32> to vector<16x32xf32>
    %248 = arith.addf %246, %247 : vector<16x32xf32>
    %c0_67 = arith.constant 0 : index
    %c256 = arith.constant 256 : index
    %249 = vector.load %arg2[%c0_67, %c256] : memref<64x384xf32, #tpu.memory_space<vmem>>, vector<32x64xf32>
    %cst_68 = arith.constant dense<0.000000e+00> : vector<16x64xf32>
    %250 = tpu.matmul %248, %249, %cst_68 {dimension_numbers = #tpu.dot_dimension_numbers<[1], [0], [0], [1], [0, 0, 1, 1], [], []>} : vector<16x32xf32>, vector<32x64xf32>, vector<16x64xf32> -> vector<16x64xf32>
    %251 = vector.extract_strided_slice %2 {offsets = [9, 0], sizes = [1, 64], strides = [1, 1]} : vector<16x256xf32> to vector<1x64xf32>
    %252 = vector.broadcast %251 : vector<1x64xf32> to vector<16x64xf32>
    %253 = arith.addf %250, %252 : vector<16x64xf32>
    %cst_69 = arith.constant 5.000000e-01 : f32
    %254 = vector.broadcast %cst_69 : f32 to vector<16x64xf32>
    %255 = arith.mulf %254, %253 : vector<16x64xf32>
    %cst_70 = arith.constant 0.707106769 : f32
    %256 = vector.broadcast %cst_70 : f32 to vector<16x64xf32>
    %257 = arith.mulf %253, %256 : vector<16x64xf32>
    %258 = math.erf %257 : vector<16x64xf32>
    %cst_71 = arith.constant 1.000000e+00 : f32
    %259 = vector.broadcast %cst_71 : f32 to vector<16x64xf32>
    %260 = arith.addf %259, %258 : vector<16x64xf32>
    %261 = arith.mulf %255, %260 : vector<16x64xf32>
    %c0_72 = arith.constant 0 : index
    %c320 = arith.constant 320 : index
    %262 = vector.load %arg2[%c0_72, %c320] : memref<64x384xf32, #tpu.memory_space<vmem>>, vector<64x32xf32>
    %cst_73 = arith.constant dense<0.000000e+00> : vector<16x32xf32>
    %263 = tpu.matmul %261, %262, %cst_73 {dimension_numbers = #tpu.dot_dimension_numbers<[1], [0], [0], [1], [0, 0, 1, 1], [], []>} : vector<16x64xf32>, vector<64x32xf32>, vector<16x32xf32> -> vector<16x32xf32>
    %264 = vector.extract_strided_slice %2 {offsets = [10, 0], sizes = [1, 32], strides = [1, 1]} : vector<16x256xf32> to vector<1x32xf32>
    %265 = vector.broadcast %264 : vector<1x32xf32> to vector<16x32xf32>
    %266 = arith.addf %263, %265 : vector<16x32xf32>
    %267 = arith.addf %248, %266 : vector<16x32xf32>
    %268 = vector.extract_strided_slice %2 {offsets = [11, 0], sizes = [1, 32], strides = [1, 1]} : vector<16x256xf32> to vector<1x32xf32>
    %269 = vector.extract_strided_slice %2 {offsets = [12, 0], sizes = [1, 32], strides = [1, 1]} : vector<16x256xf32> to vector<1x32xf32>
    %cst_74 = arith.constant dense<0.000000e+00> : vector<16xf32>
    %270 = vector.multi_reduction <add>, %267, %cst_74 [1] : vector<16x32xf32> to vector<16xf32>
    %271 = vector.shape_cast %270 : vector<16xf32> to vector<16x1xf32>
    %cst_75 = arith.constant 3.200000e+01 : f32
    %272 = vector.broadcast %cst_75 : f32 to vector<16x1xf32>
    %273 = arith.divf %271, %272 : vector<16x1xf32>
    %274 = vector.broadcast %273 : vector<16x1xf32> to vector<16x32xf32>
    %275 = arith.subf %267, %274 : vector<16x32xf32>
    %276 = arith.mulf %275, %275 : vector<16x32xf32>
    %cst_76 = arith.constant dense<0.000000e+00> : vector<16xf32>
    %277 = vector.multi_reduction <add>, %276, %cst_76 [1] : vector<16x32xf32> to vector<16xf32>
    %278 = vector.shape_cast %277 : vector<16xf32> to vector<16x1xf32>
    %cst_77 = arith.constant 3.200000e+01 : f32
    %279 = vector.broadcast %cst_77 : f32 to vector<16x1xf32>
    %280 = arith.divf %278, %279 : vector<16x1xf32>
    %281 = vector.broadcast %273 : vector<16x1xf32> to vector<16x32xf32>
    %282 = arith.subf %267, %281 : vector<16x32xf32>
    %cst_78 = arith.constant 9.99999974E-6 : f32
    %283 = vector.broadcast %cst_78 : f32 to vector<16x1xf32>
    %284 = arith.addf %280, %283 : vector<16x1xf32>
    %285 = math.rsqrt %284 : vector<16x1xf32>
    %286 = vector.broadcast %285 : vector<16x1xf32> to vector<16x32xf32>
    %287 = arith.mulf %282, %286 : vector<16x32xf32>
    %288 = vector.broadcast %268 : vector<1x32xf32> to vector<16x32xf32>
    %289 = arith.mulf %287, %288 : vector<16x32xf32>
    %290 = vector.broadcast %269 : vector<1x32xf32> to vector<16x32xf32>
    %291 = arith.addf %289, %290 : vector<16x32xf32>
    %292 = tpu.concatenate %31, %51, %71, %91 in 1 : vector<16x16xf32>, vector<16x16xf32>, vector<16x16xf32>, vector<16x16xf32> -> vector<16x64xf32>
    %cst_79 = arith.constant 0.000000e+00 : f32
    %293 = vector.broadcast %cst_79 : f32 to vector<16x32xf32>
    %294 = tpu.concatenate %291, %292, %293 in 1 : vector<16x32xf32>, vector<16x64xf32>, vector<16x32xf32> -> vector<16x128xf32>
    %c0_80 = arith.constant 0 : index
    %c0_81 = arith.constant 0 : index
    %295 = vector.load %arg4[%c0_80, %c0_81] : memref<16x128xf32, #tpu.memory_space<vmem>>, vector<16x128xf32>
    tpu.vector_store %arg4[%c0_80, %c0_81], %294 {strides = array<i32>} : memref<16x128xf32, #tpu.memory_space<vmem>>, vector<16x128xf32>,
    return
  }
}

</mosaic_0001>

<llo_original>
// kernel: tile.8
$region0: #{tile.8}
  #allocation0 [shape = 's32[1]{0}', space=sflag, size = 0x4, scoped, tag = 'scoped memory for tile.8']
  %s0 = inlined_call_operand.vmem [shape: f32[8,8], index: 0, kind: input, shape index: {}]
  %s1 = inlined_call_operand.vmem [shape: f32[2,8,2,8], index: 1, kind: output, shape index: {}]
  // Predicated region
  $region2: #{tile.8} parent=0 // pred_check
    _
  $region3: #{tile.8} parent=0 // pred_check_branch
    %3 = sbr.rel (0) target = $region5
  $region4: #{tile.8} parent=0 // pred_region
    _
  $region5: #{tile.8} parent=0 // pred_fallthru
    _
  %v4 = vld [vmem:[%s0] ss:$0 sm:$0xff]
  %5 = vst [vmem:[%s1] sm:$0x3] %v4
  %s6 = scalar_lea.vmem %s1, 16
  %7 = vst [vmem:[%s6] sm:$0x3] %v4
  %s8 = scalar_lea.vmem %s0, 1
  %v9 = vld [vmem:[%s8] ss:$0 sm:$0xff]
  %s10 = scalar_lea.vmem %s1, 2
  %11 = vst [vmem:[%s10] sm:$0x3] %v9
  %s12 = scalar_lea.vmem %s1, 18
  %13 = vst [vmem:[%s12] sm:$0x3] %v9
  %s14 = scalar_lea.vmem %s0, 2
  %v15 = vld [vmem:[%s14] ss:$0 sm:$0xff]
  %s16 = scalar_lea.vmem %s1, 4
  %17 = vst [vmem:[%s16] sm:$0x3] %v15
  %s18 = scalar_lea.vmem %s1, 20
  %19 = vst [vmem:[%s18] sm:$0x3] %v15
  %s20 = scalar_lea.vmem %s0, 3
  %v21 = vld [vmem:[%s20] ss:$0 sm:$0xff]
  %s22 = scalar_lea.vmem %s1, 6
  %23 = vst [vmem:[%s22] sm:$0x3] %v21
  %s24 = scalar_lea.vmem %s1, 22
  %25 = vst [vmem:[%s24] sm:$0x3] %v21
  %s26 = scalar_lea.vmem %s0, 4
  %v27 = vld [vmem:[%s26] ss:$0 sm:$0xff]
  %s28 = scalar_lea.vmem %s1, 8
  %29 = vst [vmem:[%s28] sm:$0x3] %v27
  %s30 = scalar_lea.vmem %s1, 24
  %31 = vst [vmem:[%s30] sm:$0x3] %v27
  %s32 = scalar_lea.vmem %s0, 5
  %v33 = vld [vmem:[%s32] ss:$0 sm:$0xff]
  %s34 = scalar_lea.vmem %s1, 10
  %35 = vst [vmem:[%s34] sm:$0x3] %v33
  %s36 = scalar_lea.vmem %s1, 26
  %37 = vst [vmem:[%s36] sm:$0x3] %v33
  %s38 = scalar_lea.vmem %s0, 6
  %v39 = vld [vmem:[%s38] ss:$0 sm:$0xff]
  %s40 = scalar_lea.vmem %s1, 12
  %41 = vst [vmem:[%s40] sm:$0x3] %v39
  %s42 = scalar_lea.vmem %s1, 28
  %43 = vst [vmem:[%s42] sm:$0x3] %v39
  %s44 = scalar_lea.vmem %s0, 7
  %v45 = vld [vmem:[%s44] ss:$0 sm:$0xff]
  %s46 = scalar_lea.vmem %s1, 14
  %47 = vst [vmem:[%s46] sm:$0x3] %v45
  %s48 = scalar_lea.vmem %s1, 30
  %49 = vst [vmem:[%s48] sm:$0x3] %v45

// kernel: tile.9
$region0: #{tile.9}
  %s0 = inlined_call_operand.vmem [shape: f32[2,8,2,8], index: 0, kind: input, shape index: {}]
  %s1 = inlined_call_operand.vmem [shape: f32[16,16], index: 1, kind: output, shape index: {}]
  $region1: #{tile.9} parent=0
    #allocation0 [shape = 'u8[65536]{0}', space=vmem, size = 0x10000, scoped, tag = 'scoped mem for input reshape']
    %s3 = sshll.u32 1, 2
    %s4 = ssub.s32 %s3, 1
    %s5 = smul.addr 2, 15
    %s6 = scalar_lea.vmem %s0, %s5
    %v7 = vld [vmem:[%s6] sm:%s4]
    %s8 = scalar_lea.vmem [#allocation0], 120
    %9 = vst [vmem:[%s8] sm:%s4] %v7
    %s10 = smul.addr 2, 14
    %s11 = scalar_lea.vmem %s0, %s10
    %v12 = vld [vmem:[%s11] sm:%s4]
    %s13 = scalar_lea.vmem [#allocation0], 112
    %14 = vst [vmem:[%s13] sm:%s4] %v12
    %s15 = smul.addr 2, 13
    %s16 = scalar_lea.vmem %s0, %s15
    %v17 = vld [vmem:[%s16] sm:%s4]
    %s18 = scalar_lea.vmem [#allocation0], 104
    %19 = vst [vmem:[%s18] sm:%s4] %v17
    %s20 = smul.addr 2, 12
    %s21 = scalar_lea.vmem %s0, %s20
    %v22 = vld [vmem:[%s21] sm:%s4]
    %s23 = scalar_lea.vmem [#allocation0], 96
    %24 = vst [vmem:[%s23] sm:%s4] %v22
    %s25 = smul.addr 2, 11
    %s26 = scalar_lea.vmem %s0, %s25
    %v27 = vld [vmem:[%s26] sm:%s4]
    %s28 = scalar_lea.vmem [#allocation0], 88
    %29 = vst [vmem:[%s28] sm:%s4] %v27
    %s30 = smul.addr 2, 10
    %s31 = scalar_lea.vmem %s0, %s30
    %v32 = vld [vmem:[%s31] sm:%s4]
    %s33 = scalar_lea.vmem [#allocation0], 80
    %34 = vst [vmem:[%s33] sm:%s4] %v32
    %s35 = smul.addr 2, 9
    %s36 = scalar_lea.vmem %s0, %s35
    %v37 = vld [vmem:[%s36] sm:%s4]
    %s38 = scalar_lea.vmem [#allocation0], 72
    %39 = vst [vmem:[%s38] sm:%s4] %v37
    %s40 = smul.addr 2, 8
    %s41 = scalar_lea.vmem %s0, %s40
    %v42 = vld [vmem:[%s41] sm:%s4]
    %s43 = scalar_lea.vmem [#allocation0], 64
    %44 = vst [vmem:[%s43] sm:%s4] %v42
    %s45 = smul.addr 2, 7
    %s46 = scalar_lea.vmem %s0, %s45
    %v47 = vld [vmem:[%s46] sm:%s4]
    %s48 = scalar_lea.vmem [#allocation0], 56
    %49 = vst [vmem:[%s48] sm:%s4] %v47
    %s50 = smul.addr 2, 6
    %s51 = scalar_lea.vmem %s0, %s50
    %v52 = vld [vmem:[%s51] sm:%s4]
    %s53 = scalar_lea.vmem [#allocation0], 48
    %54 = vst [vmem:[%s53] sm:%s4] %v52
    %s55 = smul.addr 2, 5
    %s56 = scalar_lea.vmem %s0, %s55
    %v57 = vld [vmem:[%s56] sm:%s4]
    %s58 = scalar_lea.vmem [#allocation0], 40
    %59 = vst [vmem:[%s58] sm:%s4] %v57
    %s60 = smul.addr 2, 4
    %s61 = scalar_lea.vmem %s0, %s60
    %v62 = vld [vmem:[%s61] sm:%s4]
    %s63 = scalar_lea.vmem [#allocation0], 32
    %64 = vst [vmem:[%s63] sm:%s4] %v62
    %s65 = smul.addr 2, 3
    %s66 = scalar_lea.vmem %s0, %s65
    %v67 = vld [vmem:[%s66] sm:%s4]
    %s68 = scalar_lea.vmem [#allocation0], 24
    %69 = vst [vmem:[%s68] sm:%s4] %v67
    %s70 = smul.addr 2, 2
    %s71 = scalar_lea.vmem %s0, %s70
    %v72 = vld [vmem:[%s71] sm:%s4]
    %s73 = scalar_lea.vmem [#allocation0], 16
    %74 = vst [vmem:[%s73] sm:%s4] %v72
    %s75 = scalar_lea.vmem %s0, 2
    %v76 = vld [vmem:[%s75] sm:%s4]
    %s77 = scalar_lea.vmem [#allocation0], 8
    %78 = vst [vmem:[%s77] sm:%s4] %v76
    %v79 = vld [vmem:[%s0] sm:%s4]
    %80 = vst [vmem:[#allocation0] sm:%s4] %v79
    %v81 = vld [vmem:[#allocation0] ss:$8 sm:$0xf]
    %v82 = vld [vmem:[#allocation0] ss:$8 sm:$0xf0]
    %vm83 = vcmask 1047556
    %v84 = vsel %vm83, %v82, %v81
    %vm85 = vcmask 64512
    %86 = vst.msk [vmem:[%s1] sm:$0xff] %vm85, %v84
    %s87 = scalar_lea.vmem [#allocation0], 64
    %v88 = vld [vmem:[%s87] ss:$8 sm:$0xf]
    %s89 = scalar_lea.vmem [#allocation0], 64
    %v90 = vld [vmem:[%s89] ss:$8 sm:$0xf0]
    %vm91 = vcmask 1047556
    %v92 = vsel %vm91, %v90, %v88
    %vm93 = vcmask 64512
    %s94 = scalar_lea.vmem %s1, 8
    %95 = vst.msk [vmem:[%s94] sm:$0xff] %vm93, %v92
    %s96 = scalar_lea.vmem [#allocation0], 1
    %v97 = vld [vmem:[%s96] ss:$8 sm:$0xf]
    %s98 = scalar_lea.vmem [#allocation0], 1
    %v99 = vld [vmem:[%s98] ss:$8 sm:$0xf0]
    %vm100 = vcmask 1047556
    %v101 = vsel %vm100, %v99, %v97
    %102 = vrot.lane.b32.xlu0 %v101, 8
    %v103 = vpop.permute.xlu0 %102
    %vm104 = vcmask 130112
    %105 = vst.msk [vmem:[%s1] sm:$0xff] %vm104, %v103
    %s106 = scalar_lea.vmem [#allocation0], 65
    %v107 = vld [vmem:[%s106] ss:$8 sm:$0xf]
    %s108 = scalar_lea.vmem [#allocation0], 65
    %v109 = vld [vmem:[%s108] ss:$8 sm:$0xf0]
    %vm110 = vcmask 1047556
    %v111 = vsel %vm110, %v109, %v107
    %112 = vrot.lane.b32.xlu0 %v111, 8
    %v113 = vpop.permute.xlu0 %112
    %vm114 = vcmask 130112
    %s115 = scalar_lea.vmem %s1, 8
    %116 = vst.msk [vmem:[%s115] sm:$0xff] %vm114, %v113

// kernel: eq.15
$region0: #{eq.15}
  %s0 = inlined_call_operand.vmem [shape: s32[2,8], index: 0, kind: input, shape index: {}]
  %s1 = inlined_call_operand.vmem [shape: s32[16], index: 1, kind: output, shape index: {}]
  $region1: #{eq.15} parent=0
    #allocation0 [shape = 'u8[4096]{0}', space=vmem, size = 0x1000, scoped, tag = 'scoped mem for output reshape']
    #allocation1 [shape = 'u8[4096]{0}', space=vmem, size = 0x1000, scoped, tag = 'scoped mem for input reshape']
    %s3 = sshll.u32 1, 2
    %s4 = ssub.s32 %s3, 1
    %v5 = vld [vmem:[%s0] sm:%s4]
    %6 = vst [vmem:[#allocation1] sm:%s4] %v5
    %v7 = vld [vmem:[#allocation1] sm:$0x1]
    %vm8 = vcmask 64512
    %9 = vst.msk [vmem:[#allocation0] sm:$0x1] %vm8, %v7
    %s10 = scalar_lea.vmem [#allocation1], 1
    %v11 = vld [vmem:[%s10] sm:$0x1]
    %12 = vrot.lane.b32.xlu0 %v11, 8
    %v13 = vpop.permute.xlu0 %12
    %vm14 = vcmask 130112
    %15 = vst.msk [vmem:[#allocation0] sm:$0x1] %vm14, %v13
    %s17 = sshll.u32 1, 1
    %s18 = ssub.s32 %s17, 1
    %v20 = vld [vmem:[#allocation0] sm:%s18]
    %s21 = sshll.u32 1, 1
    %s22 = ssub.s32 %s21, 1
    %23 = vst [vmem:[%s1] sm:%s22] %v20

// kernel: decoder_layer.1
$region0: #{decoder_layer.1}
  #allocation0 [shape = 'u32[]', space=smem, size = 0x4, offset = 0x4, fixed_abs, tag = 'smem constant byte address 0x4 - core index']
  #allocation1 [shape = 'u32[144,128]{1,0:T(1,128)}', space=vmem, size = 0x12000, scoped, tag = 'internal scratch']
  %s0 = inlined_call_operand.vmem [shape: f32[16,32], index: 0, kind: input, shape index: {}]
  %s1 = inlined_call_operand.vmem [shape: f32[16,32], index: 1, kind: input, shape index: {}]
  %s2 = inlined_call_operand.vmem [shape: f32[64,384], index: 2, kind: input, shape index: {}]
  %s3 = inlined_call_operand.vmem [shape: f32[16,256], index: 3, kind: input, shape index: {}]
  %s4 = inlined_call_operand.vmem [shape: f32[16,128], index: 4, kind: output, shape index: {}]
  %s5 = sld [smem:[#allocation0]]
  $region26: #{decoder_layer.1} parent=0
    _
  %s7 = ssub.s32 1, %s5
  %s8 = scalar_select 0, %s7, %s5
  // Predicated region
  $region2: #{decoder_layer.1} parent=0 // pred_check
    _
  $region3: #{decoder_layer.1} parent=0 // pred_check_branch
    %10 = sbr.rel (0) target = $region5
  $region4: #{decoder_layer.1} parent=0 // pred_region
    _
  $region5: #{decoder_layer.1} parent=0 // pred_fallthru
    _
  // Predicated region
  $region6: #{decoder_layer.1} parent=0 // pred_check
    _
  $region7: #{decoder_layer.1} parent=0 // pred_check_branch
    %12 = sbr.rel (0) target = $region9
  $region8: #{decoder_layer.1} parent=0 // pred_region
    _
  $region9: #{decoder_layer.1} parent=0 // pred_fallthru
    _
  // Predicated region
  $region10: #{decoder_layer.1} parent=0 // pred_check
    _
  $region11: #{decoder_layer.1} parent=0 // pred_check_branch
    %14 = sbr.rel (0) target = $region13
  $region12: #{decoder_layer.1} parent=0 // pred_region
    _
  $region13: #{decoder_layer.1} parent=0 // pred_fallthru
    _
  // Predicated region
  $region14: #{decoder_layer.1} parent=0 // pred_check
    _
  $region15: #{decoder_layer.1} parent=0 // pred_check_branch
    %16 = sbr.rel (0) target = $region17
  $region16: #{decoder_layer.1} parent=0 // pred_region
    _
  $region17: #{decoder_layer.1} parent=0 // pred_fallthru
    _
  %v17 = vld [vmem:[%s0] sm:$0xff]
  %v18 = vld [vmem:[%s0 + $0x8] sm:$0xff]
  %v19 = vld [vmem:[%s1] sm:$0xff]
  %v20 = vld [vmem:[%s1 + $0x8] sm:$0xff]
  %v21 = vld [vmem:[%s3] sm:$0xff]
  %v22 = vld [vmem:[%s3 + $0x8] sm:$0xff]
  %v23 = vld [vmem:[%s3 + $0x10] sm:$0xff]
  %v24 = vld [vmem:[%s3 + $0x18] sm:$0xff]
  %v25 = vld [vmem:[%s2] sm:$0xff]
  %v26 = vld [vmem:[%s2 + $0x18] sm:$0xff]
  %v27 = vld [vmem:[%s2 + $0x30] sm:$0xff]
  %v28 = vld [vmem:[%s2 + $0x48] sm:$0xff]
  %v29 = vlaneseq
  %v30 = vshrl.u32 %v29, 7
  %v31 = vsub.s32 0, %v30
  %v32 = vrot.slane %v21, %v31
  %vm33 = vcmask 261120
  %v35 = vsel %vm33, %v17, 0
  %v38 = vsel %vm33, %v18, 0
  %40 = vmatprep.subr.mxu0 0.0
  %41 = vmatpush1.msra.mxu0 0.0
  %42 = vmatprep.subr.mxu0 0.0
  %43 = vmatpush1.msra.mxu0 0.0
  %44 = vmatprep.subr.mxu0 0.0
  %45 = vmatpush1.msra.mxu0 0.0
  %46 = vmatprep.subr.mxu0 0.0
  %47 = vmatpush1.msra.mxu0 0.0
  %48 = vmatprep.subr.mxu0 0.0
  %49 = vmatpush1.msra.mxu0 0.0
  %50 = vmatprep.subr.mxu0 0.0
  %51 = vmatpush1.msra.mxu0 0.0
  %52 = vmatprep.subr.mxu0 0.0
  %53 = vmatpush1.msra.mxu0 0.0
  %54 = vmatprep.subr.mxu0 0.0
  %55 = vmatpush1.msra.mxu0 0.0
  %56 = vmatprep.subr.mxu0 0.0
  %57 = vmatpush1.msra.mxu0 0.0
  %58 = vmatprep.subr.mxu0 0.0
  %59 = vmatpush1.msra.mxu0 0.0
  %60 = vmatprep.subr.mxu0 0.0
  %61 = vmatpush1.msra.mxu0 0.0
  %62 = vmatprep.subr.mxu0 0.0
  %63 = vmatpush1.msra.mxu0 0.0
  %64 = vmatprep.subr.mxu0 0.0
  %65 = vmatpush1.msra.mxu0 %v28
  %66 = vmatprep.subr.mxu0 0.0
  %67 = vmatpush1.msra.mxu0 %v27
  %68 = vmatprep.subr.mxu0 0.0
  %69 = vmatpush1.msra.mxu0 %v26
  %70 = vmatprep.subr.mxu0 0.0
  %71 = vmatpush1.msra.mxu0 %v25
  %72 = vmatprep.subr.mxu0 0.0
  %73 = vmatpush2.msra.mxu0 0.0
  %74 = vmatprep.subr.mxu0 0.0
  %75 = vmatpush2.msra.mxu0 0.0
  %76 = vmatprep.subr.mxu0 0.0
  %77 = vmatpush2.msra.mxu0 0.0
  %78 = vmatprep.subr.mxu0 0.0
  %79 = vmatpush2.msra.mxu0 0.0
  %80 = vmatprep.subr.mxu0 0.0
  %81 = vmatpush2.msra.mxu0 0.0
  %82 = vmatprep.subr.mxu0 0.0
  %83 = vmatpush2.msra.mxu0 0.0
  %84 = vmatprep.subr.mxu0 0.0
  %85 = vmatpush2.msra.mxu0 0.0
  %86 = vmatprep.subr.mxu0 0.0
  %87 = vmatpush2.msra.mxu0 0.0
  %88 = vmatprep.subr.mxu0 0.0
  %89 = vmatpush2.msra.mxu0 0.0
  %90 = vmatprep.subr.mxu0 0.0
  %91 = vmatpush2.msra.mxu0 0.0
  %92 = vmatprep.subr.mxu0 0.0
  %93 = vmatpush2.msra.mxu0 0.0
  %94 = vmatprep.subr.mxu0 0.0
  %95 = vmatpush2.msra.mxu0 0.0
  %96 = vmatprep.subr.mxu0 0.0
  %97 = vmatpush2.msra.mxu0 0.0
  %98 = vmatprep.subr.mxu0 0.0
  %99 = vmatpush2.msra.mxu0 0.0
  %100 = vmatprep.subr.mxu0 0.0
  %101 = vmatpush2.msra.mxu0 0.0
  %102 = vmatprep.subr.mxu0 0.0
  %103 = vmatpush2.msra.mxu0 0.0
  %104 = vmatprep.mubr.f32.mxu0 0.0
  %105 = vmatmul.mubr.f32.gmra.mxu0 %v35
  %v106 = vpop.f32.mrf.mxu0
  %v107 = vadd.f32 %v32, %v106
  %v108 = vpop.f32.mrf.mxu0
  %109 = vmatprep.mubr.f32.mxu0 0.0
  %110 = vmatmul.mubr.f32.gmra.mxu0 %v38
  %v111 = vpop.f32.mrf.mxu0
  %v112 = vadd.f32 %v32, %v111
  %v113 = vpop.f32.mrf.mxu0
  %114 = vdwg.mxu0
  %v115 = vmul.f32 %v107, 0.35355338
  %v116 = vmul.f32 %v112, 0.35355338
  %119 = vrot.lane.b32.xlu0 %v107, 96
  %v120 = vpop.permute.xlu0 %119
  %121 = vrot.lane.b32.xlu0 %v112, 96
  %v122 = vpop.permute.xlu0 %121
  %vm123 = vcmask 64512
  %v125 = vsel %vm123, %v115, 0
  %v128 = vsel %vm123, %v116, 0
  %v130 = vsel %vm123, %v120, 0
  %v132 = vsel %vm123, %v122, 0
  %134 = vmatprep.subr.mxu0 0.0
  %135 = vmatpush1.xpose.msra.mxu0 0.0
  %136 = vmatprep.subr.mxu0 0.0
  %137 = vmatpush1.xpose.msra.mxu0 0.0
  %138 = vmatprep.subr.mxu0 0.0
  %139 = vmatpush1.xpose.msra.mxu0 0.0
  %140 = vmatprep.subr.mxu0 0.0
  %141 = vmatpush1.xpose.msra.mxu0 0.0
  %142 = vmatprep.subr.mxu0 0.0
  %143 = vmatpush1.xpose.msra.mxu0 0.0
  %144 = vmatprep.subr.mxu0 0.0
  %145 = vmatpush1.xpose.msra.mxu0 0.0
  %146 = vmatprep.subr.mxu0 0.0
  %147 = vmatpush1.xpose.msra.mxu0 0.0
  %148 = vmatprep.subr.mxu0 0.0
  %149 = vmatpush1.xpose.msra.mxu0 0.0
  %150 = vmatprep.subr.mxu0 0.0
  %151 = vmatpush1.xpose.msra.mxu0 0.0
  %152 = vmatprep.subr.mxu0 0.0
  %153 = vmatpush1.xpose.msra.mxu0 0.0
  %154 = vmatprep.subr.mxu0 0.0
  %155 = vmatpush1.xpose.msra.mxu0 0.0
  %156 = vmatprep.subr.mxu0 0.0
  %157 = vmatpush1.xpose.msra.mxu0 0.0
  %158 = vmatprep.subr.mxu0 0.0
  %159 = vmatpush1.xpose.msra.mxu0 0.0
  %160 = vmatprep.subr.mxu0 0.0
  %161 = vmatpush1.xpose.msra.mxu0 0.0
  %162 = vmatprep.subr.mxu0 0.0
  %163 = vmatpush1.xpose.msra.mxu0 %v132
  %164 = vmatprep.subr.mxu0 0.0
  %165 = vmatpush1.xpose.msra.mxu0 %v130
  %166 = vmatprep.subr.mxu0 0.0
  %167 = vmatpush2.xpose.msra.mxu0 0.0
  %168 = vmatprep.subr.mxu0 0.0
  %169 = vmatpush2.xpose.msra.mxu0 0.0
  %170 = vmatprep.subr.mxu0 0.0
  %171 = vmatpush2.xpose.msra.mxu0 0.0
  %172 = vmatprep.subr.mxu0 0.0
  %173 = vmatpush2.xpose.msra.mxu0 0.0
  %174 = vmatprep.subr.mxu0 0.0
  %175 = vmatpush2.xpose.msra.mxu0 0.0
  %176 = vmatprep.subr.mxu0 0.0
  %177 = vmatpush2.xpose.msra.mxu0 0.0
  %178 = vmatprep.subr.mxu0 0.0
  %179 = vmatpush2.xpose.msra.mxu0 0.0
  %180 = vmatprep.subr.mxu0 0.0
  %181 = vmatpush2.xpose.msra.mxu0 0.0
  %182 = vmatprep.subr.mxu0 0.0
  %183 = vmatpush2.xpose.msra.mxu0 0.0
  %184 = vmatprep.subr.mxu0 0.0
  %185 = vmatpush2.xpose.msra.mxu0 0.0
  %186 = vmatprep.subr.mxu0 0.0
  %187 = vmatpush2.xpose.msra.mxu0 0.0
  %188 = vmatprep.subr.mxu0 0.0
  %189 = vmatpush2.xpose.msra.mxu0 0.0
  %190 = vmatprep.subr.mxu0 0.0
  %191 = vmatpush2.xpose.msra.mxu0 0.0
  %192 = vmatprep.subr.mxu0 0.0
  %193 = vmatpush2.xpose.msra.mxu0 0.0
  %194 = vmatprep.subr.mxu0 0.0
  %195 = vmatpush2.xpose.msra.mxu0 0.0
  %196 = vmatprep.subr.mxu0 0.0
  %197 = vmatpush2.xpose.msra.mxu0 0.0
  %198 = vmatprep.mubr.f32.mxu0 0.0
  %199 = vmatmul.mubr.f32.gmra.mxu0 %v125
  %v200 = vpop.f32.mrf.mxu0
  %v201 = vadd.f32 %v22, %v200
  %v202 = vpop.f32.mrf.mxu0
  %203 = vmatprep.mubr.f32.mxu0 0.0
  %204 = vmatmul.mubr.f32.gmra.mxu0 %v128
  %v205 = vpop.f32.mrf.mxu0
  %v206 = vadd.f32 %v24, %v205
  %v207 = vpop.f32.mrf.mxu0
  %208 = vdwg.mxu0
  %vm209 = vcmask 130048
  %v210 = vsel %vm209, %v201, -inf
  %211 = vmax.xlane.f32.xlu0 %v210
  %v212 = vpop.xlane.xlu0 %211
  %v213 = vsel %vm209, %v206, -inf
  %214 = vmax.xlane.f32.xlu0 %v213
  %v215 = vpop.xlane.xlu0 %214
  %v216 = vsub.f32 %v201, %v212
  %v217 = vsub.f32 %v206, %v215
  %v218 = vmul.f32 %v216, 1.442695
  %v219 = vpow.pop %v218
  %v220 = vmul.f32 %v217, 1.442695
  %v221 = vpow.pop %v220
  %v222 = vsel %vm209, %v219, 0.0
  %223 = vadd.xlane.f32.xlu0 %v222
  %v224 = vpop.xlane.xlu0 %223
  %v225 = vsel %vm209, %v221, 0.0
  %226 = vadd.xlane.f32.xlu0 %v225
  %v227 = vpop.xlane.xlu0 %226
  %v228 = vrcp.pop %v224
  %v229 = vrcp.pop %v227
  %v230 = vmul.f32 %v219, %v228
  %v231 = vmul.f32 %v221, %v229
  %232 = vrot.lane.b32.xlu0 %v107, 64
  %v233 = vpop.permute.xlu0 %232
  %234 = vrot.lane.b32.xlu0 %v112, 64
  %v235 = vpop.permute.xlu0 %234
  %v239 = vsel %vm209, %v230, 0
  %v242 = vsel %vm209, %v231, 0
  %244 = vmatprep.subr.mxu0 0.0
  %245 = vmatpush1.msra.mxu0 0.0
  %246 = vmatprep.subr.mxu0 0.0
  %247 = vmatpush1.msra.mxu0 0.0
  %248 = vmatprep.subr.mxu0 0.0
  %249 = vmatpush1.msra.mxu0 0.0
  %250 = vmatprep.subr.mxu0 0.0
  %251 = vmatpush1.msra.mxu0 0.0
  %252 = vmatprep.subr.mxu0 0.0
  %253 = vmatpush1.msra.mxu0 0.0
  %254 = vmatprep.subr.mxu0 0.0
  %255 = vmatpush1.msra.mxu0 0.0
  %256 = vmatprep.subr.mxu0 0.0
  %257 = vmatpush1.msra.mxu0 0.0
  %258 = vmatprep.subr.mxu0 0.0
  %259 = vmatpush1.msra.mxu0 0.0
  %260 = vmatprep.subr.mxu0 0.0
  %261 = vmatpush1.msra.mxu0 0.0
  %262 = vmatprep.subr.mxu0 0.0
  %263 = vmatpush1.msra.mxu0 0.0
  %264 = vmatprep.subr.mxu0 0.0
  %265 = vmatpush1.msra.mxu0 0.0
  %266 = vmatprep.subr.mxu0 0.0
  %267 = vmatpush1.msra.mxu0 0.0
  %268 = vmatprep.subr.mxu0 0.0
  %269 = vmatpush1.msra.mxu0 0.0
  %270 = vmatprep.subr.mxu0 0.0
  %271 = vmatpush1.msra.mxu0 0.0
  %272 = vmatprep.subr.mxu0 0.0
  %273 = vmatpush1.msra.mxu0 %v235
  %274 = vmatprep.subr.mxu0 0.0
  %275 = vmatpush1.msra.mxu0 %v233
  %276 = vmatprep.subr.mxu0 0.0
  %277 = vmatpush2.msra.mxu0 0.0
  %278 = vmatprep.subr.mxu0 0.0
  %279 = vmatpush2.msra.mxu0 0.0
  %280 = vmatprep.subr.mxu0 0.0
  %281 = vmatpush2.msra.mxu0 0.0
  %282 = vmatprep.subr.mxu0 0.0
  %283 = vmatpush2.msra.mxu0 0.0
  %284 = vmatprep.subr.mxu0 0.0
  %285 = vmatpush2.msra.mxu0 0.0
  %286 = vmatprep.subr.mxu0 0.0
  %287 = vmatpush2.msra.mxu0 0.0
  %288 = vmatprep.subr.mxu0 0.0
  %289 = vmatpush2.msra.mxu0 0.0
  %290 = vmatprep.subr.mxu0 0.0
  %291 = vmatpush2.msra.mxu0 0.0
  %292 = vmatprep.subr.mxu0 0.0
  %293 = vmatpush2.msra.mxu0 0.0
  %294 = vmatprep.subr.mxu0 0.0
  %295 = vmatpush2.msra.mxu0 0.0
  %296 = vmatprep.subr.mxu0 0.0
  %297 = vmatpush2.msra.mxu0 0.0
  %298 = vmatprep.subr.mxu0 0.0
  %299 = vmatpush2.msra.mxu0 0.0
  %300 = vmatprep.subr.mxu0 0.0
  %301 = vmatpush2.msra.mxu0 0.0
  %302 = vmatprep.subr.mxu0 0.0
  %303 = vmatpush2.msra.mxu0 0.0
  %304 = vmatprep.subr.mxu0 0.0
  %305 = vmatpush2.msra.mxu0 0.0
  %306 = vmatprep.subr.mxu0 0.0
  %307 = vmatpush2.msra.mxu0 0.0
  %308 = vmatprep.mubr.f32.mxu0 0.0
  %309 = vmatmul.mubr.f32.gmra.mxu0 %v239
  %v310 = vpop.f32.mrf.mxu0
  %v311 = vadd.f32 0.0, %v310
  %v312 = vpop.f32.mrf.mxu0
  %313 = vmatprep.mubr.f32.mxu0 0.0
  %314 = vmatmul.mubr.f32.gmra.mxu0 %v242
  %v315 = vpop.f32.mrf.mxu0
  %v316 = vadd.f32 0.0, %v315
  %v317 = vpop.f32.mrf.mxu0
  %318 = vdwg.mxu0
  %319 = vrot.lane.b32.xlu0 %v115, 120
  %v320 = vpop.permute.xlu0 %319
  %321 = vrot.lane.b32.xlu0 %v116, 120
  %v322 = vpop.permute.xlu0 %321
  %323 = vrot.lane.b32.xlu0 %v107, 88
  %v324 = vpop.permute.xlu0 %323
  %325 = vrot.lane.b32.xlu0 %v112, 88
  %v326 = vpop.permute.xlu0 %325
  %v327 = vsel %vm123, %v320, 0
  %v329 = vsel %vm123, %v322, 0
  %v331 = vsel %vm123, %v324, 0
  %v333 = vsel %vm123, %v326, 0
  %335 = vmatprep.subr.mxu0 0.0
  %336 = vmatpush1.xpose.msra.mxu0 0.0
  %337 = vmatprep.subr.mxu0 0.0
  %338 = vmatpush1.xpose.msra.mxu0 0.0
  %339 = vmatprep.subr.mxu0 0.0
  %340 = vmatpush1.xpose.msra.mxu0 0.0
  %341 = vmatprep.subr.mxu0 0.0
  %342 = vmatpush1.xpose.msra.mxu0 0.0
  %343 = vmatprep.subr.mxu0 0.0
  %344 = vmatpush1.xpose.msra.mxu0 0.0
  %345 = vmatprep.subr.mxu0 0.0
  %346 = vmatpush1.xpose.msra.mxu0 0.0
  %347 = vmatprep.subr.mxu0 0.0
  %348 = vmatpush1.xpose.msra.mxu0 0.0
  %349 = vmatprep.subr.mxu0 0.0
  %350 = vmatpush1.xpose.msra.mxu0 0.0
  %351 = vmatprep.subr.mxu0 0.0
  %352 = vmatpush1.xpose.msra.mxu0 0.0
  %353 = vmatprep.subr.mxu0 0.0
  %354 = vmatpush1.xpose.msra.mxu0 0.0
  %355 = vmatprep.subr.mxu0 0.0
  %356 = vmatpush1.xpose.msra.mxu0 0.0
  %357 = vmatprep.subr.mxu0 0.0
  %358 = vmatpush1.xpose.msra.mxu0 0.0
  %359 = vmatprep.subr.mxu0 0.0
  %360 = vmatpush1.xpose.msra.mxu0 0.0
  %361 = vmatprep.subr.mxu0 0.0
  %362 = vmatpush1.xpose.msra.mxu0 0.0
  %363 = vmatprep.subr.mxu0 0.0
  %364 = vmatpush1.xpose.msra.mxu0 %v333
  %365 = vmatprep.subr.mxu0 0.0
  %366 = vmatpush1.xpose.msra.mxu0 %v331
  %367 = vmatprep.subr.mxu0 0.0
  %368 = vmatpush2.xpose.msra.mxu0 0.0
  %369 = vmatprep.subr.mxu0 0.0
  %370 = vmatpush2.xpose.msra.mxu0 0.0
  %371 = vmatprep.subr.mxu0 0.0
  %372 = vmatpush2.xpose.msra.mxu0 0.0
  %373 = vmatprep.subr.mxu0 0.0
  %374 = vmatpush2.xpose.msra.mxu0 0.0
  %375 = vmatprep.subr.mxu0 0.0
  %376 = vmatpush2.xpose.msra.mxu0 0.0
  %377 = vmatprep.subr.mxu0 0.0
  %378 = vmatpush2.xpose.msra.mxu0 0.0
  %379 = vmatprep.subr.mxu0 0.0
  %380 = vmatpush2.xpose.msra.mxu0 0.0
  %381 = vmatprep.subr.mxu0 0.0
  %382 = vmatpush2.xpose.msra.mxu0 0.0
  %383 = vmatprep.subr.mxu0 0.0
  %384 = vmatpush2.xpose.msra.mxu0 0.0
  %385 = vmatprep.subr.mxu0 0.0
  %386 = vmatpush2.xpose.msra.mxu0 0.0
  %387 = vmatprep.subr.mxu0 0.0
  %388 = vmatpush2.xpose.msra.mxu0 0.0
  %389 = vmatprep.subr.mxu0 0.0
  %390 = vmatpush2.xpose.msra.mxu0 0.0
  %391 = vmatprep.subr.mxu0 0.0
  %392 = vmatpush2.xpose.msra.mxu0 0.0
  %393 = vmatprep.subr.mxu0 0.0
  %394 = vmatpush2.xpose.msra.mxu0 0.0
  %395 = vmatprep.subr.mxu0 0.0
  %396 = vmatpush2.xpose.msra.mxu0 0.0
  %397 = vmatprep.subr.mxu0 0.0
  %398 = vmatpush2.xpose.msra.mxu0 0.0
  %399 = vmatprep.mubr.f32.mxu0 0.0
  %400 = vmatmul.mubr.f32.gmra.mxu0 %v327
  %v401 = vpop.f32.mrf.mxu0
  %v402 = vadd.f32 %v22, %v401
  %v403 = vpop.f32.mrf.mxu0
  %404 = vmatprep.mubr.f32.mxu0 0.0
  %405 = vmatmul.mubr.f32.gmra.mxu0 %v329
  %v406 = vpop.f32.mrf.mxu0
  %v407 = vadd.f32 %v24, %v406
  %v408 = vpop.f32.mrf.mxu0
  %409 = vdwg.mxu0
  %v410 = vsel %vm209, %v402, -inf
  %411 = vmax.xlane.f32.xlu0 %v410
  %v412 = vpop.xlane.xlu0 %411
  %v413 = vsel %vm209, %v407, -inf
  %414 = vmax.xlane.f32.xlu0 %v413
  %v415 = vpop.xlane.xlu0 %414
  %v416 = vsub.f32 %v402, %v412
  %v417 = vsub.f32 %v407, %v415
  %v418 = vmul.f32 %v416, 1.442695
  %v419 = vpow.pop %v418
  %v420 = vmul.f32 %v417, 1.442695
  %v421 = vpow.pop %v420
  %v422 = vsel %vm209, %v419, 0.0
  %423 = vadd.xlane.f32.xlu0 %v422
  %v424 = vpop.xlane.xlu0 %423
  %v425 = vsel %vm209, %v421, 0.0
  %426 = vadd.xlane.f32.xlu0 %v425
  %v427 = vpop.xlane.xlu0 %426
  %v428 = vrcp.pop %v424
  %v429 = vrcp.pop %v427
  %v430 = vmul.f32 %v419, %v428
  %v431 = vmul.f32 %v421, %v429
  %432 = vrot.lane.b32.xlu0 %v107, 56
  %v433 = vpop.permute.xlu0 %432
  %434 = vrot.lane.b32.xlu0 %v112, 56
  %v435 = vpop.permute.xlu0 %434
  %v439 = vsel %vm209, %v430, 0
  %v442 = vsel %vm209, %v431, 0
  %444 = vmatprep.subr.mxu0 0.0
  %445 = vmatpush1.msra.mxu0 0.0
  %446 = vmatprep.subr.mxu0 0.0
  %447 = vmatpush1.msra.mxu0 0.0
  %448 = vmatprep.subr.mxu0 0.0
  %449 = vmatpush1.msra.mxu0 0.0
  %450 = vmatprep.subr.mxu0 0.0
  %451 = vmatpush1.msra.mxu0 0.0
  %452 = vmatprep.subr.mxu0 0.0
  %453 = vmatpush1.msra.mxu0 0.0
  %454 = vmatprep.subr.mxu0 0.0
  %455 = vmatpush1.msra.mxu0 0.0
  %456 = vmatprep.subr.mxu0 0.0
  %457 = vmatpush1.msra.mxu0 0.0
  %458 = vmatprep.subr.mxu0 0.0
  %459 = vmatpush1.msra.mxu0 0.0
  %460 = vmatprep.subr.mxu0 0.0
  %461 = vmatpush1.msra.mxu0 0.0
  %462 = vmatprep.subr.mxu0 0.0
  %463 = vmatpush1.msra.mxu0 0.0
  %464 = vmatprep.subr.mxu0 0.0
  %465 = vmatpush1.msra.mxu0 0.0
  %466 = vmatprep.subr.mxu0 0.0
  %467 = vmatpush1.msra.mxu0 0.0
  %468 = vmatprep.subr.mxu0 0.0
  %469 = vmatpush1.msra.mxu0 0.0
  %470 = vmatprep.subr.mxu0 0.0
  %471 = vmatpush1.msra.mxu0 0.0
  %472 = vmatprep.subr.mxu0 0.0
  %473 = vmatpush1.msra.mxu0 %v435
  %474 = vmatprep.subr.mxu0 0.0
  %475 = vmatpush1.msra.mxu0 %v433
  %476 = vmatprep.subr.mxu0 0.0
  %477 = vmatpush2.msra.mxu0 0.0
  %478 = vmatprep.subr.mxu0 0.0
  %479 = vmatpush2.msra.mxu0 0.0
  %480 = vmatprep.subr.mxu0 0.0
  %481 = vmatpush2.msra.mxu0 0.0
  %482 = vmatprep.subr.mxu0 0.0
  %483 = vmatpush2.msra.mxu0 0.0
  %484 = vmatprep.subr.mxu0 0.0
  %485 = vmatpush2.msra.mxu0 0.0
  %486 = vmatprep.subr.mxu0 0.0
  %487 = vmatpush2.msra.mxu0 0.0
  %488 = vmatprep.subr.mxu0 0.0
  %489 = vmatpush2.msra.mxu0 0.0
  %490 = vmatprep.subr.mxu0 0.0
  %491 = vmatpush2.msra.mxu0 0.0
  %492 = vmatprep.subr.mxu0 0.0
  %493 = vmatpush2.msra.mxu0 0.0
  %494 = vmatprep.subr.mxu0 0.0
  %495 = vmatpush2.msra.mxu0 0.0
  %496 = vmatprep.subr.mxu0 0.0
  %497 = vmatpush2.msra.mxu0 0.0
  %498 = vmatprep.subr.mxu0 0.0
  %499 = vmatpush2.msra.mxu0 0.0
  %500 = vmatprep.subr.mxu0 0.0
  %501 = vmatpush2.msra.mxu0 0.0
  %502 = vmatprep.subr.mxu0 0.0
  %503 = vmatpush2.msra.mxu0 0.0
  %504 = vmatprep.subr.mxu0 0.0
  %505 = vmatpush2.msra.mxu0 0.0
  %506 = vmatprep.subr.mxu0 0.0
  %507 = vmatpush2.msra.mxu0 0.0
  %508 = vmatprep.mubr.f32.mxu0 0.0
  %509 = vmatmul.mubr.f32.gmra.mxu0 %v439
  %v510 = vpop.f32.mrf.mxu0
  %v511 = vadd.f32 0.0, %v510
  %v512 = vpop.f32.mrf.mxu0
  %513 = vmatprep.mubr.f32.mxu0 0.0
  %514 = vmatmul.mubr.f32.gmra.mxu0 %v442
  %v515 = vpop.f32.mrf.mxu0
  %v516 = vadd.f32 0.0, %v515
  %v517 = vpop.f32.mrf.mxu0
  %518 = vdwg.mxu0
  %520 = vrot.lane.b32.xlu0 %v26, 32
  %v521 = vpop.permute.xlu0 %520
  %v524 = vsel %vm123, %v511, 0
  %v527 = vsel %vm123, %v516, 0
  %529 = vmatprep.subr.mxu0 0.0
  %530 = vmatpush1.msra.mxu0 0.0
  %531 = vmatprep.subr.mxu0 0.0
  %532 = vmatpush1.msra.mxu0 0.0
  %533 = vmatprep.subr.mxu0 0.0
  %534 = vmatpush1.msra.mxu0 0.0
  %535 = vmatprep.subr.mxu0 0.0
  %536 = vmatpush1.msra.mxu0 0.0
  %537 = vmatprep.subr.mxu0 0.0
  %538 = vmatpush1.msra.mxu0 0.0
  %539 = vmatprep.subr.mxu0 0.0
  %540 = vmatpush1.msra.mxu0 0.0
  %541 = vmatprep.subr.mxu0 0.0
  %542 = vmatpush1.msra.mxu0 0.0
  %543 = vmatprep.subr.mxu0 0.0
  %544 = vmatpush1.msra.mxu0 0.0
  %545 = vmatprep.subr.mxu0 0.0
  %546 = vmatpush1.msra.mxu0 0.0
  %547 = vmatprep.subr.mxu0 0.0
  %548 = vmatpush1.msra.mxu0 0.0
  %549 = vmatprep.subr.mxu0 0.0
  %550 = vmatpush1.msra.mxu0 0.0
  %551 = vmatprep.subr.mxu0 0.0
  %552 = vmatpush1.msra.mxu0 0.0
  %553 = vmatprep.subr.mxu0 0.0
  %554 = vmatpush1.msra.mxu0 0.0
  %555 = vmatprep.subr.mxu0 0.0
  %556 = vmatpush1.msra.mxu0 0.0
  %557 = vmatprep.subr.mxu0 0.0
  %558 = vmatpush1.msra.mxu0 0.0
  %559 = vmatprep.subr.mxu0 0.0
  %560 = vmatpush1.msra.mxu0 %v521
  %561 = vmatprep.subr.mxu0 0.0
  %562 = vmatpush2.msra.mxu0 0.0
  %563 = vmatprep.subr.mxu0 0.0
  %564 = vmatpush2.msra.mxu0 0.0
  %565 = vmatprep.subr.mxu0 0.0
  %566 = vmatpush2.msra.mxu0 0.0
  %567 = vmatprep.subr.mxu0 0.0
  %568 = vmatpush2.msra.mxu0 0.0
  %569 = vmatprep.subr.mxu0 0.0
  %570 = vmatpush2.msra.mxu0 0.0
  %571 = vmatprep.subr.mxu0 0.0
  %572 = vmatpush2.msra.mxu0 0.0
  %573 = vmatprep.subr.mxu0 0.0
  %574 = vmatpush2.msra.mxu0 0.0
  %575 = vmatprep.subr.mxu0 0.0
  %576 = vmatpush2.msra.mxu0 0.0
  %577 = vmatprep.subr.mxu0 0.0
  %578 = vmatpush2.msra.mxu0 0.0
  %579 = vmatprep.subr.mxu0 0.0
  %580 = vmatpush2.msra.mxu0 0.0
  %581 = vmatprep.subr.mxu0 0.0
  %582 = vmatpush2.msra.mxu0 0.0
  %583 = vmatprep.subr.mxu0 0.0
  %584 = vmatpush2.msra.mxu0 0.0
  %585 = vmatprep.subr.mxu0 0.0
  %586 = vmatpush2.msra.mxu0 0.0
  %587 = vmatprep.subr.mxu0 0.0
  %588 = vmatpush2.msra.mxu0 0.0
  %589 = vmatprep.subr.mxu0 0.0
  %590 = vmatpush2.msra.mxu0 0.0
  %591 = vmatprep.subr.mxu0 0.0
  %592 = vmatpush2.msra.mxu0 0.0
  %593 = vmatprep.mubr.f32.mxu0 0.0
  %594 = vmatmul.mubr.f32.gmra.mxu0 %v524
  %v595 = vpop.f32.mrf.mxu0
  %v596 = vadd.f32 0.0, %v595
  %v597 = vpop.f32.mrf.mxu0
  %598 = vmatprep.mubr.f32.mxu0 0.0
  %599 = vmatmul.mubr.f32.gmra.mxu0 %v527
  %v600 = vpop.f32.mrf.mxu0
  %v601 = vadd.f32 0.0, %v600
  %v602 = vpop.f32.mrf.mxu0
  %603 = vdwg.mxu0
  %605 = vrot.lane.b32.xlu0 %v25, 32
  %v606 = vpop.permute.xlu0 %605
  %v609 = vsel %vm123, %v311, 0
  %v612 = vsel %vm123, %v316, 0
  %614 = vmatprep.subr.mxu0 0.0
  %615 = vmatpush1.msra.mxu0 0.0
  %616 = vmatprep.subr.mxu0 0.0
  %617 = vmatpush1.msra.mxu0 0.0
  %618 = vmatprep.subr.mxu0 0.0
  %619 = vmatpush1.msra.mxu0 0.0
  %620 = vmatprep.subr.mxu0 0.0
  %621 = vmatpush1.msra.mxu0 0.0
  %622 = vmatprep.subr.mxu0 0.0
  %623 = vmatpush1.msra.mxu0 0.0
  %624 = vmatprep.subr.mxu0 0.0
  %625 = vmatpush1.msra.mxu0 0.0
  %626 = vmatprep.subr.mxu0 0.0
  %627 = vmatpush1.msra.mxu0 0.0
  %628 = vmatprep.subr.mxu0 0.0
  %629 = vmatpush1.msra.mxu0 0.0
  %630 = vmatprep.subr.mxu0 0.0
  %631 = vmatpush1.msra.mxu0 0.0
  %632 = vmatprep.subr.mxu0 0.0
  %633 = vmatpush1.msra.mxu0 0.0
  %634 = vmatprep.subr.mxu0 0.0
  %635 = vmatpush1.msra.mxu0 0.0
  %636 = vmatprep.subr.mxu0 0.0
  %637 = vmatpush1.msra.mxu0 0.0
  %638 = vmatprep.subr.mxu0 0.0
  %639 = vmatpush1.msra.mxu0 0.0
  %640 = vmatprep.subr.mxu0 0.0
  %641 = vmatpush1.msra.mxu0 0.0
  %642 = vmatprep.subr.mxu0 0.0
  %643 = vmatpush1.msra.mxu0 0.0
  %644 = vmatprep.subr.mxu0 0.0
  %645 = vmatpush1.msra.mxu0 %v606
  %646 = vmatprep.subr.mxu0 0.0
  %647 = vmatpush2.msra.mxu0 0.0
  %648 = vmatprep.subr.mxu0 0.0
  %649 = vmatpush2.msra.mxu0 0.0
  %650 = vmatprep.subr.mxu0 0.0
  %651 = vmatpush2.msra.mxu0 0.0
  %652 = vmatprep.subr.mxu0 0.0
  %653 = vmatpush2.msra.mxu0 0.0
  %654 = vmatprep.subr.mxu0 0.0
  %655 = vmatpush2.msra.mxu0 0.0
  %656 = vmatprep.subr.mxu0 0.0
  %657 = vmatpush2.msra.mxu0 0.0
  %658 = vmatprep.subr.mxu0 0.0
  %659 = vmatpush2.msra.mxu0 0.0
  %660 = vmatprep.subr.mxu0 0.0
  %661 = vmatpush2.msra.mxu0 0.0
  %662 = vmatprep.subr.mxu0 0.0
  %663 = vmatpush2.msra.mxu0 0.0
  %664 = vmatprep.subr.mxu0 0.0
  %665 = vmatpush2.msra.mxu0 0.0
  %666 = vmatprep.subr.mxu0 0.0
  %667 = vmatpush2.msra.mxu0 0.0
  %668 = vmatprep.subr.mxu0 0.0
  %669 = vmatpush2.msra.mxu0 0.0
  %670 = vmatprep.subr.mxu0 0.0
  %671 = vmatpush2.msra.mxu0 0.0
  %672 = vmatprep.subr.mxu0 0.0
  %673 = vmatpush2.msra.mxu0 0.0
  %674 = vmatprep.subr.mxu0 0.0
  %675 = vmatpush2.msra.mxu0 0.0
  %676 = vmatprep.subr.mxu0 0.0
  %677 = vmatpush2.msra.mxu0 0.0
  %678 = vmatprep.mubr.f32.mxu0 0.0
  %679 = vmatmul.mubr.f32.gmra.mxu0 %v609
  %v680 = vpop.f32.mrf.mxu0
  %v681 = vadd.f32 %v596, %v680
  %v682 = vpop.f32.mrf.mxu0
  %683 = vmatprep.mubr.f32.mxu0 0.0
  %684 = vmatmul.mubr.f32.gmra.mxu0 %v612
  %v685 = vpop.f32.mrf.mxu0
  %v686 = vadd.f32 %v601, %v685
  %v687 = vpop.f32.mrf.mxu0
  %688 = vdwg.mxu0
  %689 = vrot.lane.b32.xlu0 %v115, 112
  %v690 = vpop.permute.xlu0 %689
  %691 = vrot.lane.b32.xlu0 %v116, 112
  %v692 = vpop.permute.xlu0 %691
  %693 = vrot.lane.b32.xlu0 %v107, 80
  %v694 = vpop.permute.xlu0 %693
  %695 = vrot.lane.b32.xlu0 %v112, 80
  %v696 = vpop.permute.xlu0 %695
  %v697 = vsel %vm123, %v690, 0
  %v699 = vsel %vm123, %v692, 0
  %v701 = vsel %vm123, %v694, 0
  %v703 = vsel %vm123, %v696, 0
  %705 = vmatprep.subr.mxu0 0.0
  %706 = vmatpush1.xpose.msra.mxu0 0.0
  %707 = vmatprep.subr.mxu0 0.0
  %708 = vmatpush1.xpose.msra.mxu0 0.0
  %709 = vmatprep.subr.mxu0 0.0
  %710 = vmatpush1.xpose.msra.mxu0 0.0
  %711 = vmatprep.subr.mxu0 0.0
  %712 = vmatpush1.xpose.msra.mxu0 0.0
  %713 = vmatprep.subr.mxu0 0.0
  %714 = vmatpush1.xpose.msra.mxu0 0.0
  %715 = vmatprep.subr.mxu0 0.0
  %716 = vmatpush1.xpose.msra.mxu0 0.0
  %717 = vmatprep.subr.mxu0 0.0
  %718 = vmatpush1.xpose.msra.mxu0 0.0
  %719 = vmatprep.subr.mxu0 0.0
  %720 = vmatpush1.xpose.msra.mxu0 0.0
  %721 = vmatprep.subr.mxu0 0.0
  %722 = vmatpush1.xpose.msra.mxu0 0.0
  %723 = vmatprep.subr.mxu0 0.0
  %724 = vmatpush1.xpose.msra.mxu0 0.0
  %725 = vmatprep.subr.mxu0 0.0
  %726 = vmatpush1.xpose.msra.mxu0 0.0
  %727 = vmatprep.subr.mxu0 0.0
  %728 = vmatpush1.xpose.msra.mxu0 0.0
  %729 = vmatprep.subr.mxu0 0.0
  %730 = vmatpush1.xpose.msra.mxu0 0.0
  %731 = vmatprep.subr.mxu0 0.0
  %732 = vmatpush1.xpose.msra.mxu0 0.0
  %733 = vmatprep.subr.mxu0 0.0
  %734 = vmatpush1.xpose.msra.mxu0 %v703
  %735 = vmatprep.subr.mxu0 0.0
  %736 = vmatpush1.xpose.msra.mxu0 %v701
  %737 = vmatprep.subr.mxu0 0.0
  %738 = vmatpush2.xpose.msra.mxu0 0.0
  %739 = vmatprep.subr.mxu0 0.0
  %740 = vmatpush2.xpose.msra.mxu0 0.0
  %741 = vmatprep.subr.mxu0 0.0
  %742 = vmatpush2.xpose.msra.mxu0 0.0
  %743 = vmatprep.subr.mxu0 0.0
  %744 = vmatpush2.xpose.msra.mxu0 0.0
  %745 = vmatprep.subr.mxu0 0.0
  %746 = vmatpush2.xpose.msra.mxu0 0.0
  %747 = vmatprep.subr.mxu0 0.0
  %748 = vmatpush2.xpose.msra.mxu0 0.0
  %749 = vmatprep.subr.mxu0 0.0
  %750 = vmatpush2.xpose.msra.mxu0 0.0
  %751 = vmatprep.subr.mxu0 0.0
  %752 = vmatpush2.xpose.msra.mxu0 0.0
  %753 = vmatprep.subr.mxu0 0.0
  %754 = vmatpush2.xpose.msra.mxu0 0.0
  %755 = vmatprep.subr.mxu0 0.0
  %756 = vmatpush2.xpose.msra.mxu0 0.0
  %757 = vmatprep.subr.mxu0 0.0
  %758 = vmatpush2.xpose.msra.mxu0 0.0
  %759 = vmatprep.subr.mxu0 0.0
  %760 = vmatpush2.xpose.msra.mxu0 0.0
  %761 = vmatprep.subr.mxu0 0.0
  %762 = vmatpush2.xpose.msra.mxu0 0.0
  %763 = vmatprep.subr.mxu0 0.0
  %764 = vmatpush2.xpose.msra.mxu0 0.0
  %765 = vmatprep.subr.mxu0 0.0
  %766 = vmatpush2.xpose.msra.mxu0 0.0
  %767 = vmatprep.subr.mxu0 0.0
  %768 = vmatpush2.xpose.msra.mxu0 0.0
  %769 = vmatprep.mubr.f32.mxu0 0.0
  %770 = vmatmul.mubr.f32.gmra.mxu0 %v697
  %v771 = vpop.f32.mrf.mxu0
  %v772 = vadd.f32 %v22, %v771
  %v773 = vpop.f32.mrf.mxu0
  %774 = vmatprep.mubr.f32.mxu0 0.0
  %775 = vmatmul.mubr.f32.gmra.mxu0 %v699
  %v776 = vpop.f32.mrf.mxu0
  %v777 = vadd.f32 %v24, %v776
  %v778 = vpop.f32.mrf.mxu0
  %779 = vdwg.mxu0
  %v780 = vsel %vm209, %v772, -inf
  %781 = vmax.xlane.f32.xlu0 %v780
  %v782 = vpop.xlane.xlu0 %781
  %v783 = vsel %vm209, %v777, -inf
  %784 = vmax.xlane.f32.xlu0 %v783
  %v785 = vpop.xlane.xlu0 %784
  %v786 = vsub.f32 %v772, %v782
  %v787 = vsub.f32 %v777, %v785
  %v788 = vmul.f32 %v786, 1.442695
  %v789 = vpow.pop %v788
  %v790 = vmul.f32 %v787, 1.442695
  %v791 = vpow.pop %v790
  %v792 = vsel %vm209, %v789, 0.0
  %793 = vadd.xlane.f32.xlu0 %v792
  %v794 = vpop.xlane.xlu0 %793
  %v795 = vsel %vm209, %v791, 0.0
  %796 = vadd.xlane.f32.xlu0 %v795
  %v797 = vpop.xlane.xlu0 %796
  %v798 = vrcp.pop %v794
  %v799 = vrcp.pop %v797
  %v800 = vmul.f32 %v789, %v798
  %v801 = vmul.f32 %v791, %v799
  %802 = vrot.lane.b32.xlu0 %v107, 48
  %v803 = vpop.permute.xlu0 %802
  %804 = vrot.lane.b32.xlu0 %v112, 48
  %v805 = vpop.permute.xlu0 %804
  %v809 = vsel %vm209, %v800, 0
  %v812 = vsel %vm209, %v801, 0
  %814 = vmatprep.subr.mxu0 0.0
  %815 = vmatpush1.msra.mxu0 0.0
  %816 = vmatprep.subr.mxu0 0.0
  %817 = vmatpush1.msra.mxu0 0.0
  %818 = vmatprep.subr.mxu0 0.0
  %819 = vmatpush1.msra.mxu0 0.0
  %820 = vmatprep.subr.mxu0 0.0
  %821 = vmatpush1.msra.mxu0 0.0
  %822 = vmatprep.subr.mxu0 0.0
  %823 = vmatpush1.msra.mxu0 0.0
  %824 = vmatprep.subr.mxu0 0.0
  %825 = vmatpush1.msra.mxu0 0.0
  %826 = vmatprep.subr.mxu0 0.0
  %827 = vmatpush1.msra.mxu0 0.0
  %828 = vmatprep.subr.mxu0 0.0
  %829 = vmatpush1.msra.mxu0 0.0
  %830 = vmatprep.subr.mxu0 0.0
  %831 = vmatpush1.msra.mxu0 0.0
  %832 = vmatprep.subr.mxu0 0.0
  %833 = vmatpush1.msra.mxu0 0.0
  %834 = vmatprep.subr.mxu0 0.0
  %835 = vmatpush1.msra.mxu0 0.0
  %836 = vmatprep.subr.mxu0 0.0
  %837 = vmatpush1.msra.mxu0 0.0
  %838 = vmatprep.subr.mxu0 0.0
  %839 = vmatpush1.msra.mxu0 0.0
  %840 = vmatprep.subr.mxu0 0.0
  %841 = vmatpush1.msra.mxu0 0.0
  %842 = vmatprep.subr.mxu0 0.0
  %843 = vmatpush1.msra.mxu0 %v805
  %844 = vmatprep.subr.mxu0 0.0
  %845 = vmatpush1.msra.mxu0 %v803
  %846 = vmatprep.subr.mxu0 0.0
  %847 = vmatpush2.msra.mxu0 0.0
  %848 = vmatprep.subr.mxu0 0.0
  %849 = vmatpush2.msra.mxu0 0.0
  %850 = vmatprep.subr.mxu0 0.0
  %851 = vmatpush2.msra.mxu0 0.0
  %852 = vmatprep.subr.mxu0 0.0
  %853 = vmatpush2.msra.mxu0 0.0
  %854 = vmatprep.subr.mxu0 0.0
  %855 = vmatpush2.msra.mxu0 0.0
  %856 = vmatprep.subr.mxu0 0.0
  %857 = vmatpush2.msra.mxu0 0.0
  %858 = vmatprep.subr.mxu0 0.0
  %859 = vmatpush2.msra.mxu0 0.0
  %860 = vmatprep.subr.mxu0 0.0
  %861 = vmatpush2.msra.mxu0 0.0
  %862 = vmatprep.subr.mxu0 0.0
  %863 = vmatpush2.msra.mxu0 0.0
  %864 = vmatprep.subr.mxu0 0.0
  %865 = vmatpush2.msra.mxu0 0.0
  %866 = vmatprep.subr.mxu0 0.0
  %867 = vmatpush2.msra.mxu0 0.0
  %868 = vmatprep.subr.mxu0 0.0
  %869 = vmatpush2.msra.mxu0 0.0
  %870 = vmatprep.subr.mxu0 0.0
  %871 = vmatpush2.msra.mxu0 0.0
  %872 = vmatprep.subr.mxu0 0.0
  %873 = vmatpush2.msra.mxu0 0.0
  %874 = vmatprep.subr.mxu0 0.0
  %875 = vmatpush2.msra.mxu0 0.0
  %876 = vmatprep.subr.mxu0 0.0
  %877 = vmatpush2.msra.mxu0 0.0
  %878 = vmatprep.mubr.f32.mxu0 0.0
  %879 = vmatmul.mubr.f32.gmra.mxu0 %v809
  %v880 = vpop.f32.mrf.mxu0
  %v881 = vadd.f32 0.0, %v880
  %v882 = vpop.f32.mrf.mxu0
  %883 = vmatprep.mubr.f32.mxu0 0.0
  %884 = vmatmul.mubr.f32.gmra.mxu0 %v812
  %v885 = vpop.f32.mrf.mxu0
  %v886 = vadd.f32 0.0, %v885
  %v887 = vpop.f32.mrf.mxu0
  %888 = vdwg.mxu0
  %890 = vrot.lane.b32.xlu0 %v27, 32
  %v891 = vpop.permute.xlu0 %890
  %v894 = vsel %vm123, %v881, 0
  %v897 = vsel %vm123, %v886, 0
  %899 = vmatprep.subr.mxu0 0.0
  %900 = vmatpush1.msra.mxu0 0.0
  %901 = vmatprep.subr.mxu0 0.0
  %902 = vmatpush1.msra.mxu0 0.0
  %903 = vmatprep.subr.mxu0 0.0
  %904 = vmatpush1.msra.mxu0 0.0
  %905 = vmatprep.subr.mxu0 0.0
  %906 = vmatpush1.msra.mxu0 0.0
  %907 = vmatprep.subr.mxu0 0.0
  %908 = vmatpush1.msra.mxu0 0.0
  %909 = vmatprep.subr.mxu0 0.0
  %910 = vmatpush1.msra.mxu0 0.0
  %911 = vmatprep.subr.mxu0 0.0
  %912 = vmatpush1.msra.mxu0 0.0
  %913 = vmatprep.subr.mxu0 0.0
  %914 = vmatpush1.msra.mxu0 0.0
  %915 = vmatprep.subr.mxu0 0.0
  %916 = vmatpush1.msra.mxu0 0.0
  %917 = vmatprep.subr.mxu0 0.0
  %918 = vmatpush1.msra.mxu0 0.0
  %919 = vmatprep.subr.mxu0 0.0
  %920 = vmatpush1.msra.mxu0 0.0
  %921 = vmatprep.subr.mxu0 0.0
  %922 = vmatpush1.msra.mxu0 0.0
  %923 = vmatprep.subr.mxu0 0.0
  %924 = vmatpush1.msra.mxu0 0.0
  %925 = vmatprep.subr.mxu0 0.0
  %926 = vmatpush1.msra.mxu0 0.0
  %927 = vmatprep.subr.mxu0 0.0
  %928 = vmatpush1.msra.mxu0 0.0
  %929 = vmatprep.subr.mxu0 0.0
  %930 = vmatpush1.msra.mxu0 %v891
  %931 = vmatprep.subr.mxu0 0.0
  %932 = vmatpush2.msra.mxu0 0.0
  %933 = vmatprep.subr.mxu0 0.0
  %934 = vmatpush2.msra.mxu0 0.0
  %935 = vmatprep.subr.mxu0 0.0
  %936 = vmatpush2.msra.mxu0 0.0
  %937 = vmatprep.subr.mxu0 0.0
  %938 = vmatpush2.msra.mxu0 0.0
  %939 = vmatprep.subr.mxu0 0.0
  %940 = vmatpush2.msra.mxu0 0.0
  %941 = vmatprep.subr.mxu0 0.0
  %942 = vmatpush2.msra.mxu0 0.0
  %943 = vmatprep.subr.mxu0 0.0
  %944 = vmatpush2.msra.mxu0 0.0
  %945 = vmatprep.subr.mxu0 0.0
  %946 = vmatpush2.msra.mxu0 0.0
  %947 = vmatprep.subr.mxu0 0.0
  %948 = vmatpush2.msra.mxu0 0.0
  %949 = vmatprep.subr.mxu0 0.0
  %950 = vmatpush2.msra.mxu0 0.0
  %951 = vmatprep.subr.mxu0 0.0
  %952 = vmatpush2.msra.mxu0 0.0
  %953 = vmatprep.subr.mxu0 0.0
  %954 = vmatpush2.msra.mxu0 0.0
  %955 = vmatprep.subr.mxu0 0.0
  %956 = vmatpush2.msra.mxu0 0.0
  %957 = vmatprep.subr.mxu0 0.0
  %958 = vmatpush2.msra.mxu0 0.0
  %959 = vmatprep.subr.mxu0 0.0
  %960 = vmatpush2.msra.mxu0 0.0
  %961 = vmatprep.subr.mxu0 0.0
  %962 = vmatpush2.msra.mxu0 0.0
  %963 = vmatprep.mubr.f32.mxu0 0.0
  %964 = vmatmul.mubr.f32.gmra.mxu0 %v894
  %v965 = vpop.f32.mrf.mxu0
  %v966 = vadd.f32 0.0, %v965
  %v967 = vpop.f32.mrf.mxu0
  %968 = vmatprep.mubr.f32.mxu0 0.0
  %969 = vmatmul.mubr.f32.gmra.mxu0 %v897
  %v970 = vpop.f32.mrf.mxu0
  %v971 = vadd.f32 0.0, %v970
  %v972 = vpop.f32.mrf.mxu0
  %973 = vdwg.mxu0
  %v974 = vadd.f32 %v681, %v966
  %v975 = vadd.f32 %v686, %v971
  %976 = vrot.lane.b32.xlu0 %v115, 104
  %v977 = vpop.permute.xlu0 %976
  %978 = vrot.lane.b32.xlu0 %v116, 104
  %v979 = vpop.permute.xlu0 %978
  %980 = vrot.lane.b32.xlu0 %v107, 72
  %v981 = vpop.permute.xlu0 %980
  %982 = vrot.lane.b32.xlu0 %v112, 72
  %v983 = vpop.permute.xlu0 %982
  %v984 = vsel %vm123, %v977, 0
  %v986 = vsel %vm123, %v979, 0
  %v988 = vsel %vm123, %v981, 0
  %v990 = vsel %vm123, %v983, 0
  %992 = vmatprep.subr.mxu0 0.0
  %993 = vmatpush1.xpose.msra.mxu0 0.0
  %994 = vmatprep.subr.mxu0 0.0
  %995 = vmatpush1.xpose.msra.mxu0 0.0
  %996 = vmatprep.subr.mxu0 0.0
  %997 = vmatpush1.xpose.msra.mxu0 0.0
  %998 = vmatprep.subr.mxu0 0.0
  %999 = vmatpush1.xpose.msra.mxu0 0.0
  %1000 = vmatprep.subr.mxu0 0.0
  %1001 = vmatpush1.xpose.msra.mxu0 0.0
  %1002 = vmatprep.subr.mxu0 0.0
  %1003 = vmatpush1.xpose.msra.mxu0 0.0
  %1004 = vmatprep.subr.mxu0 0.0
  %1005 = vmatpush1.xpose.msra.mxu0 0.0
  %1006 = vmatprep.subr.mxu0 0.0
  %1007 = vmatpush1.xpose.msra.mxu0 0.0
  %1008 = vmatprep.subr.mxu0 0.0
  %1009 = vmatpush1.xpose.msra.mxu0 0.0
  %1010 = vmatprep.subr.mxu0 0.0
  %1011 = vmatpush1.xpose.msra.mxu0 0.0
  %1012 = vmatprep.subr.mxu0 0.0
  %1013 = vmatpush1.xpose.msra.mxu0 0.0
  %1014 = vmatprep.subr.mxu0 0.0
  %1015 = vmatpush1.xpose.msra.mxu0 0.0
  %1016 = vmatprep.subr.mxu0 0.0
  %1017 = vmatpush1.xpose.msra.mxu0 0.0
  %1018 = vmatprep.subr.mxu0 0.0
  %1019 = vmatpush1.xpose.msra.mxu0 0.0
  %1020 = vmatprep.subr.mxu0 0.0
  %1021 = vmatpush1.xpose.msra.mxu0 %v990
  %1022 = vmatprep.subr.mxu0 0.0
  %1023 = vmatpush1.xpose.msra.mxu0 %v988
  %1024 = vmatprep.subr.mxu0 0.0
  %1025 = vmatpush2.xpose.msra.mxu0 0.0
  %1026 = vmatprep.subr.mxu0 0.0
  %1027 = vmatpush2.xpose.msra.mxu0 0.0
  %1028 = vmatprep.subr.mxu0 0.0
  %1029 = vmatpush2.xpose.msra.mxu0 0.0
  %1030 = vmatprep.subr.mxu0 0.0
  %1031 = vmatpush2.xpose.msra.mxu0 0.0
  %1032 = vmatprep.subr.mxu0 0.0
  %1033 = vmatpush2.xpose.msra.mxu0 0.0
  %1034 = vmatprep.subr.mxu0 0.0
  %1035 = vmatpush2.xpose.msra.mxu0 0.0
  %1036 = vmatprep.subr.mxu0 0.0
  %1037 = vmatpush2.xpose.msra.mxu0 0.0
  %1038 = vmatprep.subr.mxu0 0.0
  %1039 = vmatpush2.xpose.msra.mxu0 0.0
  %1040 = vmatprep.subr.mxu0 0.0
  %1041 = vmatpush2.xpose.msra.mxu0 0.0
  %1042 = vmatprep.subr.mxu0 0.0
  %1043 = vmatpush2.xpose.msra.mxu0 0.0
  %1044 = vmatprep.subr.mxu0 0.0
  %1045 = vmatpush2.xpose.msra.mxu0 0.0
  %1046 = vmatprep.subr.mxu0 0.0
  %1047 = vmatpush2.xpose.msra.mxu0 0.0
  %1048 = vmatprep.subr.mxu0 0.0
  %1049 = vmatpush2.xpose.msra.mxu0 0.0
  %1050 = vmatprep.subr.mxu0 0.0
  %1051 = vmatpush2.xpose.msra.mxu0 0.0
  %1052 = vmatprep.subr.mxu0 0.0
  %1053 = vmatpush2.xpose.msra.mxu0 0.0
  %1054 = vmatprep.subr.mxu0 0.0
  %1055 = vmatpush2.xpose.msra.mxu0 0.0
  %1056 = vmatprep.mubr.f32.mxu0 0.0
  %1057 = vmatmul.mubr.f32.gmra.mxu0 %v984
  %v1058 = vpop.f32.mrf.mxu0
  %v1059 = vadd.f32 %v22, %v1058
  %v1060 = vpop.f32.mrf.mxu0
  %1061 = vmatprep.mubr.f32.mxu0 0.0
  %1062 = vmatmul.mubr.f32.gmra.mxu0 %v986
  %v1063 = vpop.f32.mrf.mxu0
  %v1064 = vadd.f32 %v24, %v1063
  %v1065 = vpop.f32.mrf.mxu0
  %1066 = vdwg.mxu0
  %v1067 = vsel %vm209, %v1059, -inf
  %1068 = vmax.xlane.f32.xlu0 %v1067
  %v1069 = vpop.xlane.xlu0 %1068
  %v1070 = vsel %vm209, %v1064, -inf
  %1071 = vmax.xlane.f32.xlu0 %v1070
  %v1072 = vpop.xlane.xlu0 %1071
  %v1073 = vsub.f32 %v1059, %v1069
  %v1074 = vsub.f32 %v1064, %v1072
  %v1075 = vmul.f32 %v1073, 1.442695
  %v1076 = vpow.pop %v1075
  %v1077 = vmul.f32 %v1074, 1.442695
  %v1078 = vpow.pop %v1077
  %v1079 = vsel %vm209, %v1076, 0.0
  %1080 = vadd.xlane.f32.xlu0 %v1079
  %v1081 = vpop.xlane.xlu0 %1080
  %v1082 = vsel %vm209, %v1078, 0.0
  %1083 = vadd.xlane.f32.xlu0 %v1082
  %v1084 = vpop.xlane.xlu0 %1083
  %v1085 = vrcp.pop %v1081
  %v1086 = vrcp.pop %v1084
  %v1087 = vmul.f32 %v1076, %v1085
  %v1088 = vmul.f32 %v1078, %v1086
  %1089 = vrot.lane.b32.xlu0 %v107, 40
  %v1090 = vpop.permute.xlu0 %1089
  %1091 = vrot.lane.b32.xlu0 %v112, 40
  %v1092 = vpop.permute.xlu0 %1091
  %v1096 = vsel %vm209, %v1087, 0
  %v1099 = vsel %vm209, %v1088, 0
  %1101 = vmatprep.subr.mxu0 0.0
  %1102 = vmatpush1.msra.mxu0 0.0
  %1103 = vmatprep.subr.mxu0 0.0
  %1104 = vmatpush1.msra.mxu0 0.0
  %1105 = vmatprep.subr.mxu0 0.0
  %1106 = vmatpush1.msra.mxu0 0.0
  %1107 = vmatprep.subr.mxu0 0.0
  %1108 = vmatpush1.msra.mxu0 0.0
  %1109 = vmatprep.subr.mxu0 0.0
  %1110 = vmatpush1.msra.mxu0 0.0
  %1111 = vmatprep.subr.mxu0 0.0
  %1112 = vmatpush1.msra.mxu0 0.0
  %1113 = vmatprep.subr.mxu0 0.0
  %1114 = vmatpush1.msra.mxu0 0.0
  %1115 = vmatprep.subr.mxu0 0.0
  %1116 = vmatpush1.msra.mxu0 0.0
  %1117 = vmatprep.subr.mxu0 0.0
  %1118 = vmatpush1.msra.mxu0 0.0
  %1119 = vmatprep.subr.mxu0 0.0
  %1120 = vmatpush1.msra.mxu0 0.0
  %1121 = vmatprep.subr.mxu0 0.0
  %1122 = vmatpush1.msra.mxu0 0.0
  %1123 = vmatprep.subr.mxu0 0.0
  %1124 = vmatpush1.msra.mxu0 0.0
  %1125 = vmatprep.subr.mxu0 0.0
  %1126 = vmatpush1.msra.mxu0 0.0
  %1127 = vmatprep.subr.mxu0 0.0
  %1128 = vmatpush1.msra.mxu0 0.0
  %1129 = vmatprep.subr.mxu0 0.0
  %1130 = vmatpush1.msra.mxu0 %v1092
  %1131 = vmatprep.subr.mxu0 0.0
  %1132 = vmatpush1.msra.mxu0 %v1090
  %1133 = vmatprep.subr.mxu0 0.0
  %1134 = vmatpush2.msra.mxu0 0.0
  %1135 = vmatprep.subr.mxu0 0.0
  %1136 = vmatpush2.msra.mxu0 0.0
  %1137 = vmatprep.subr.mxu0 0.0
  %1138 = vmatpush2.msra.mxu0 0.0
  %1139 = vmatprep.subr.mxu0 0.0
  %1140 = vmatpush2.msra.mxu0 0.0
  %1141 = vmatprep.subr.mxu0 0.0
  %1142 = vmatpush2.msra.mxu0 0.0
  %1143 = vmatprep.subr.mxu0 0.0
  %1144 = vmatpush2.msra.mxu0 0.0
  %1145 = vmatprep.subr.mxu0 0.0
  %1146 = vmatpush2.msra.mxu0 0.0
  %1147 = vmatprep.subr.mxu0 0.0
  %1148 = vmatpush2.msra.mxu0 0.0
  %1149 = vmatprep.subr.mxu0 0.0
  %1150 = vmatpush2.msra.mxu0 0.0
  %1151 = vmatprep.subr.mxu0 0.0
  %1152 = vmatpush2.msra.mxu0 0.0
  %1153 = vmatprep.subr.mxu0 0.0
  %1154 = vmatpush2.msra.mxu0 0.0
  %1155 = vmatprep.subr.mxu0 0.0
  %1156 = vmatpush2.msra.mxu0 0.0
  %1157 = vmatprep.subr.mxu0 0.0
  %1158 = vmatpush2.msra.mxu0 0.0
  %1159 = vmatprep.subr.mxu0 0.0
  %1160 = vmatpush2.msra.mxu0 0.0
  %1161 = vmatprep.subr.mxu0 0.0
  %1162 = vmatpush2.msra.mxu0 0.0
  %1163 = vmatprep.subr.mxu0 0.0
  %1164 = vmatpush2.msra.mxu0 0.0
  %1165 = vmatprep.mubr.f32.mxu0 0.0
  %1166 = vmatmul.mubr.f32.gmra.mxu0 %v1096
  %v1167 = vpop.f32.mrf.mxu0
  %v1168 = vadd.f32 0.0, %v1167
  %v1169 = vpop.f32.mrf.mxu0
  %1170 = vmatprep.mubr.f32.mxu0 0.0
  %1171 = vmatmul.mubr.f32.gmra.mxu0 %v1099
  %v1172 = vpop.f32.mrf.mxu0
  %v1173 = vadd.f32 0.0, %v1172
  %v1174 = vpop.f32.mrf.mxu0
  %1175 = vdwg.mxu0
  %1177 = vrot.lane.b32.xlu0 %v28, 32
  %v1178 = vpop.permute.xlu0 %1177
  %v1181 = vsel %vm123, %v1168, 0
  %v1184 = vsel %vm123, %v1173, 0
  %1186 = vmatprep.subr.mxu0 0.0
  %1187 = vmatpush1.msra.mxu0 0.0
  %1188 = vmatprep.subr.mxu0 0.0
  %1189 = vmatpush1.msra.mxu0 0.0
  %1190 = vmatprep.subr.mxu0 0.0
  %1191 = vmatpush1.msra.mxu0 0.0
  %1192 = vmatprep.subr.mxu0 0.0
  %1193 = vmatpush1.msra.mxu0 0.0
  %1194 = vmatprep.subr.mxu0 0.0
  %1195 = vmatpush1.msra.mxu0 0.0
  %1196 = vmatprep.subr.mxu0 0.0
  %1197 = vmatpush1.msra.mxu0 0.0
  %1198 = vmatprep.subr.mxu0 0.0
  %1199 = vmatpush1.msra.mxu0 0.0
  %1200 = vmatprep.subr.mxu0 0.0
  %1201 = vmatpush1.msra.mxu0 0.0
  %1202 = vmatprep.subr.mxu0 0.0
  %1203 = vmatpush1.msra.mxu0 0.0
  %1204 = vmatprep.subr.mxu0 0.0
  %1205 = vmatpush1.msra.mxu0 0.0
  %1206 = vmatprep.subr.mxu0 0.0
  %1207 = vmatpush1.msra.mxu0 0.0
  %1208 = vmatprep.subr.mxu0 0.0
  %1209 = vmatpush1.msra.mxu0 0.0
  %1210 = vmatprep.subr.mxu0 0.0
  %1211 = vmatpush1.msra.mxu0 0.0
  %1212 = vmatprep.subr.mxu0 0.0
  %1213 = vmatpush1.msra.mxu0 0.0
  %1214 = vmatprep.subr.mxu0 0.0
  %1215 = vmatpush1.msra.mxu0 0.0
  %1216 = vmatprep.subr.mxu0 0.0
  %1217 = vmatpush1.msra.mxu0 %v1178
  %1218 = vmatprep.subr.mxu0 0.0
  %1219 = vmatpush2.msra.mxu0 0.0
  %1220 = vmatprep.subr.mxu0 0.0
  %1221 = vmatpush2.msra.mxu0 0.0
  %1222 = vmatprep.subr.mxu0 0.0
  %1223 = vmatpush2.msra.mxu0 0.0
  %1224 = vmatprep.subr.mxu0 0.0
  %1225 = vmatpush2.msra.mxu0 0.0
  %1226 = vmatprep.subr.mxu0 0.0
  %1227 = vmatpush2.msra.mxu0 0.0
  %1228 = vmatprep.subr.mxu0 0.0
  %1229 = vmatpush2.msra.mxu0 0.0
  %1230 = vmatprep.subr.mxu0 0.0
  %1231 = vmatpush2.msra.mxu0 0.0
  %1232 = vmatprep.subr.mxu0 0.0
  %1233 = vmatpush2.msra.mxu0 0.0
  %1234 = vmatprep.subr.mxu0 0.0
  %1235 = vmatpush2.msra.mxu0 0.0
  %1236 = vmatprep.subr.mxu0 0.0
  %1237 = vmatpush2.msra.mxu0 0.0
  %1238 = vmatprep.subr.mxu0 0.0
  %1239 = vmatpush2.msra.mxu0 0.0
  %1240 = vmatprep.subr.mxu0 0.0
  %1241 = vmatpush2.msra.mxu0 0.0
  %1242 = vmatprep.subr.mxu0 0.0
  %1243 = vmatpush2.msra.mxu0 0.0
  %1244 = vmatprep.subr.mxu0 0.0
  %1245 = vmatpush2.msra.mxu0 0.0
  %1246 = vmatprep.subr.mxu0 0.0
  %1247 = vmatpush2.msra.mxu0 0.0
  %1248 = vmatprep.subr.mxu0 0.0
  %1249 = vmatpush2.msra.mxu0 0.0
  %1250 = vmatprep.mubr.f32.mxu0 0.0
  %1251 = vmatmul.mubr.f32.gmra.mxu0 %v1181
  %v1252 = vpop.f32.mrf.mxu0
  %v1253 = vadd.f32 0.0, %v1252
  %v1254 = vpop.f32.mrf.mxu0
  %1255 = vmatprep.mubr.f32.mxu0 0.0
  %1256 = vmatmul.mubr.f32.gmra.mxu0 %v1184
  %v1257 = vpop.f32.mrf.mxu0
  %v1258 = vadd.f32 0.0, %v1257
  %v1259 = vpop.f32.mrf.mxu0
  %1260 = vdwg.mxu0
  %v1261 = vadd.f32 %v974, %v1253
  %v1262 = vadd.f32 %v975, %v1258
  %v1263 = vadd.f32 %v17, %v1261
  %v1264 = vadd.f32 %v18, %v1262
  %v1265 = vlaneseq
  %v1266 = vshrl.u32 %v1265, 7
  %v1267 = vsub.s32 1, %v1266
  %v1268 = vrot.slane %v21, %v1267
  %v1269 = vadd.f32 %v1263, %v1268
  %v1270 = vadd.f32 %v1264, %v1268
  %v1271 = vsel %vm33, %v1269, 0.0
  %1272 = vadd.xlane.f32.xlu0 %v1271
  %v1273 = vpop.xlane.xlu0 %1272
  %v1274 = vsel %vm33, %v1270, 0.0
  %1275 = vadd.xlane.f32.xlu0 %v1274
  %v1276 = vpop.xlane.xlu0 %1275
  %v1277 = vrcp.pop 32.0
  %v1278 = vmul.f32 %v1273, %v1277
  %v1279 = vmul.f32 %v1276, %v1277
  %v1280 = vsub.f32 %v1269, %v1278
  %v1281 = vsub.f32 %v1270, %v1279
  %v1282 = vmul.f32 %v1280, %v1280
  %v1283 = vmul.f32 %v1281, %v1281
  %v1284 = vsel %vm33, %v1282, 0.0
  %1285 = vadd.xlane.f32.xlu0 %v1284
  %v1286 = vpop.xlane.xlu0 %1285
  %v1287 = vsel %vm33, %v1283, 0.0
  %1288 = vadd.xlane.f32.xlu0 %v1287
  %v1289 = vpop.xlane.xlu0 %1288
  %v1290 = vmul.f32 %v1286, %v1277
  %v1291 = vmul.f32 %v1289, %v1277
  %v1292 = vadd.f32 %v1290, 1e-05
  %v1293 = vadd.f32 %v1291, 1e-05
  %v1294 = vrsqrt.pop %v1292
  %v1295 = vrsqrt.pop %v1293
  %v1296 = vmul.f32 %v1280, %v1294
  %v1297 = vmul.f32 %v1281, %v1295
  %v1298 = vlaneseq
  %v1299 = vshrl.u32 %v1298, 7
  %v1300 = vsub.s32 2, %v1299
  %v1301 = vrot.slane %v21, %v1300
  %v1302 = vmul.f32 %v1296, %v1301
  %v1303 = vmul.f32 %v1297, %v1301
  %v1304 = vlaneseq
  %v1305 = vshrl.u32 %v1304, 7
  %v1306 = vsub.s32 3, %v1305
  %v1307 = vrot.slane %v21, %v1306
  %v1308 = vadd.f32 %v1302, %v1307
  %v1309 = vadd.f32 %v1303, %v1307
  %v1310 = vld [vmem:[%s2 + $0x8] sm:$0xff]
  %v1311 = vld [vmem:[%s2 + $0x20] sm:$0xff]
  %v1312 = vld [vmem:[%s2 + $0x38] sm:$0xff]
  %v1313 = vld [vmem:[%s2 + $0x50] sm:$0xff]
  %v1314 = vlaneseq
  %v1315 = vshrl.u32 %v1314, 7
  %v1316 = vsub.s32 4, %v1315
  %v1317 = vrot.slane %v21, %v1316
  %v1319 = vsel %vm33, %v1308, 0
  %v1322 = vsel %vm33, %v1309, 0
  %1324 = vmatprep.subr.mxu0 0.0
  %1325 = vmatpush1.msra.mxu0 0.0
  %1326 = vmatprep.subr.mxu0 0.0
  %1327 = vmatpush1.msra.mxu0 0.0
  %1328 = vmatprep.subr.mxu0 0.0
  %1329 = vmatpush1.msra.mxu0 0.0
  %1330 = vmatprep.subr.mxu0 0.0
  %1331 = vmatpush1.msra.mxu0 0.0
  %1332 = vmatprep.subr.mxu0 0.0
  %1333 = vmatpush1.msra.mxu0 0.0
  %1334 = vmatprep.subr.mxu0 0.0
  %1335 = vmatpush1.msra.mxu0 0.0
  %1336 = vmatprep.subr.mxu0 0.0
  %1337 = vmatpush1.msra.mxu0 0.0
  %1338 = vmatprep.subr.mxu0 0.0
  %1339 = vmatpush1.msra.mxu0 0.0
  %1340 = vmatprep.subr.mxu0 0.0
  %1341 = vmatpush1.msra.mxu0 0.0
  %1342 = vmatprep.subr.mxu0 0.0
  %1343 = vmatpush1.msra.mxu0 0.0
  %1344 = vmatprep.subr.mxu0 0.0
  %1345 = vmatpush1.msra.mxu0 0.0
  %1346 = vmatprep.subr.mxu0 0.0
  %1347 = vmatpush1.msra.mxu0 0.0
  %1348 = vmatprep.subr.mxu0 0.0
  %1349 = vmatpush1.msra.mxu0 %v1313
  %1350 = vmatprep.subr.mxu0 0.0
  %1351 = vmatpush1.msra.mxu0 %v1312
  %1352 = vmatprep.subr.mxu0 0.0
  %1353 = vmatpush1.msra.mxu0 %v1311
  %1354 = vmatprep.subr.mxu0 0.0
  %1355 = vmatpush1.msra.mxu0 %v1310
  %1356 = vmatprep.subr.mxu0 0.0
  %1357 = vmatpush2.msra.mxu0 0.0
  %1358 = vmatprep.subr.mxu0 0.0
  %1359 = vmatpush2.msra.mxu0 0.0
  %1360 = vmatprep.subr.mxu0 0.0
  %1361 = vmatpush2.msra.mxu0 0.0
  %1362 = vmatprep.subr.mxu0 0.0
  %1363 = vmatpush2.msra.mxu0 0.0
  %1364 = vmatprep.subr.mxu0 0.0
  %1365 = vmatpush2.msra.mxu0 0.0
  %1366 = vmatprep.subr.mxu0 0.0
  %1367 = vmatpush2.msra.mxu0 0.0
  %1368 = vmatprep.subr.mxu0 0.0
  %1369 = vmatpush2.msra.mxu0 0.0
  %1370 = vmatprep.subr.mxu0 0.0
  %1371 = vmatpush2.msra.mxu0 0.0
  %1372 = vmatprep.subr.mxu0 0.0
  %1373 = vmatpush2.msra.mxu0 0.0
  %1374 = vmatprep.subr.mxu0 0.0
  %1375 = vmatpush2.msra.mxu0 0.0
  %1376 = vmatprep.subr.mxu0 0.0
  %1377 = vmatpush2.msra.mxu0 0.0
  %1378 = vmatprep.subr.mxu0 0.0
  %1379 = vmatpush2.msra.mxu0 0.0
  %1380 = vmatprep.subr.mxu0 0.0
  %1381 = vmatpush2.msra.mxu0 0.0
  %1382 = vmatprep.subr.mxu0 0.0
  %1383 = vmatpush2.msra.mxu0 0.0
  %1384 = vmatprep.subr.mxu0 0.0
  %1385 = vmatpush2.msra.mxu0 0.0
  %1386 = vmatprep.subr.mxu0 0.0
  %1387 = vmatpush2.msra.mxu0 0.0
  %1388 = vmatprep.mubr.f32.mxu0 0.0
  %1389 = vmatmul.mubr.f32.gmra.mxu0 %v1319
  %v1390 = vpop.f32.mrf.mxu0
  %v1391 = vadd.f32 %v1317, %v1390
  %v1392 = vpop.f32.mrf.mxu0
  %1393 = vmatprep.mubr.f32.mxu0 0.0
  %1394 = vmatmul.mubr.f32.gmra.mxu0 %v1322
  %v1395 = vpop.f32.mrf.mxu0
  %v1396 = vadd.f32 %v1317, %v1395
  %v1397 = vpop.f32.mrf.mxu0
  %1398 = vdwg.mxu0
  %v1399 = vmul.f32 %v1391, 0.35355338
  %v1400 = vmul.f32 %v1396, 0.35355338
  %v1401 = vlaneseq
  %v1402 = vshrl.u32 %v1401, 7
  %v1403 = vsub.s32 5, %v1402
  %v1404 = vrot.slane %v21, %v1403
  %1409 = vrot.lane.b32.xlu0 %v1310, 96
  %v1410 = vpop.permute.xlu0 %1409
  %1411 = vrot.lane.b32.xlu0 %v1311, 96
  %v1412 = vpop.permute.xlu0 %1411
  %1413 = vrot.lane.b32.xlu0 %v1312, 96
  %v1414 = vpop.permute.xlu0 %1413
  %1415 = vrot.lane.b32.xlu0 %v1313, 96
  %v1416 = vpop.permute.xlu0 %1415
  %v1422 = vsel %vm33, %v19, 0
  %v1425 = vsel %vm33, %v20, 0
  %1427 = vmatprep.subr.mxu0 0.0
  %1428 = vmatpush1.msra.mxu0 0.0
  %1429 = vmatprep.subr.mxu0 0.0
  %1430 = vmatpush1.msra.mxu0 0.0
  %1431 = vmatprep.subr.mxu0 0.0
  %1432 = vmatpush1.msra.mxu0 0.0
  %1433 = vmatprep.subr.mxu0 0.0
  %1434 = vmatpush1.msra.mxu0 0.0
  %1435 = vmatprep.subr.mxu0 0.0
  %1436 = vmatpush1.msra.mxu0 0.0
  %1437 = vmatprep.subr.mxu0 0.0
  %1438 = vmatpush1.msra.mxu0 0.0
  %1439 = vmatprep.subr.mxu0 0.0
  %1440 = vmatpush1.msra.mxu0 0.0
  %1441 = vmatprep.subr.mxu0 0.0
  %1442 = vmatpush1.msra.mxu0 0.0
  %1443 = vmatprep.subr.mxu0 0.0
  %1444 = vmatpush1.msra.mxu0 0.0
  %1445 = vmatprep.subr.mxu0 0.0
  %1446 = vmatpush1.msra.mxu0 0.0
  %1447 = vmatprep.subr.mxu0 0.0
  %1448 = vmatpush1.msra.mxu0 0.0
  %1449 = vmatprep.subr.mxu0 0.0
  %1450 = vmatpush1.msra.mxu0 0.0
  %1451 = vmatprep.subr.mxu0 0.0
  %1452 = vmatpush1.msra.mxu0 %v1416
  %1453 = vmatprep.subr.mxu0 0.0
  %1454 = vmatpush1.msra.mxu0 %v1414
  %1455 = vmatprep.subr.mxu0 0.0
  %1456 = vmatpush1.msra.mxu0 %v1412
  %1457 = vmatprep.subr.mxu0 0.0
  %1458 = vmatpush1.msra.mxu0 %v1410
  %1459 = vmatprep.subr.mxu0 0.0
  %1460 = vmatpush2.msra.mxu0 0.0
  %1461 = vmatprep.subr.mxu0 0.0
  %1462 = vmatpush2.msra.mxu0 0.0
  %1463 = vmatprep.subr.mxu0 0.0
  %1464 = vmatpush2.msra.mxu0 0.0
  %1465 = vmatprep.subr.mxu0 0.0
  %1466 = vmatpush2.msra.mxu0 0.0
  %1467 = vmatprep.subr.mxu0 0.0
  %1468 = vmatpush2.msra.mxu0 0.0
  %1469 = vmatprep.subr.mxu0 0.0
  %1470 = vmatpush2.msra.mxu0 0.0
  %1471 = vmatprep.subr.mxu0 0.0
  %1472 = vmatpush2.msra.mxu0 0.0
  %1473 = vmatprep.subr.mxu0 0.0
  %1474 = vmatpush2.msra.mxu0 0.0
  %1475 = vmatprep.subr.mxu0 0.0
  %1476 = vmatpush2.msra.mxu0 0.0
  %1477 = vmatprep.subr.mxu0 0.0
  %1478 = vmatpush2.msra.mxu0 0.0
  %1479 = vmatprep.subr.mxu0 0.0
  %1480 = vmatpush2.msra.mxu0 0.0
  %1481 = vmatprep.subr.mxu0 0.0
  %1482 = vmatpush2.msra.mxu0 0.0
  %1483 = vmatprep.subr.mxu0 0.0
  %1484 = vmatpush2.msra.mxu0 0.0
  %1485 = vmatprep.subr.mxu0 0.0
  %1486 = vmatpush2.msra.mxu0 0.0
  %1487 = vmatprep.subr.mxu0 0.0
  %1488 = vmatpush2.msra.mxu0 0.0
  %1489 = vmatprep.subr.mxu0 0.0
  %1490 = vmatpush2.msra.mxu0 0.0
  %1491 = vmatprep.mubr.f32.mxu0 0.0
  %1492 = vmatmul.mubr.f32.gmra.mxu0 %v1422
  %v1493 = vpop.f32.mrf.mxu0
  %v1494 = vadd.f32 %v1404, %v1493
  %v1495 = vpop.f32.mrf.mxu0
  %1496 = vmatprep.mubr.f32.mxu0 0.0
  %1497 = vmatmul.mubr.f32.gmra.mxu0 %v1425
  %v1498 = vpop.f32.mrf.mxu0
  %v1499 = vadd.f32 %v1404, %v1498
  %v1500 = vpop.f32.mrf.mxu0
  %1501 = vdwg.mxu0
  %1504 = vrot.lane.b32.xlu0 %v22, 112
  %v1505 = vpop.permute.xlu0 %1504
  %1506 = vrot.lane.b32.xlu0 %v24, 112
  %v1507 = vpop.permute.xlu0 %1506
  %v1511 = vsel %vm123, %v1399, 0
  %v1514 = vsel %vm123, %v1400, 0
  %v1517 = vsel %vm123, %v1494, 0
  %v1520 = vsel %vm123, %v1499, 0
  %1522 = vmatprep.subr.mxu0 0.0
  %1523 = vmatpush1.xpose.msra.mxu0 0.0
  %1524 = vmatprep.subr.mxu0 0.0
  %1525 = vmatpush1.xpose.msra.mxu0 0.0
  %1526 = vmatprep.subr.mxu0 0.0
  %1527 = vmatpush1.xpose.msra.mxu0 0.0
  %1528 = vmatprep.subr.mxu0 0.0
  %1529 = vmatpush1.xpose.msra.mxu0 0.0
  %1530 = vmatprep.subr.mxu0 0.0
  %1531 = vmatpush1.xpose.msra.mxu0 0.0
  %1532 = vmatprep.subr.mxu0 0.0
  %1533 = vmatpush1.xpose.msra.mxu0 0.0
  %1534 = vmatprep.subr.mxu0 0.0
  %1535 = vmatpush1.xpose.msra.mxu0 0.0
  %1536 = vmatprep.subr.mxu0 0.0
  %1537 = vmatpush1.xpose.msra.mxu0 0.0
  %1538 = vmatprep.subr.mxu0 0.0
  %1539 = vmatpush1.xpose.msra.mxu0 0.0
  %1540 = vmatprep.subr.mxu0 0.0
  %1541 = vmatpush1.xpose.msra.mxu0 0.0
  %1542 = vmatprep.subr.mxu0 0.0
  %1543 = vmatpush1.xpose.msra.mxu0 0.0
  %1544 = vmatprep.subr.mxu0 0.0
  %1545 = vmatpush1.xpose.msra.mxu0 0.0
  %1546 = vmatprep.subr.mxu0 0.0
  %1547 = vmatpush1.xpose.msra.mxu0 0.0
  %1548 = vmatprep.subr.mxu0 0.0
  %1549 = vmatpush1.xpose.msra.mxu0 0.0
  %1550 = vmatprep.subr.mxu0 0.0
  %1551 = vmatpush1.xpose.msra.mxu0 %v1520
  %1552 = vmatprep.subr.mxu0 0.0
  %1553 = vmatpush1.xpose.msra.mxu0 %v1517
  %1554 = vmatprep.subr.mxu0 0.0
  %1555 = vmatpush2.xpose.msra.mxu0 0.0
  %1556 = vmatprep.subr.mxu0 0.0
  %1557 = vmatpush2.xpose.msra.mxu0 0.0
  %1558 = vmatprep.subr.mxu0 0.0
  %1559 = vmatpush2.xpose.msra.mxu0 0.0
  %1560 = vmatprep.subr.mxu0 0.0
  %1561 = vmatpush2.xpose.msra.mxu0 0.0
  %1562 = vmatprep.subr.mxu0 0.0
  %1563 = vmatpush2.xpose.msra.mxu0 0.0
  %1564 = vmatprep.subr.mxu0 0.0
  %1565 = vmatpush2.xpose.msra.mxu0 0.0
  %1566 = vmatprep.subr.mxu0 0.0
  %1567 = vmatpush2.xpose.msra.mxu0 0.0
  %1568 = vmatprep.subr.mxu0 0.0
  %1569 = vmatpush2.xpose.msra.mxu0 0.0
  %1570 = vmatprep.subr.mxu0 0.0
  %1571 = vmatpush2.xpose.msra.mxu0 0.0
  %1572 = vmatprep.subr.mxu0 0.0
  %1573 = vmatpush2.xpose.msra.mxu0 0.0
  %1574 = vmatprep.subr.mxu0 0.0
  %1575 = vmatpush2.xpose.msra.mxu0 0.0
  %1576 = vmatprep.subr.mxu0 0.0
  %1577 = vmatpush2.xpose.msra.mxu0 0.0
  %1578 = vmatprep.subr.mxu0 0.0
  %1579 = vmatpush2.xpose.msra.mxu0 0.0
  %1580 = vmatprep.subr.mxu0 0.0
  %1581 = vmatpush2.xpose.msra.mxu0 0.0
  %1582 = vmatprep.subr.mxu0 0.0
  %1583 = vmatpush2.xpose.msra.mxu0 0.0
  %1584 = vmatprep.subr.mxu0 0.0
  %1585 = vmatpush2.xpose.msra.mxu0 0.0
  %1586 = vmatprep.mubr.f32.mxu0 0.0
  %1587 = vmatmul.mubr.f32.gmra.mxu0 %v1511
  %v1588 = vpop.f32.mrf.mxu0
  %v1589 = vadd.f32 %v1505, %v1588
  %v1590 = vpop.f32.mrf.mxu0
  %1591 = vmatprep.mubr.f32.mxu0 0.0
  %1592 = vmatmul.mubr.f32.gmra.mxu0 %v1514
  %v1593 = vpop.f32.mrf.mxu0
  %v1594 = vadd.f32 %v1507, %v1593
  %v1595 = vpop.f32.mrf.mxu0
  %1596 = vdwg.mxu0
  %v1597 = vsel %vm209, %v1589, -inf
  %1598 = vmax.xlane.f32.xlu0 %v1597
  %v1599 = vpop.xlane.xlu0 %1598
  %v1600 = vsel %vm209, %v1594, -inf
  %1601 = vmax.xlane.f32.xlu0 %v1600
  %v1602 = vpop.xlane.xlu0 %1601
  %v1603 = vsub.f32 %v1589, %v1599
  %v1604 = vsub.f32 %v1594, %v1602
  %v1605 = vmul.f32 %v1603, 1.442695
  %v1606 = vpow.pop %v1605
  %v1607 = vmul.f32 %v1604, 1.442695
  %v1608 = vpow.pop %v1607
  %v1609 = vsel %vm209, %v1606, 0.0
  %1610 = vadd.xlane.f32.xlu0 %v1609
  %v1611 = vpop.xlane.xlu0 %1610
  %v1612 = vsel %vm209, %v1608, 0.0
  %1613 = vadd.xlane.f32.xlu0 %v1612
  %v1614 = vpop.xlane.xlu0 %1613
  %v1615 = vrcp.pop %v1611
  %v1616 = vrcp.pop %v1614
  %v1617 = vmul.f32 %v1606, %v1615
  %v1618 = vmul.f32 %v1608, %v1616
  %1619 = vrot.lane.b32.xlu0 %v1494, 96
  %v1620 = vpop.permute.xlu0 %1619
  %1621 = vrot.lane.b32.xlu0 %v1499, 96
  %v1622 = vpop.permute.xlu0 %1621
  %v1626 = vsel %vm209, %v1617, 0
  %v1629 = vsel %vm209, %v1618, 0
  %1631 = vmatprep.subr.mxu0 0.0
  %1632 = vmatpush1.msra.mxu0 0.0
  %1633 = vmatprep.subr.mxu0 0.0
  %1634 = vmatpush1.msra.mxu0 0.0
  %1635 = vmatprep.subr.mxu0 0.0
  %1636 = vmatpush1.msra.mxu0 0.0
  %1637 = vmatprep.subr.mxu0 0.0
  %1638 = vmatpush1.msra.mxu0 0.0
  %1639 = vmatprep.subr.mxu0 0.0
  %1640 = vmatpush1.msra.mxu0 0.0
  %1641 = vmatprep.subr.mxu0 0.0
  %1642 = vmatpush1.msra.mxu0 0.0
  %1643 = vmatprep.subr.mxu0 0.0
  %1644 = vmatpush1.msra.mxu0 0.0
  %1645 = vmatprep.subr.mxu0 0.0
  %1646 = vmatpush1.msra.mxu0 0.0
  %1647 = vmatprep.subr.mxu0 0.0
  %1648 = vmatpush1.msra.mxu0 0.0
  %1649 = vmatprep.subr.mxu0 0.0
  %1650 = vmatpush1.msra.mxu0 0.0
  %1651 = vmatprep.subr.mxu0 0.0
  %1652 = vmatpush1.msra.mxu0 0.0
  %1653 = vmatprep.subr.mxu0 0.0
  %1654 = vmatpush1.msra.mxu0 0.0
  %1655 = vmatprep.subr.mxu0 0.0
  %1656 = vmatpush1.msra.mxu0 0.0
  %1657 = vmatprep.subr.mxu0 0.0
  %1658 = vmatpush1.msra.mxu0 0.0
  %1659 = vmatprep.subr.mxu0 0.0
  %1660 = vmatpush1.msra.mxu0 %v1622
  %1661 = vmatprep.subr.mxu0 0.0
  %1662 = vmatpush1.msra.mxu0 %v1620
  %1663 = vmatprep.subr.mxu0 0.0
  %1664 = vmatpush2.msra.mxu0 0.0
  %1665 = vmatprep.subr.mxu0 0.0
  %1666 = vmatpush2.msra.mxu0 0.0
  %1667 = vmatprep.subr.mxu0 0.0
  %1668 = vmatpush2.msra.mxu0 0.0
  %1669 = vmatprep.subr.mxu0 0.0
  %1670 = vmatpush2.msra.mxu0 0.0
  %1671 = vmatprep.subr.mxu0 0.0
  %1672 = vmatpush2.msra.mxu0 0.0
  %1673 = vmatprep.subr.mxu0 0.0
  %1674 = vmatpush2.msra.mxu0 0.0
  %1675 = vmatprep.subr.mxu0 0.0
  %1676 = vmatpush2.msra.mxu0 0.0
  %1677 = vmatprep.subr.mxu0 0.0
  %1678 = vmatpush2.msra.mxu0 0.0
  %1679 = vmatprep.subr.mxu0 0.0
  %1680 = vmatpush2.msra.mxu0 0.0
  %1681 = vmatprep.subr.mxu0 0.0
  %1682 = vmatpush2.msra.mxu0 0.0
  %1683 = vmatprep.subr.mxu0 0.0
  %1684 = vmatpush2.msra.mxu0 0.0
  %1685 = vmatprep.subr.mxu0 0.0
  %1686 = vmatpush2.msra.mxu0 0.0
  %1687 = vmatprep.subr.mxu0 0.0
  %1688 = vmatpush2.msra.mxu0 0.0
  %1689 = vmatprep.subr.mxu0 0.0
  %1690 = vmatpush2.msra.mxu0 0.0
  %1691 = vmatprep.subr.mxu0 0.0
  %1692 = vmatpush2.msra.mxu0 0.0
  %1693 = vmatprep.subr.mxu0 0.0
  %1694 = vmatpush2.msra.mxu0 0.0
  %1695 = vmatprep.mubr.f32.mxu0 0.0
  %1696 = vmatmul.mubr.f32.gmra.mxu0 %v1626
  %v1697 = vpop.f32.mrf.mxu0
  %v1698 = vadd.f32 0.0, %v1697
  %v1699 = vpop.f32.mrf.mxu0
  %1700 = vmatprep.mubr.f32.mxu0 0.0
  %1701 = vmatmul.mubr.f32.gmra.mxu0 %v1629
  %v1702 = vpop.f32.mrf.mxu0
  %v1703 = vadd.f32 0.0, %v1702
  %v1704 = vpop.f32.mrf.mxu0
  %1705 = vdwg.mxu0
  %1706 = vrot.lane.b32.xlu0 %v1399, 120
  %v1707 = vpop.permute.xlu0 %1706
  %1708 = vrot.lane.b32.xlu0 %v1400, 120
  %v1709 = vpop.permute.xlu0 %1708
  %1710 = vrot.lane.b32.xlu0 %v1494, 120
  %v1711 = vpop.permute.xlu0 %1710
  %1712 = vrot.lane.b32.xlu0 %v1499, 120
  %v1713 = vpop.permute.xlu0 %1712
  %v1714 = vsel %vm123, %v1707, 0
  %v1716 = vsel %vm123, %v1709, 0
  %v1718 = vsel %vm123, %v1711, 0
  %v1720 = vsel %vm123, %v1713, 0
  %1722 = vmatprep.subr.mxu0 0.0
  %1723 = vmatpush1.xpose.msra.mxu0 0.0
  %1724 = vmatprep.subr.mxu0 0.0
  %1725 = vmatpush1.xpose.msra.mxu0 0.0
  %1726 = vmatprep.subr.mxu0 0.0
  %1727 = vmatpush1.xpose.msra.mxu0 0.0
  %1728 = vmatprep.subr.mxu0 0.0
  %1729 = vmatpush1.xpose.msra.mxu0 0.0
  %1730 = vmatprep.subr.mxu0 0.0
  %1731 = vmatpush1.xpose.msra.mxu0 0.0
  %1732 = vmatprep.subr.mxu0 0.0
  %1733 = vmatpush1.xpose.msra.mxu0 0.0
  %1734 = vmatprep.subr.mxu0 0.0
  %1735 = vmatpush1.xpose.msra.mxu0 0.0
  %1736 = vmatprep.subr.mxu0 0.0
  %1737 = vmatpush1.xpose.msra.mxu0 0.0
  %1738 = vmatprep.subr.mxu0 0.0
  %1739 = vmatpush1.xpose.msra.mxu0 0.0
  %1740 = vmatprep.subr.mxu0 0.0
  %1741 = vmatpush1.xpose.msra.mxu0 0.0
  %1742 = vmatprep.subr.mxu0 0.0
  %1743 = vmatpush1.xpose.msra.mxu0 0.0
  %1744 = vmatprep.subr.mxu0 0.0
  %1745 = vmatpush1.xpose.msra.mxu0 0.0
  %1746 = vmatprep.subr.mxu0 0.0
  %1747 = vmatpush1.xpose.msra.mxu0 0.0
  %1748 = vmatprep.subr.mxu0 0.0
  %1749 = vmatpush1.xpose.msra.mxu0 0.0
  %1750 = vmatprep.subr.mxu0 0.0
  %1751 = vmatpush1.xpose.msra.mxu0 %v1720
  %1752 = vmatprep.subr.mxu0 0.0
  %1753 = vmatpush1.xpose.msra.mxu0 %v1718
  %1754 = vmatprep.subr.mxu0 0.0
  %1755 = vmatpush2.xpose.msra.mxu0 0.0
  %1756 = vmatprep.subr.mxu0 0.0
  %1757 = vmatpush2.xpose.msra.mxu0 0.0
  %1758 = vmatprep.subr.mxu0 0.0
  %1759 = vmatpush2.xpose.msra.mxu0 0.0
  %1760 = vmatprep.subr.mxu0 0.0
  %1761 = vmatpush2.xpose.msra.mxu0 0.0
  %1762 = vmatprep.subr.mxu0 0.0
  %1763 = vmatpush2.xpose.msra.mxu0 0.0
  %1764 = vmatprep.subr.mxu0 0.0
  %1765 = vmatpush2.xpose.msra.mxu0 0.0
  %1766 = vmatprep.subr.mxu0 0.0
  %1767 = vmatpush2.xpose.msra.mxu0 0.0
  %1768 = vmatprep.subr.mxu0 0.0
  %1769 = vmatpush2.xpose.msra.mxu0 0.0
  %1770 = vmatprep.subr.mxu0 0.0
  %1771 = vmatpush2.xpose.msra.mxu0 0.0
  %1772 = vmatprep.subr.mxu0 0.0
  %1773 = vmatpush2.xpose.msra.mxu0 0.0
  %1774 = vmatprep.subr.mxu0 0.0
  %1775 = vmatpush2.xpose.msra.mxu0 0.0
  %1776 = vmatprep.subr.mxu0 0.0
  %1777 = vmatpush2.xpose.msra.mxu0 0.0
  %1778 = vmatprep.subr.mxu0 0.0
  %1779 = vmatpush2.xpose.msra.mxu0 0.0
  %1780 = vmatprep.subr.mxu0 0.0
  %1781 = vmatpush2.xpose.msra.mxu0 0.0
  %1782 = vmatprep.subr.mxu0 0.0
  %1783 = vmatpush2.xpose.msra.mxu0 0.0
  %1784 = vmatprep.subr.mxu0 0.0
  %1785 = vmatpush2.xpose.msra.mxu0 0.0
  %1786 = vmatprep.mubr.f32.mxu0 0.0
  %1787 = vmatmul.mubr.f32.gmra.mxu0 %v1714
  %v1788 = vpop.f32.mrf.mxu0
  %v1789 = vadd.f32 %v1505, %v1788
  %v1790 = vpop.f32.mrf.mxu0
  %1791 = vmatprep.mubr.f32.mxu0 0.0
  %1792 = vmatmul.mubr.f32.gmra.mxu0 %v1716
  %v1793 = vpop.f32.mrf.mxu0
  %v1794 = vadd.f32 %v1507, %v1793
  %v1795 = vpop.f32.mrf.mxu0
  %1796 = vdwg.mxu0
  %v1797 = vsel %vm209, %v1789, -inf
  %1798 = vmax.xlane.f32.xlu0 %v1797
  %v1799 = vpop.xlane.xlu0 %1798
  %v1800 = vsel %vm209, %v1794, -inf
  %1801 = vmax.xlane.f32.xlu0 %v1800
  %v1802 = vpop.xlane.xlu0 %1801
  %v1803 = vsub.f32 %v1789, %v1799
  %v1804 = vsub.f32 %v1794, %v1802
  %v1805 = vmul.f32 %v1803, 1.442695
  %v1806 = vpow.pop %v1805
  %v1807 = vmul.f32 %v1804, 1.442695
  %v1808 = vpow.pop %v1807
  %v1809 = vsel %vm209, %v1806, 0.0
  %1810 = vadd.xlane.f32.xlu0 %v1809
  %v1811 = vpop.xlane.xlu0 %1810
  %v1812 = vsel %vm209, %v1808, 0.0
  %1813 = vadd.xlane.f32.xlu0 %v1812
  %v1814 = vpop.xlane.xlu0 %1813
  %v1815 = vrcp.pop %v1811
  %v1816 = vrcp.pop %v1814
  %v1817 = vmul.f32 %v1806, %v1815
  %v1818 = vmul.f32 %v1808, %v1816
  %1819 = vrot.lane.b32.xlu0 %v1494, 88
  %v1820 = vpop.permute.xlu0 %1819
  %1821 = vrot.lane.b32.xlu0 %v1499, 88
  %v1822 = vpop.permute.xlu0 %1821
  %v1826 = vsel %vm209, %v1817, 0
  %v1829 = vsel %vm209, %v1818, 0
  %1831 = vmatprep.subr.mxu0 0.0
  %1832 = vmatpush1.msra.mxu0 0.0
  %1833 = vmatprep.subr.mxu0 0.0
  %1834 = vmatpush1.msra.mxu0 0.0
  %1835 = vmatprep.subr.mxu0 0.0
  %1836 = vmatpush1.msra.mxu0 0.0
  %1837 = vmatprep.subr.mxu0 0.0
  %1838 = vmatpush1.msra.mxu0 0.0
  %1839 = vmatprep.subr.mxu0 0.0
  %1840 = vmatpush1.msra.mxu0 0.0
  %1841 = vmatprep.subr.mxu0 0.0
  %1842 = vmatpush1.msra.mxu0 0.0
  %1843 = vmatprep.subr.mxu0 0.0
  %1844 = vmatpush1.msra.mxu0 0.0
  %1845 = vmatprep.subr.mxu0 0.0
  %1846 = vmatpush1.msra.mxu0 0.0
  %1847 = vmatprep.subr.mxu0 0.0
  %1848 = vmatpush1.msra.mxu0 0.0
  %1849 = vmatprep.subr.mxu0 0.0
  %1850 = vmatpush1.msra.mxu0 0.0
  %1851 = vmatprep.subr.mxu0 0.0
  %1852 = vmatpush1.msra.mxu0 0.0
  %1853 = vmatprep.subr.mxu0 0.0
  %1854 = vmatpush1.msra.mxu0 0.0
  %1855 = vmatprep.subr.mxu0 0.0
  %1856 = vmatpush1.msra.mxu0 0.0
  %1857 = vmatprep.subr.mxu0 0.0
  %1858 = vmatpush1.msra.mxu0 0.0
  %1859 = vmatprep.subr.mxu0 0.0
  %1860 = vmatpush1.msra.mxu0 %v1822
  %1861 = vmatprep.subr.mxu0 0.0
  %1862 = vmatpush1.msra.mxu0 %v1820
  %1863 = vmatprep.subr.mxu0 0.0
  %1864 = vmatpush2.msra.mxu0 0.0
  %1865 = vmatprep.subr.mxu0 0.0
  %1866 = vmatpush2.msra.mxu0 0.0
  %1867 = vmatprep.subr.mxu0 0.0
  %1868 = vmatpush2.msra.mxu0 0.0
  %1869 = vmatprep.subr.mxu0 0.0
  %1870 = vmatpush2.msra.mxu0 0.0
  %1871 = vmatprep.subr.mxu0 0.0
  %1872 = vmatpush2.msra.mxu0 0.0
  %1873 = vmatprep.subr.mxu0 0.0
  %1874 = vmatpush2.msra.mxu0 0.0
  %1875 = vmatprep.subr.mxu0 0.0
  %1876 = vmatpush2.msra.mxu0 0.0
  %1877 = vmatprep.subr.mxu0 0.0
  %1878 = vmatpush2.msra.mxu0 0.0
  %1879 = vmatprep.subr.mxu0 0.0
  %1880 = vmatpush2.msra.mxu0 0.0
  %1881 = vmatprep.subr.mxu0 0.0
  %1882 = vmatpush2.msra.mxu0 0.0
  %1883 = vmatprep.subr.mxu0 0.0
  %1884 = vmatpush2.msra.mxu0 0.0
  %1885 = vmatprep.subr.mxu0 0.0
  %1886 = vmatpush2.msra.mxu0 0.0
  %1887 = vmatprep.subr.mxu0 0.0
  %1888 = vmatpush2.msra.mxu0 0.0
  %1889 = vmatprep.subr.mxu0 0.0
  %1890 = vmatpush2.msra.mxu0 0.0
  %1891 = vmatprep.subr.mxu0 0.0
  %1892 = vmatpush2.msra.mxu0 0.0
  %1893 = vmatprep.subr.mxu0 0.0
  %1894 = vmatpush2.msra.mxu0 0.0
  %1895 = vmatprep.mubr.f32.mxu0 0.0
  %1896 = vmatmul.mubr.f32.gmra.mxu0 %v1826
  %v1897 = vpop.f32.mrf.mxu0
  %v1898 = vadd.f32 0.0, %v1897
  %v1899 = vpop.f32.mrf.mxu0
  %1900 = vmatprep.mubr.f32.mxu0 0.0
  %1901 = vmatmul.mubr.f32.gmra.mxu0 %v1829
  %v1902 = vpop.f32.mrf.mxu0
  %v1903 = vadd.f32 0.0, %v1902
  %v1904 = vpop.f32.mrf.mxu0
  %1905 = vdwg.mxu0
  %1906 = vrot.lane.b32.xlu0 %v1311, 32
  %v1907 = vpop.permute.xlu0 %1906
  %v1910 = vsel %vm123, %v1898, 0
  %v1913 = vsel %vm123, %v1903, 0
  %1915 = vmatprep.subr.mxu0 0.0
  %1916 = vmatpush1.msra.mxu0 0.0
  %1917 = vmatprep.subr.mxu0 0.0
  %1918 = vmatpush1.msra.mxu0 0.0
  %1919 = vmatprep.subr.mxu0 0.0
  %1920 = vmatpush1.msra.mxu0 0.0
  %1921 = vmatprep.subr.mxu0 0.0
  %1922 = vmatpush1.msra.mxu0 0.0
  %1923 = vmatprep.subr.mxu0 0.0
  %1924 = vmatpush1.msra.mxu0 0.0
  %1925 = vmatprep.subr.mxu0 0.0
  %1926 = vmatpush1.msra.mxu0 0.0
  %1927 = vmatprep.subr.mxu0 0.0
  %1928 = vmatpush1.msra.mxu0 0.0
  %1929 = vmatprep.subr.mxu0 0.0
  %1930 = vmatpush1.msra.mxu0 0.0
  %1931 = vmatprep.subr.mxu0 0.0
  %1932 = vmatpush1.msra.mxu0 0.0
  %1933 = vmatprep.subr.mxu0 0.0
  %1934 = vmatpush1.msra.mxu0 0.0
  %1935 = vmatprep.subr.mxu0 0.0
  %1936 = vmatpush1.msra.mxu0 0.0
  %1937 = vmatprep.subr.mxu0 0.0
  %1938 = vmatpush1.msra.mxu0 0.0
  %1939 = vmatprep.subr.mxu0 0.0
  %1940 = vmatpush1.msra.mxu0 0.0
  %1941 = vmatprep.subr.mxu0 0.0
  %1942 = vmatpush1.msra.mxu0 0.0
  %1943 = vmatprep.subr.mxu0 0.0
  %1944 = vmatpush1.msra.mxu0 0.0
  %1945 = vmatprep.subr.mxu0 0.0
  %1946 = vmatpush1.msra.mxu0 %v1907
  %1947 = vmatprep.subr.mxu0 0.0
  %1948 = vmatpush2.msra.mxu0 0.0
  %1949 = vmatprep.subr.mxu0 0.0
  %1950 = vmatpush2.msra.mxu0 0.0
  %1951 = vmatprep.subr.mxu0 0.0
  %1952 = vmatpush2.msra.mxu0 0.0
  %1953 = vmatprep.subr.mxu0 0.0
  %1954 = vmatpush2.msra.mxu0 0.0
  %1955 = vmatprep.subr.mxu0 0.0
  %1956 = vmatpush2.msra.mxu0 0.0
  %1957 = vmatprep.subr.mxu0 0.0
  %1958 = vmatpush2.msra.mxu0 0.0
  %1959 = vmatprep.subr.mxu0 0.0
  %1960 = vmatpush2.msra.mxu0 0.0
  %1961 = vmatprep.subr.mxu0 0.0
  %1962 = vmatpush2.msra.mxu0 0.0
  %1963 = vmatprep.subr.mxu0 0.0
  %1964 = vmatpush2.msra.mxu0 0.0
  %1965 = vmatprep.subr.mxu0 0.0
  %1966 = vmatpush2.msra.mxu0 0.0
  %1967 = vmatprep.subr.mxu0 0.0
  %1968 = vmatpush2.msra.mxu0 0.0
  %1969 = vmatprep.subr.mxu0 0.0
  %1970 = vmatpush2.msra.mxu0 0.0
  %1971 = vmatprep.subr.mxu0 0.0
  %1972 = vmatpush2.msra.mxu0 0.0
  %1973 = vmatprep.subr.mxu0 0.0
  %1974 = vmatpush2.msra.mxu0 0.0
  %1975 = vmatprep.subr.mxu0 0.0
  %1976 = vmatpush2.msra.mxu0 0.0
  %1977 = vmatprep.subr.mxu0 0.0
  %1978 = vmatpush2.msra.mxu0 0.0
  %1979 = vmatprep.mubr.f32.mxu0 0.0
  %1980 = vmatmul.mubr.f32.gmra.mxu0 %v1910
  %v1981 = vpop.f32.mrf.mxu0
  %v1982 = vadd.f32 0.0, %v1981
  %v1983 = vpop.f32.mrf.mxu0
  %1984 = vmatprep.mubr.f32.mxu0 0.0
  %1985 = vmatmul.mubr.f32.gmra.mxu0 %v1913
  %v1986 = vpop.f32.mrf.mxu0
  %v1987 = vadd.f32 0.0, %v1986
  %v1988 = vpop.f32.mrf.mxu0
  %1989 = vdwg.mxu0
  %1990 = vrot.lane.b32.xlu0 %v1310, 32
  %v1991 = vpop.permute.xlu0 %1990
  %v1994 = vsel %vm123, %v1698, 0
  %v1997 = vsel %vm123, %v1703, 0
  %1999 = vmatprep.subr.mxu0 0.0
  %2000 = vmatpush1.msra.mxu0 0.0
  %2001 = vmatprep.subr.mxu0 0.0
  %2002 = vmatpush1.msra.mxu0 0.0
  %2003 = vmatprep.subr.mxu0 0.0
  %2004 = vmatpush1.msra.mxu0 0.0
  %2005 = vmatprep.subr.mxu0 0.0
  %2006 = vmatpush1.msra.mxu0 0.0
  %2007 = vmatprep.subr.mxu0 0.0
  %2008 = vmatpush1.msra.mxu0 0.0
  %2009 = vmatprep.subr.mxu0 0.0
  %2010 = vmatpush1.msra.mxu0 0.0
  %2011 = vmatprep.subr.mxu0 0.0
  %2012 = vmatpush1.msra.mxu0 0.0
  %2013 = vmatprep.subr.mxu0 0.0
  %2014 = vmatpush1.msra.mxu0 0.0
  %2015 = vmatprep.subr.mxu0 0.0
  %2016 = vmatpush1.msra.mxu0 0.0
  %2017 = vmatprep.subr.mxu0 0.0
  %2018 = vmatpush1.msra.mxu0 0.0
  %2019 = vmatprep.subr.mxu0 0.0
  %2020 = vmatpush1.msra.mxu0 0.0
  %2021 = vmatprep.subr.mxu0 0.0
  %2022 = vmatpush1.msra.mxu0 0.0
  %2023 = vmatprep.subr.mxu0 0.0
  %2024 = vmatpush1.msra.mxu0 0.0
  %2025 = vmatprep.subr.mxu0 0.0
  %2026 = vmatpush1.msra.mxu0 0.0
  %2027 = vmatprep.subr.mxu0 0.0
  %2028 = vmatpush1.msra.mxu0 0.0
  %2029 = vmatprep.subr.mxu0 0.0
  %2030 = vmatpush1.msra.mxu0 %v1991
  %2031 = vmatprep.subr.mxu0 0.0
  %2032 = vmatpush2.msra.mxu0 0.0
  %2033 = vmatprep.subr.mxu0 0.0
  %2034 = vmatpush2.msra.mxu0 0.0
  %2035 = vmatprep.subr.mxu0 0.0
  %2036 = vmatpush2.msra.mxu0 0.0
  %2037 = vmatprep.subr.mxu0 0.0
  %2038 = vmatpush2.msra.mxu0 0.0
  %2039 = vmatprep.subr.mxu0 0.0
  %2040 = vmatpush2.msra.mxu0 0.0
  %2041 = vmatprep.subr.mxu0 0.0
  %2042 = vmatpush2.msra.mxu0 0.0
  %2043 = vmatprep.subr.mxu0 0.0
  %2044 = vmatpush2.msra.mxu0 0.0
  %2045 = vmatprep.subr.mxu0 0.0
  %2046 = vmatpush2.msra.mxu0 0.0
  %2047 = vmatprep.subr.mxu0 0.0
  %2048 = vmatpush2.msra.mxu0 0.0
  %2049 = vmatprep.subr.mxu0 0.0
  %2050 = vmatpush2.msra.mxu0 0.0
  %2051 = vmatprep.subr.mxu0 0.0
  %2052 = vmatpush2.msra.mxu0 0.0
  %2053 = vmatprep.subr.mxu0 0.0
  %2054 = vmatpush2.msra.mxu0 0.0
  %2055 = vmatprep.subr.mxu0 0.0
  %2056 = vmatpush2.msra.mxu0 0.0
  %2057 = vmatprep.subr.mxu0 0.0
  %2058 = vmatpush2.msra.mxu0 0.0
  %2059 = vmatprep.subr.mxu0 0.0
  %2060 = vmatpush2.msra.mxu0 0.0
  %2061 = vmatprep.subr.mxu0 0.0
  %2062 = vmatpush2.msra.mxu0 0.0
  %2063 = vmatprep.mubr.f32.mxu0 0.0
  %2064 = vmatmul.mubr.f32.gmra.mxu0 %v1994
  %v2065 = vpop.f32.mrf.mxu0
  %v2066 = vadd.f32 %v1982, %v2065
  %v2067 = vpop.f32.mrf.mxu0
  %2068 = vmatprep.mubr.f32.mxu0 0.0
  %2069 = vmatmul.mubr.f32.gmra.mxu0 %v1997
  %v2070 = vpop.f32.mrf.mxu0
  %v2071 = vadd.f32 %v1987, %v2070
  %v2072 = vpop.f32.mrf.mxu0
  %2073 = vdwg.mxu0
  %2074 = vrot.lane.b32.xlu0 %v1399, 112
  %v2075 = vpop.permute.xlu0 %2074
  %2076 = vrot.lane.b32.xlu0 %v1400, 112
  %v2077 = vpop.permute.xlu0 %2076
  %2078 = vrot.lane.b32.xlu0 %v1494, 112
  %v2079 = vpop.permute.xlu0 %2078
  %2080 = vrot.lane.b32.xlu0 %v1499, 112
  %v2081 = vpop.permute.xlu0 %2080
  %v2082 = vsel %vm123, %v2075, 0
  %v2084 = vsel %vm123, %v2077, 0
  %v2086 = vsel %vm123, %v2079, 0
  %v2088 = vsel %vm123, %v2081, 0
  %2090 = vmatprep.subr.mxu0 0.0
  %2091 = vmatpush1.xpose.msra.mxu0 0.0
  %2092 = vmatprep.subr.mxu0 0.0
  %2093 = vmatpush1.xpose.msra.mxu0 0.0
  %2094 = vmatprep.subr.mxu0 0.0
  %2095 = vmatpush1.xpose.msra.mxu0 0.0
  %2096 = vmatprep.subr.mxu0 0.0
  %2097 = vmatpush1.xpose.msra.mxu0 0.0
  %2098 = vmatprep.subr.mxu0 0.0
  %2099 = vmatpush1.xpose.msra.mxu0 0.0
  %2100 = vmatprep.subr.mxu0 0.0
  %2101 = vmatpush1.xpose.msra.mxu0 0.0
  %2102 = vmatprep.subr.mxu0 0.0
  %2103 = vmatpush1.xpose.msra.mxu0 0.0
  %2104 = vmatprep.subr.mxu0 0.0
  %2105 = vmatpush1.xpose.msra.mxu0 0.0
  %2106 = vmatprep.subr.mxu0 0.0
  %2107 = vmatpush1.xpose.msra.mxu0 0.0
  %2108 = vmatprep.subr.mxu0 0.0
  %2109 = vmatpush1.xpose.msra.mxu0 0.0
  %2110 = vmatprep.subr.mxu0 0.0
  %2111 = vmatpush1.xpose.msra.mxu0 0.0
  %2112 = vmatprep.subr.mxu0 0.0
  %2113 = vmatpush1.xpose.msra.mxu0 0.0
  %2114 = vmatprep.subr.mxu0 0.0
  %2115 = vmatpush1.xpose.msra.mxu0 0.0
  %2116 = vmatprep.subr.mxu0 0.0
  %2117 = vmatpush1.xpose.msra.mxu0 0.0
  %2118 = vmatprep.subr.mxu0 0.0
  %2119 = vmatpush1.xpose.msra.mxu0 %v2088
  %2120 = vmatprep.subr.mxu0 0.0
  %2121 = vmatpush1.xpose.msra.mxu0 %v2086
  %2122 = vmatprep.subr.mxu0 0.0
  %2123 = vmatpush2.xpose.msra.mxu0 0.0
  %2124 = vmatprep.subr.mxu0 0.0
  %2125 = vmatpush2.xpose.msra.mxu0 0.0
  %2126 = vmatprep.subr.mxu0 0.0
  %2127 = vmatpush2.xpose.msra.mxu0 0.0
  %2128 = vmatprep.subr.mxu0 0.0
  %2129 = vmatpush2.xpose.msra.mxu0 0.0
  %2130 = vmatprep.subr.mxu0 0.0
  %2131 = vmatpush2.xpose.msra.mxu0 0.0
  %2132 = vmatprep.subr.mxu0 0.0
  %2133 = vmatpush2.xpose.msra.mxu0 0.0
  %2134 = vmatprep.subr.mxu0 0.0
  %2135 = vmatpush2.xpose.msra.mxu0 0.0
  %2136 = vmatprep.subr.mxu0 0.0
  %2137 = vmatpush2.xpose.msra.mxu0 0.0
  %2138 = vmatprep.subr.mxu0 0.0
  %2139 = vmatpush2.xpose.msra.mxu0 0.0
  %2140 = vmatprep.subr.mxu0 0.0
  %2141 = vmatpush2.xpose.msra.mxu0 0.0
  %2142 = vmatprep.subr.mxu0 0.0
  %2143 = vmatpush2.xpose.msra.mxu0 0.0
  %2144 = vmatprep.subr.mxu0 0.0
  %2145 = vmatpush2.xpose.msra.mxu0 0.0
  %2146 = vmatprep.subr.mxu0 0.0
  %2147 = vmatpush2.xpose.msra.mxu0 0.0
  %2148 = vmatprep.subr.mxu0 0.0
  %2149 = vmatpush2.xpose.msra.mxu0 0.0
  %2150 = vmatprep.subr.mxu0 0.0
  %2151 = vmatpush2.xpose.msra.mxu0 0.0
  %2152 = vmatprep.subr.mxu0 0.0
  %2153 = vmatpush2.xpose.msra.mxu0 0.0
  %2154 = vmatprep.mubr.f32.mxu0 0.0
  %2155 = vmatmul.mubr.f32.gmra.mxu0 %v2082
  %v2156 = vpop.f32.mrf.mxu0
  %v2157 = vadd.f32 %v1505, %v2156
  %v2158 = vpop.f32.mrf.mxu0
  %2159 = vmatprep.mubr.f32.mxu0 0.0
  %2160 = vmatmul.mubr.f32.gmra.mxu0 %v2084
  %v2161 = vpop.f32.mrf.mxu0
  %v2162 = vadd.f32 %v1507, %v2161
  %v2163 = vpop.f32.mrf.mxu0
  %2164 = vdwg.mxu0
  %v2165 = vsel %vm209, %v2157, -inf
  %2166 = vmax.xlane.f32.xlu0 %v2165
  %v2167 = vpop.xlane.xlu0 %2166
  %v2168 = vsel %vm209, %v2162, -inf
  %2169 = vmax.xlane.f32.xlu0 %v2168
  %v2170 = vpop.xlane.xlu0 %2169
  %v2171 = vsub.f32 %v2157, %v2167
  %v2172 = vsub.f32 %v2162, %v2170
  %v2173 = vmul.f32 %v2171, 1.442695
  %v2174 = vpow.pop %v2173
  %v2175 = vmul.f32 %v2172, 1.442695
  %v2176 = vpow.pop %v2175
  %v2177 = vsel %vm209, %v2174, 0.0
  %2178 = vadd.xlane.f32.xlu0 %v2177
  %v2179 = vpop.xlane.xlu0 %2178
  %v2180 = vsel %vm209, %v2176, 0.0
  %2181 = vadd.xlane.f32.xlu0 %v2180
  %v2182 = vpop.xlane.xlu0 %2181
  %v2183 = vrcp.pop %v2179
  %v2184 = vrcp.pop %v2182
  %v2185 = vmul.f32 %v2174, %v2183
  %v2186 = vmul.f32 %v2176, %v2184
  %2187 = vrot.lane.b32.xlu0 %v1494, 80
  %v2188 = vpop.permute.xlu0 %2187
  %2189 = vrot.lane.b32.xlu0 %v1499, 80
  %v2190 = vpop.permute.xlu0 %2189
  %v2194 = vsel %vm209, %v2185, 0
  %v2197 = vsel %vm209, %v2186, 0
  %2199 = vmatprep.subr.mxu0 0.0
  %2200 = vmatpush1.msra.mxu0 0.0
  %2201 = vmatprep.subr.mxu0 0.0
  %2202 = vmatpush1.msra.mxu0 0.0
  %2203 = vmatprep.subr.mxu0 0.0
  %2204 = vmatpush1.msra.mxu0 0.0
  %2205 = vmatprep.subr.mxu0 0.0
  %2206 = vmatpush1.msra.mxu0 0.0
  %2207 = vmatprep.subr.mxu0 0.0
  %2208 = vmatpush1.msra.mxu0 0.0
  %2209 = vmatprep.subr.mxu0 0.0
  %2210 = vmatpush1.msra.mxu0 0.0
  %2211 = vmatprep.subr.mxu0 0.0
  %2212 = vmatpush1.msra.mxu0 0.0
  %2213 = vmatprep.subr.mxu0 0.0
  %2214 = vmatpush1.msra.mxu0 0.0
  %2215 = vmatprep.subr.mxu0 0.0
  %2216 = vmatpush1.msra.mxu0 0.0
  %2217 = vmatprep.subr.mxu0 0.0
  %2218 = vmatpush1.msra.mxu0 0.0
  %2219 = vmatprep.subr.mxu0 0.0
  %2220 = vmatpush1.msra.mxu0 0.0
  %2221 = vmatprep.subr.mxu0 0.0
  %2222 = vmatpush1.msra.mxu0 0.0
  %2223 = vmatprep.subr.mxu0 0.0
  %2224 = vmatpush1.msra.mxu0 0.0
  %2225 = vmatprep.subr.mxu0 0.0
  %2226 = vmatpush1.msra.mxu0 0.0
  %2227 = vmatprep.subr.mxu0 0.0
  %2228 = vmatpush1.msra.mxu0 %v2190
  %2229 = vmatprep.subr.mxu0 0.0
  %2230 = vmatpush1.msra.mxu0 %v2188
  %2231 = vmatprep.subr.mxu0 0.0
  %2232 = vmatpush2.msra.mxu0 0.0
  %2233 = vmatprep.subr.mxu0 0.0
  %2234 = vmatpush2.msra.mxu0 0.0
  %2235 = vmatprep.subr.mxu0 0.0
  %2236 = vmatpush2.msra.mxu0 0.0
  %2237 = vmatprep.subr.mxu0 0.0
  %2238 = vmatpush2.msra.mxu0 0.0
  %2239 = vmatprep.subr.mxu0 0.0
  %2240 = vmatpush2.msra.mxu0 0.0
  %2241 = vmatprep.subr.mxu0 0.0
  %2242 = vmatpush2.msra.mxu0 0.0
  %2243 = vmatprep.subr.mxu0 0.0
  %2244 = vmatpush2.msra.mxu0 0.0
  %2245 = vmatprep.subr.mxu0 0.0
  %2246 = vmatpush2.msra.mxu0 0.0
  %2247 = vmatprep.subr.mxu0 0.0
  %2248 = vmatpush2.msra.mxu0 0.0
  %2249 = vmatprep.subr.mxu0 0.0
  %2250 = vmatpush2.msra.mxu0 0.0
  %2251 = vmatprep.subr.mxu0 0.0
  %2252 = vmatpush2.msra.mxu0 0.0
  %2253 = vmatprep.subr.mxu0 0.0
  %2254 = vmatpush2.msra.mxu0 0.0
  %2255 = vmatprep.subr.mxu0 0.0
  %2256 = vmatpush2.msra.mxu0 0.0
  %2257 = vmatprep.subr.mxu0 0.0
  %2258 = vmatpush2.msra.mxu0 0.0
  %2259 = vmatprep.subr.mxu0 0.0
  %2260 = vmatpush2.msra.mxu0 0.0
  %2261 = vmatprep.subr.mxu0 0.0
  %2262 = vmatpush2.msra.mxu0 0.0
  %2263 = vmatprep.mubr.f32.mxu0 0.0
  %2264 = vmatmul.mubr.f32.gmra.mxu0 %v2194
  %v2265 = vpop.f32.mrf.mxu0
  %v2266 = vadd.f32 0.0, %v2265
  %v2267 = vpop.f32.mrf.mxu0
  %2268 = vmatprep.mubr.f32.mxu0 0.0
  %2269 = vmatmul.mubr.f32.gmra.mxu0 %v2197
  %v2270 = vpop.f32.mrf.mxu0
  %v2271 = vadd.f32 0.0, %v2270
  %v2272 = vpop.f32.mrf.mxu0
  %2273 = vdwg.mxu0
  %2274 = vrot.lane.b32.xlu0 %v1312, 32
  %v2275 = vpop.permute.xlu0 %2274
  %v2278 = vsel %vm123, %v2266, 0
  %v2281 = vsel %vm123, %v2271, 0
  %2283 = vmatprep.subr.mxu0 0.0
  %2284 = vmatpush1.msra.mxu0 0.0
  %2285 = vmatprep.subr.mxu0 0.0
  %2286 = vmatpush1.msra.mxu0 0.0
  %2287 = vmatprep.subr.mxu0 0.0
  %2288 = vmatpush1.msra.mxu0 0.0
  %2289 = vmatprep.subr.mxu0 0.0
  %2290 = vmatpush1.msra.mxu0 0.0
  %2291 = vmatprep.subr.mxu0 0.0
  %2292 = vmatpush1.msra.mxu0 0.0
  %2293 = vmatprep.subr.mxu0 0.0
  %2294 = vmatpush1.msra.mxu0 0.0
  %2295 = vmatprep.subr.mxu0 0.0
  %2296 = vmatpush1.msra.mxu0 0.0
  %2297 = vmatprep.subr.mxu0 0.0
  %2298 = vmatpush1.msra.mxu0 0.0
  %2299 = vmatprep.subr.mxu0 0.0
  %2300 = vmatpush1.msra.mxu0 0.0
  %2301 = vmatprep.subr.mxu0 0.0
  %2302 = vmatpush1.msra.mxu0 0.0
  %2303 = vmatprep.subr.mxu0 0.0
  %2304 = vmatpush1.msra.mxu0 0.0
  %2305 = vmatprep.subr.mxu0 0.0
  %2306 = vmatpush1.msra.mxu0 0.0
  %2307 = vmatprep.subr.mxu0 0.0
  %2308 = vmatpush1.msra.mxu0 0.0
  %2309 = vmatprep.subr.mxu0 0.0
  %2310 = vmatpush1.msra.mxu0 0.0
  %2311 = vmatprep.subr.mxu0 0.0
  %2312 = vmatpush1.msra.mxu0 0.0
  %2313 = vmatprep.subr.mxu0 0.0
  %2314 = vmatpush1.msra.mxu0 %v2275
  %2315 = vmatprep.subr.mxu0 0.0
  %2316 = vmatpush2.msra.mxu0 0.0
  %2317 = vmatprep.subr.mxu0 0.0
  %2318 = vmatpush2.msra.mxu0 0.0
  %2319 = vmatprep.subr.mxu0 0.0
  %2320 = vmatpush2.msra.mxu0 0.0
  %2321 = vmatprep.subr.mxu0 0.0
  %2322 = vmatpush2.msra.mxu0 0.0
  %2323 = vmatprep.subr.mxu0 0.0
  %2324 = vmatpush2.msra.mxu0 0.0
  %2325 = vmatprep.subr.mxu0 0.0
  %2326 = vmatpush2.msra.mxu0 0.0
  %2327 = vmatprep.subr.mxu0 0.0
  %2328 = vmatpush2.msra.mxu0 0.0
  %2329 = vmatprep.subr.mxu0 0.0
  %2330 = vmatpush2.msra.mxu0 0.0
  %2331 = vmatprep.subr.mxu0 0.0
  %2332 = vmatpush2.msra.mxu0 0.0
  %2333 = vmatprep.subr.mxu0 0.0
  %2334 = vmatpush2.msra.mxu0 0.0
  %2335 = vmatprep.subr.mxu0 0.0
  %2336 = vmatpush2.msra.mxu0 0.0
  %2337 = vmatprep.subr.mxu0 0.0
  %2338 = vmatpush2.msra.mxu0 0.0
  %2339 = vmatprep.subr.mxu0 0.0
  %2340 = vmatpush2.msra.mxu0 0.0
  %2341 = vmatprep.subr.mxu0 0.0
  %2342 = vmatpush2.msra.mxu0 0.0
  %2343 = vmatprep.subr.mxu0 0.0
  %2344 = vmatpush2.msra.mxu0 0.0
  %2345 = vmatprep.subr.mxu0 0.0
  %2346 = vmatpush2.msra.mxu0 0.0
  %2347 = vmatprep.mubr.f32.mxu0 0.0
  %2348 = vmatmul.mubr.f32.gmra.mxu0 %v2278
  %v2349 = vpop.f32.mrf.mxu0
  %v2350 = vadd.f32 0.0, %v2349
  %v2351 = vpop.f32.mrf.mxu0
  %2352 = vmatprep.mubr.f32.mxu0 0.0
  %2353 = vmatmul.mubr.f32.gmra.mxu0 %v2281
  %v2354 = vpop.f32.mrf.mxu0
  %v2355 = vadd.f32 0.0, %v2354
  %v2356 = vpop.f32.mrf.mxu0
  %2357 = vdwg.mxu0
  %v2358 = vadd.f32 %v2066, %v2350
  %v2359 = vadd.f32 %v2071, %v2355
  %2360 = vrot.lane.b32.xlu0 %v1399, 104
  %v2361 = vpop.permute.xlu0 %2360
  %2362 = vrot.lane.b32.xlu0 %v1400, 104
  %v2363 = vpop.permute.xlu0 %2362
  %2364 = vrot.lane.b32.xlu0 %v1494, 104
  %v2365 = vpop.permute.xlu0 %2364
  %2366 = vrot.lane.b32.xlu0 %v1499, 104
  %v2367 = vpop.permute.xlu0 %2366
  %v2368 = vsel %vm123, %v2361, 0
  %v2370 = vsel %vm123, %v2363, 0
  %v2372 = vsel %vm123, %v2365, 0
  %v2374 = vsel %vm123, %v2367, 0
  %2376 = vmatprep.subr.mxu0 0.0
  %2377 = vmatpush1.xpose.msra.mxu0 0.0
  %2378 = vmatprep.subr.mxu0 0.0
  %2379 = vmatpush1.xpose.msra.mxu0 0.0
  %2380 = vmatprep.subr.mxu0 0.0
  %2381 = vmatpush1.xpose.msra.mxu0 0.0
  %2382 = vmatprep.subr.mxu0 0.0
  %2383 = vmatpush1.xpose.msra.mxu0 0.0
  %2384 = vmatprep.subr.mxu0 0.0
  %2385 = vmatpush1.xpose.msra.mxu0 0.0
  %2386 = vmatprep.subr.mxu0 0.0
  %2387 = vmatpush1.xpose.msra.mxu0 0.0
  %2388 = vmatprep.subr.mxu0 0.0
  %2389 = vmatpush1.xpose.msra.mxu0 0.0
  %2390 = vmatprep.subr.mxu0 0.0
  %2391 = vmatpush1.xpose.msra.mxu0 0.0
  %2392 = vmatprep.subr.mxu0 0.0
  %2393 = vmatpush1.xpose.msra.mxu0 0.0
  %2394 = vmatprep.subr.mxu0 0.0
  %2395 = vmatpush1.xpose.msra.mxu0 0.0
  %2396 = vmatprep.subr.mxu0 0.0
  %2397 = vmatpush1.xpose.msra.mxu0 0.0
  %2398 = vmatprep.subr.mxu0 0.0
  %2399 = vmatpush1.xpose.msra.mxu0 0.0
  %2400 = vmatprep.subr.mxu0 0.0
  %2401 = vmatpush1.xpose.msra.mxu0 0.0
  %2402 = vmatprep.subr.mxu0 0.0
  %2403 = vmatpush1.xpose.msra.mxu0 0.0
  %2404 = vmatprep.subr.mxu0 0.0
  %2405 = vmatpush1.xpose.msra.mxu0 %v2374
  %2406 = vmatprep.subr.mxu0 0.0
  %2407 = vmatpush1.xpose.msra.mxu0 %v2372
  %2408 = vmatprep.subr.mxu0 0.0
  %2409 = vmatpush2.xpose.msra.mxu0 0.0
  %2410 = vmatprep.subr.mxu0 0.0
  %2411 = vmatpush2.xpose.msra.mxu0 0.0
  %2412 = vmatprep.subr.mxu0 0.0
  %2413 = vmatpush2.xpose.msra.mxu0 0.0
  %2414 = vmatprep.subr.mxu0 0.0
  %2415 = vmatpush2.xpose.msra.mxu0 0.0
  %2416 = vmatprep.subr.mxu0 0.0
  %2417 = vmatpush2.xpose.msra.mxu0 0.0
  %2418 = vmatprep.subr.mxu0 0.0
  %2419 = vmatpush2.xpose.msra.mxu0 0.0
  %2420 = vmatprep.subr.mxu0 0.0
  %2421 = vmatpush2.xpose.msra.mxu0 0.0
  %2422 = vmatprep.subr.mxu0 0.0
  %2423 = vmatpush2.xpose.msra.mxu0 0.0
  %2424 = vmatprep.subr.mxu0 0.0
  %2425 = vmatpush2.xpose.msra.mxu0 0.0
  %2426 = vmatprep.subr.mxu0 0.0
  %2427 = vmatpush2.xpose.msra.mxu0 0.0
  %2428 = vmatprep.subr.mxu0 0.0
  %2429 = vmatpush2.xpose.msra.mxu0 0.0
  %2430 = vmatprep.subr.mxu0 0.0
  %2431 = vmatpush2.xpose.msra.mxu0 0.0
  %2432 = vmatprep.subr.mxu0 0.0
  %2433 = vmatpush2.xpose.msra.mxu0 0.0
  %2434 = vmatprep.subr.mxu0 0.0
  %2435 = vmatpush2.xpose.msra.mxu0 0.0
  %2436 = vmatprep.subr.mxu0 0.0
  %2437 = vmatpush2.xpose.msra.mxu0 0.0
  %2438 = vmatprep.subr.mxu0 0.0
  %2439 = vmatpush2.xpose.msra.mxu0 0.0
  %2440 = vmatprep.mubr.f32.mxu0 0.0
  %2441 = vmatmul.mubr.f32.gmra.mxu0 %v2368
  %v2442 = vpop.f32.mrf.mxu0
  %v2443 = vadd.f32 %v1505, %v2442
  %v2444 = vpop.f32.mrf.mxu0
  %2445 = vmatprep.mubr.f32.mxu0 0.0
  %2446 = vmatmul.mubr.f32.gmra.mxu0 %v2370
  %v2447 = vpop.f32.mrf.mxu0
  %v2448 = vadd.f32 %v1507, %v2447
  %v2449 = vpop.f32.mrf.mxu0
  %2450 = vdwg.mxu0
  %v2451 = vsel %vm209, %v2443, -inf
  %2452 = vmax.xlane.f32.xlu0 %v2451
  %v2453 = vpop.xlane.xlu0 %2452
  %v2454 = vsel %vm209, %v2448, -inf
  %2455 = vmax.xlane.f32.xlu0 %v2454
  %v2456 = vpop.xlane.xlu0 %2455
  %v2457 = vsub.f32 %v2443, %v2453
  %v2458 = vsub.f32 %v2448, %v2456
  %v2459 = vmul.f32 %v2457, 1.442695
  %v2460 = vpow.pop %v2459
  %v2461 = vmul.f32 %v2458, 1.442695
  %v2462 = vpow.pop %v2461
  %v2463 = vsel %vm209, %v2460, 0.0
  %2464 = vadd.xlane.f32.xlu0 %v2463
  %v2465 = vpop.xlane.xlu0 %2464
  %v2466 = vsel %vm209, %v2462, 0.0
  %2467 = vadd.xlane.f32.xlu0 %v2466
  %v2468 = vpop.xlane.xlu0 %2467
  %v2469 = vrcp.pop %v2465
  %v2470 = vrcp.pop %v2468
  %v2471 = vmul.f32 %v2460, %v2469
  %v2472 = vmul.f32 %v2462, %v2470
  %2473 = vrot.lane.b32.xlu0 %v1494, 72
  %v2474 = vpop.permute.xlu0 %2473
  %2475 = vrot.lane.b32.xlu0 %v1499, 72
  %v2476 = vpop.permute.xlu0 %2475
  %v2480 = vsel %vm209, %v2471, 0
  %v2483 = vsel %vm209, %v2472, 0
  %2485 = vmatprep.subr.mxu0 0.0
  %2486 = vmatpush1.msra.mxu0 0.0
  %2487 = vmatprep.subr.mxu0 0.0
  %2488 = vmatpush1.msra.mxu0 0.0
  %2489 = vmatprep.subr.mxu0 0.0
  %2490 = vmatpush1.msra.mxu0 0.0
  %2491 = vmatprep.subr.mxu0 0.0
  %2492 = vmatpush1.msra.mxu0 0.0
  %2493 = vmatprep.subr.mxu0 0.0
  %2494 = vmatpush1.msra.mxu0 0.0
  %2495 = vmatprep.subr.mxu0 0.0
  %2496 = vmatpush1.msra.mxu0 0.0
  %2497 = vmatprep.subr.mxu0 0.0
  %2498 = vmatpush1.msra.mxu0 0.0
  %2499 = vmatprep.subr.mxu0 0.0
  %2500 = vmatpush1.msra.mxu0 0.0
  %2501 = vmatprep.subr.mxu0 0.0
  %2502 = vmatpush1.msra.mxu0 0.0
  %2503 = vmatprep.subr.mxu0 0.0
  %2504 = vmatpush1.msra.mxu0 0.0
  %2505 = vmatprep.subr.mxu0 0.0
  %2506 = vmatpush1.msra.mxu0 0.0
  %2507 = vmatprep.subr.mxu0 0.0
  %2508 = vmatpush1.msra.mxu0 0.0
  %2509 = vmatprep.subr.mxu0 0.0
  %2510 = vmatpush1.msra.mxu0 0.0
  %2511 = vmatprep.subr.mxu0 0.0
  %2512 = vmatpush1.msra.mxu0 0.0
  %2513 = vmatprep.subr.mxu0 0.0
  %2514 = vmatpush1.msra.mxu0 %v2476
  %2515 = vmatprep.subr.mxu0 0.0
  %2516 = vmatpush1.msra.mxu0 %v2474
  %2517 = vmatprep.subr.mxu0 0.0
  %2518 = vmatpush2.msra.mxu0 0.0
  %2519 = vmatprep.subr.mxu0 0.0
  %2520 = vmatpush2.msra.mxu0 0.0
  %2521 = vmatprep.subr.mxu0 0.0
  %2522 = vmatpush2.msra.mxu0 0.0
  %2523 = vmatprep.subr.mxu0 0.0
  %2524 = vmatpush2.msra.mxu0 0.0
  %2525 = vmatprep.subr.mxu0 0.0
  %2526 = vmatpush2.msra.mxu0 0.0
  %2527 = vmatprep.subr.mxu0 0.0
  %2528 = vmatpush2.msra.mxu0 0.0
  %2529 = vmatprep.subr.mxu0 0.0
  %2530 = vmatpush2.msra.mxu0 0.0
  %2531 = vmatprep.subr.mxu0 0.0
  %2532 = vmatpush2.msra.mxu0 0.0
  %2533 = vmatprep.subr.mxu0 0.0
  %2534 = vmatpush2.msra.mxu0 0.0
  %2535 = vmatprep.subr.mxu0 0.0
  %2536 = vmatpush2.msra.mxu0 0.0
  %2537 = vmatprep.subr.mxu0 0.0
  %2538 = vmatpush2.msra.mxu0 0.0
  %2539 = vmatprep.subr.mxu0 0.0
  %2540 = vmatpush2.msra.mxu0 0.0
  %2541 = vmatprep.subr.mxu0 0.0
  %2542 = vmatpush2.msra.mxu0 0.0
  %2543 = vmatprep.subr.mxu0 0.0
  %2544 = vmatpush2.msra.mxu0 0.0
  %2545 = vmatprep.subr.mxu0 0.0
  %2546 = vmatpush2.msra.mxu0 0.0
  %2547 = vmatprep.subr.mxu0 0.0
  %2548 = vmatpush2.msra.mxu0 0.0
  %2549 = vmatprep.mubr.f32.mxu0 0.0
  %2550 = vmatmul.mubr.f32.gmra.mxu0 %v2480
  %v2551 = vpop.f32.mrf.mxu0
  %v2552 = vadd.f32 0.0, %v2551
  %v2553 = vpop.f32.mrf.mxu0
  %2554 = vmatprep.mubr.f32.mxu0 0.0
  %2555 = vmatmul.mubr.f32.gmra.mxu0 %v2483
  %v2556 = vpop.f32.mrf.mxu0
  %v2557 = vadd.f32 0.0, %v2556
  %v2558 = vpop.f32.mrf.mxu0
  %2559 = vdwg.mxu0
  %2560 = vrot.lane.b32.xlu0 %v1313, 32
  %v2561 = vpop.permute.xlu0 %2560
  %v2564 = vsel %vm123, %v2552, 0
  %v2567 = vsel %vm123, %v2557, 0
  %2569 = vmatprep.subr.mxu0 0.0
  %2570 = vmatpush1.msra.mxu0 0.0
  %2571 = vmatprep.subr.mxu0 0.0
  %2572 = vmatpush1.msra.mxu0 0.0
  %2573 = vmatprep.subr.mxu0 0.0
  %2574 = vmatpush1.msra.mxu0 0.0
  %2575 = vmatprep.subr.mxu0 0.0
  %2576 = vmatpush1.msra.mxu0 0.0
  %2577 = vmatprep.subr.mxu0 0.0
  %2578 = vmatpush1.msra.mxu0 0.0
  %2579 = vmatprep.subr.mxu0 0.0
  %2580 = vmatpush1.msra.mxu0 0.0
  %2581 = vmatprep.subr.mxu0 0.0
  %2582 = vmatpush1.msra.mxu0 0.0
  %2583 = vmatprep.subr.mxu0 0.0
  %2584 = vmatpush1.msra.mxu0 0.0
  %2585 = vmatprep.subr.mxu0 0.0
  %2586 = vmatpush1.msra.mxu0 0.0
  %2587 = vmatprep.subr.mxu0 0.0
  %2588 = vmatpush1.msra.mxu0 0.0
  %2589 = vmatprep.subr.mxu0 0.0
  %2590 = vmatpush1.msra.mxu0 0.0
  %2591 = vmatprep.subr.mxu0 0.0
  %2592 = vmatpush1.msra.mxu0 0.0
  %2593 = vmatprep.subr.mxu0 0.0
  %2594 = vmatpush1.msra.mxu0 0.0
  %2595 = vmatprep.subr.mxu0 0.0
  %2596 = vmatpush1.msra.mxu0 0.0
  %2597 = vmatprep.subr.mxu0 0.0
  %2598 = vmatpush1.msra.mxu0 0.0
  %2599 = vmatprep.subr.mxu0 0.0
  %2600 = vmatpush1.msra.mxu0 %v2561
  %2601 = vmatprep.subr.mxu0 0.0
  %2602 = vmatpush2.msra.mxu0 0.0
  %2603 = vmatprep.subr.mxu0 0.0
  %2604 = vmatpush2.msra.mxu0 0.0
  %2605 = vmatprep.subr.mxu0 0.0
  %2606 = vmatpush2.msra.mxu0 0.0
  %2607 = vmatprep.subr.mxu0 0.0
  %2608 = vmatpush2.msra.mxu0 0.0
  %2609 = vmatprep.subr.mxu0 0.0
  %2610 = vmatpush2.msra.mxu0 0.0
  %2611 = vmatprep.subr.mxu0 0.0
  %2612 = vmatpush2.msra.mxu0 0.0
  %2613 = vmatprep.subr.mxu0 0.0
  %2614 = vmatpush2.msra.mxu0 0.0
  %2615 = vmatprep.subr.mxu0 0.0
  %2616 = vmatpush2.msra.mxu0 0.0
  %2617 = vmatprep.subr.mxu0 0.0
  %2618 = vmatpush2.msra.mxu0 0.0
  %2619 = vmatprep.subr.mxu0 0.0
  %2620 = vmatpush2.msra.mxu0 0.0
  %2621 = vmatprep.subr.mxu0 0.0
  %2622 = vmatpush2.msra.mxu0 0.0
  %2623 = vmatprep.subr.mxu0 0.0
  %2624 = vmatpush2.msra.mxu0 0.0
  %2625 = vmatprep.subr.mxu0 0.0
  %2626 = vmatpush2.msra.mxu0 0.0
  %2627 = vmatprep.subr.mxu0 0.0
  %2628 = vmatpush2.msra.mxu0 0.0
  %2629 = vmatprep.subr.mxu0 0.0
  %2630 = vmatpush2.msra.mxu0 0.0
  %2631 = vmatprep.subr.mxu0 0.0
  %2632 = vmatpush2.msra.mxu0 0.0
  %2633 = vmatprep.mubr.f32.mxu0 0.0
  %2634 = vmatmul.mubr.f32.gmra.mxu0 %v2564
  %v2635 = vpop.f32.mrf.mxu0
  %v2636 = vadd.f32 0.0, %v2635
  %v2637 = vpop.f32.mrf.mxu0
  %2638 = vmatprep.mubr.f32.mxu0 0.0
  %2639 = vmatmul.mubr.f32.gmra.mxu0 %v2567
  %v2640 = vpop.f32.mrf.mxu0
  %v2641 = vadd.f32 0.0, %v2640
  %v2642 = vpop.f32.mrf.mxu0
  %2643 = vdwg.mxu0
  %v2644 = vadd.f32 %v2358, %v2636
  %v2645 = vadd.f32 %v2359, %v2641
  %v2646 = vadd.f32 %v1308, %v2644
  %v2647 = vadd.f32 %v1309, %v2645
  %v2648 = vlaneseq
  %v2649 = vshrl.u32 %v2648, 7
  %v2650 = vsub.s32 6, %v2649
  %v2651 = vrot.slane %v21, %v2650
  %v2652 = vadd.f32 %v2646, %v2651
  %v2653 = vadd.f32 %v2647, %v2651
  %v2654 = vsel %vm33, %v2652, 0.0
  %2655 = vadd.xlane.f32.xlu0 %v2654
  %v2656 = vpop.xlane.xlu0 %2655
  %v2657 = vsel %vm33, %v2653, 0.0
  %2658 = vadd.xlane.f32.xlu0 %v2657
  %v2659 = vpop.xlane.xlu0 %2658
  %v2660 = vmul.f32 %v2656, %v1277
  %v2661 = vmul.f32 %v2659, %v1277
  %v2662 = vsub.f32 %v2652, %v2660
  %v2663 = vsub.f32 %v2653, %v2661
  %v2664 = vmul.f32 %v2662, %v2662
  %v2665 = vmul.f32 %v2663, %v2663
  %v2666 = vsel %vm33, %v2664, 0.0
  %2667 = vadd.xlane.f32.xlu0 %v2666
  %v2668 = vpop.xlane.xlu0 %2667
  %v2669 = vsel %vm33, %v2665, 0.0
  %2670 = vadd.xlane.f32.xlu0 %v2669
  %v2671 = vpop.xlane.xlu0 %2670
  %v2672 = vmul.f32 %v2668, %v1277
  %v2673 = vmul.f32 %v2671, %v1277
  %v2674 = vadd.f32 %v2672, 1e-05
  %v2675 = vadd.f32 %v2673, 1e-05
  %v2676 = vrsqrt.pop %v2674
  %v2677 = vrsqrt.pop %v2675
  %v2678 = vmul.f32 %v2662, %v2676
  %v2679 = vmul.f32 %v2663, %v2677
  %v2680 = vlaneseq
  %v2681 = vshrl.u32 %v2680, 7
  %v2682 = vsub.s32 7, %v2681
  %v2683 = vrot.slane %v21, %v2682
  %v2684 = vmul.f32 %v2678, %v2683
  %v2685 = vmul.f32 %v2679, %v2683
  %v2686 = vlaneseq
  %v2687 = vshrl.u32 %v2686, 7
  %v2688 = vsub.s32 0, %v2687
  %v2689 = vrot.slane %v23, %v2688
  %v2690 = vadd.f32 %v2684, %v2689
  %v2691 = vadd.f32 %v2685, %v2689
  %v2692 = vld [vmem:[%s2 + $0x10] sm:$0xff]
  %v2693 = vld [vmem:[%s2 + $0x28] sm:$0xff]
  %v2694 = vld [vmem:[%s2 + $0x40] sm:$0xff]
  %v2695 = vld [vmem:[%s2 + $0x58] sm:$0xff]
  %v2696 = vlaneseq
  %v2697 = vshrl.u32 %v2696, 7
  %v2698 = vsub.s32 1, %v2697
  %v2699 = vrot.slane %v23, %v2698
  %v2701 = vsel %vm33, %v2690, 0
  %v2704 = vsel %vm33, %v2691, 0
  %2706 = vmatprep.subr.mxu0 0.0
  %2707 = vmatpush1.msra.mxu0 0.0
  %2708 = vmatprep.subr.mxu0 0.0
  %2709 = vmatpush1.msra.mxu0 0.0
  %2710 = vmatprep.subr.mxu0 0.0
  %2711 = vmatpush1.msra.mxu0 0.0
  %2712 = vmatprep.subr.mxu0 0.0
  %2713 = vmatpush1.msra.mxu0 0.0
  %2714 = vmatprep.subr.mxu0 0.0
  %2715 = vmatpush1.msra.mxu0 0.0
  %2716 = vmatprep.subr.mxu0 0.0
  %2717 = vmatpush1.msra.mxu0 0.0
  %2718 = vmatprep.subr.mxu0 0.0
  %2719 = vmatpush1.msra.mxu0 0.0
  %2720 = vmatprep.subr.mxu0 0.0
  %2721 = vmatpush1.msra.mxu0 0.0
  %2722 = vmatprep.subr.mxu0 0.0
  %2723 = vmatpush1.msra.mxu0 0.0
  %2724 = vmatprep.subr.mxu0 0.0
  %2725 = vmatpush1.msra.mxu0 0.0
  %2726 = vmatprep.subr.mxu0 0.0
  %2727 = vmatpush1.msra.mxu0 0.0
  %2728 = vmatprep.subr.mxu0 0.0
  %2729 = vmatpush1.msra.mxu0 0.0
  %2730 = vmatprep.subr.mxu0 0.0
  %2731 = vmatpush1.msra.mxu0 %v2695
  %2732 = vmatprep.subr.mxu0 0.0
  %2733 = vmatpush1.msra.mxu0 %v2694
  %2734 = vmatprep.subr.mxu0 0.0
  %2735 = vmatpush1.msra.mxu0 %v2693
  %2736 = vmatprep.subr.mxu0 0.0
  %2737 = vmatpush1.msra.mxu0 %v2692
  %2738 = vmatprep.subr.mxu0 0.0
  %2739 = vmatpush2.msra.mxu0 0.0
  %2740 = vmatprep.subr.mxu0 0.0
  %2741 = vmatpush2.msra.mxu0 0.0
  %2742 = vmatprep.subr.mxu0 0.0
  %2743 = vmatpush2.msra.mxu0 0.0
  %2744 = vmatprep.subr.mxu0 0.0
  %2745 = vmatpush2.msra.mxu0 0.0
  %2746 = vmatprep.subr.mxu0 0.0
  %2747 = vmatpush2.msra.mxu0 0.0
  %2748 = vmatprep.subr.mxu0 0.0
  %2749 = vmatpush2.msra.mxu0 0.0
  %2750 = vmatprep.subr.mxu0 0.0
  %2751 = vmatpush2.msra.mxu0 0.0
  %2752 = vmatprep.subr.mxu0 0.0
  %2753 = vmatpush2.msra.mxu0 0.0
  %2754 = vmatprep.subr.mxu0 0.0
  %2755 = vmatpush2.msra.mxu0 0.0
  %2756 = vmatprep.subr.mxu0 0.0
  %2757 = vmatpush2.msra.mxu0 0.0
  %2758 = vmatprep.subr.mxu0 0.0
  %2759 = vmatpush2.msra.mxu0 0.0
  %2760 = vmatprep.subr.mxu0 0.0
  %2761 = vmatpush2.msra.mxu0 0.0
  %2762 = vmatprep.subr.mxu0 0.0
  %2763 = vmatpush2.msra.mxu0 0.0
  %2764 = vmatprep.subr.mxu0 0.0
  %2765 = vmatpush2.msra.mxu0 0.0
  %2766 = vmatprep.subr.mxu0 0.0
  %2767 = vmatpush2.msra.mxu0 0.0
  %2768 = vmatprep.subr.mxu0 0.0
  %2769 = vmatpush2.msra.mxu0 0.0
  %2770 = vmatprep.mubr.f32.mxu0 0.0
  %2771 = vmatmul.mubr.f32.gmra.mxu0 %v2701
  %v2772 = vpop.f32.mrf.mxu0
  %v2773 = vadd.f32 %v2699, %v2772
  %v2774 = vpop.f32.mrf.mxu0
  %2775 = vmatprep.mubr.f32.mxu0 0.0
  %2776 = vmatmul.mubr.f32.gmra.mxu0 %v2704
  %v2777 = vpop.f32.mrf.mxu0
  %v2778 = vadd.f32 %v2699, %v2777
  %v2779 = vpop.f32.mrf.mxu0
  %2780 = vdwg.mxu0
  %v2781 = vmul.f32 %v2773, 0.5
  %v2782 = vmul.f32 %v2778, 0.5
  %v2783 = vmul.f32 %v2773, 0.70710677
  %v2784 = vmul.f32 %v2778, 0.70710677
  %v2785 = verf.f32.pop %v2783
  %v2786 = verf.f32.pop %v2784
  %v2787 = vadd.f32 %v2785, 1.0
  %v2788 = vadd.f32 %v2786, 1.0
  %v2789 = vmul.f32 %v2781, %v2787
  %v2790 = vmul.f32 %v2782, %v2788
  %v2791 = vld [vmem:[%s2 + $0x10] sm:$0xff]
  %v2792 = vld [vmem:[%s2 + $0x28] sm:$0xff]
  %v2793 = vld [vmem:[%s2 + $0x40] sm:$0xff]
  %v2794 = vld [vmem:[%s2 + $0x58] sm:$0xff]
  %v2795 = vld [vmem:[%s2 + $0x70] sm:$0xff]
  %v2796 = vld [vmem:[%s2 + $0x88] sm:$0xff]
  %v2797 = vld [vmem:[%s2 + $0xa0] sm:$0xff]
  %v2798 = vld [vmem:[%s2 + $0xb8] sm:$0xff]
  %v2799 = vlaneseq
  %v2800 = vshrl.u32 %v2799, 7
  %v2801 = vsub.s32 2, %v2800
  %v2802 = vrot.slane %v23, %v2801
  %2811 = vrot.lane.b32.xlu0 %v2791, 64
  %v2812 = vpop.permute.xlu0 %2811
  %2813 = vrot.lane.b32.xlu0 %v2792, 64
  %v2814 = vpop.permute.xlu0 %2813
  %2815 = vrot.lane.b32.xlu0 %v2793, 64
  %v2816 = vpop.permute.xlu0 %2815
  %2817 = vrot.lane.b32.xlu0 %v2794, 64
  %v2818 = vpop.permute.xlu0 %2817
  %2819 = vrot.lane.b32.xlu0 %v2795, 64
  %v2820 = vpop.permute.xlu0 %2819
  %2821 = vrot.lane.b32.xlu0 %v2796, 64
  %v2822 = vpop.permute.xlu0 %2821
  %2823 = vrot.lane.b32.xlu0 %v2797, 64
  %v2824 = vpop.permute.xlu0 %2823
  %2825 = vrot.lane.b32.xlu0 %v2798, 64
  %v2826 = vpop.permute.xlu0 %2825
  %vm2835 = vcmask 523264
  %v2837 = vsel %vm2835, %v2789, 0
  %v2840 = vsel %vm2835, %v2790, 0
  %2842 = vmatprep.subr.mxu0 0.0
  %2843 = vmatpush1.msra.mxu0 0.0
  %2844 = vmatprep.subr.mxu0 0.0
  %2845 = vmatpush1.msra.mxu0 0.0
  %2846 = vmatprep.subr.mxu0 0.0
  %2847 = vmatpush1.msra.mxu0 0.0
  %2848 = vmatprep.subr.mxu0 0.0
  %2849 = vmatpush1.msra.mxu0 0.0
  %2850 = vmatprep.subr.mxu0 0.0
  %2851 = vmatpush1.msra.mxu0 0.0
  %2852 = vmatprep.subr.mxu0 0.0
  %2853 = vmatpush1.msra.mxu0 0.0
  %2854 = vmatprep.subr.mxu0 0.0
  %2855 = vmatpush1.msra.mxu0 0.0
  %2856 = vmatprep.subr.mxu0 0.0
  %2857 = vmatpush1.msra.mxu0 0.0
  %2858 = vmatprep.subr.mxu0 0.0
  %2859 = vmatpush1.msra.mxu0 %v2826
  %2860 = vmatprep.subr.mxu0 0.0
  %2861 = vmatpush1.msra.mxu0 %v2824
  %2862 = vmatprep.subr.mxu0 0.0
  %2863 = vmatpush1.msra.mxu0 %v2822
  %2864 = vmatprep.subr.mxu0 0.0
  %2865 = vmatpush1.msra.mxu0 %v2820
  %2866 = vmatprep.subr.mxu0 0.0
  %2867 = vmatpush1.msra.mxu0 %v2818
  %2868 = vmatprep.subr.mxu0 0.0
  %2869 = vmatpush1.msra.mxu0 %v2816
  %2870 = vmatprep.subr.mxu0 0.0
  %2871 = vmatpush1.msra.mxu0 %v2814
  %2872 = vmatprep.subr.mxu0 0.0
  %2873 = vmatpush1.msra.mxu0 %v2812
  %2874 = vmatprep.subr.mxu0 0.0
  %2875 = vmatpush2.msra.mxu0 0.0
  %2876 = vmatprep.subr.mxu0 0.0
  %2877 = vmatpush2.msra.mxu0 0.0
  %2878 = vmatprep.subr.mxu0 0.0
  %2879 = vmatpush2.msra.mxu0 0.0
  %2880 = vmatprep.subr.mxu0 0.0
  %2881 = vmatpush2.msra.mxu0 0.0
  %2882 = vmatprep.subr.mxu0 0.0
  %2883 = vmatpush2.msra.mxu0 0.0
  %2884 = vmatprep.subr.mxu0 0.0
  %2885 = vmatpush2.msra.mxu0 0.0
  %2886 = vmatprep.subr.mxu0 0.0
  %2887 = vmatpush2.msra.mxu0 0.0
  %2888 = vmatprep.subr.mxu0 0.0
  %2889 = vmatpush2.msra.mxu0 0.0
  %2890 = vmatprep.subr.mxu0 0.0
  %2891 = vmatpush2.msra.mxu0 0.0
  %2892 = vmatprep.subr.mxu0 0.0
  %2893 = vmatpush2.msra.mxu0 0.0
  %2894 = vmatprep.subr.mxu0 0.0
  %2895 = vmatpush2.msra.mxu0 0.0
  %2896 = vmatprep.subr.mxu0 0.0
  %2897 = vmatpush2.msra.mxu0 0.0
  %2898 = vmatprep.subr.mxu0 0.0
  %2899 = vmatpush2.msra.mxu0 0.0
  %2900 = vmatprep.subr.mxu0 0.0
  %2901 = vmatpush2.msra.mxu0 0.0
  %2902 = vmatprep.subr.mxu0 0.0
  %2903 = vmatpush2.msra.mxu0 0.0
  %2904 = vmatprep.subr.mxu0 0.0
  %2905 = vmatpush2.msra.mxu0 0.0
  %2906 = vmatprep.mubr.f32.mxu0 0.0
  %2907 = vmatmul.mubr.f32.gmra.mxu0 %v2837
  %v2908 = vpop.f32.mrf.mxu0
  %v2909 = vadd.f32 %v2802, %v2908
  %v2910 = vpop.f32.mrf.mxu0
  %2911 = vmatprep.mubr.f32.mxu0 0.0
  %2912 = vmatmul.mubr.f32.gmra.mxu0 %v2840
  %v2913 = vpop.f32.mrf.mxu0
  %v2914 = vadd.f32 %v2802, %v2913
  %v2915 = vpop.f32.mrf.mxu0
  %2916 = vdwg.mxu0
  %v2917 = vadd.f32 %v2690, %v2909
  %v2918 = vadd.f32 %v2691, %v2914
  %v2919 = vsel %vm33, %v2917, 0.0
  %2920 = vadd.xlane.f32.xlu0 %v2919
  %v2921 = vpop.xlane.xlu0 %2920
  %v2922 = vsel %vm33, %v2918, 0.0
  %2923 = vadd.xlane.f32.xlu0 %v2922
  %v2924 = vpop.xlane.xlu0 %2923
  %v2925 = vmul.f32 %v2921, %v1277
  %v2926 = vmul.f32 %v2924, %v1277
  %v2927 = vsub.f32 %v2917, %v2925
  %v2928 = vsub.f32 %v2918, %v2926
  %v2929 = vmul.f32 %v2927, %v2927
  %v2930 = vmul.f32 %v2928, %v2928
  %v2931 = vsel %vm33, %v2929, 0.0
  %2932 = vadd.xlane.f32.xlu0 %v2931
  %v2933 = vpop.xlane.xlu0 %2932
  %v2934 = vsel %vm33, %v2930, 0.0
  %2935 = vadd.xlane.f32.xlu0 %v2934
  %v2936 = vpop.xlane.xlu0 %2935
  %v2937 = vmul.f32 %v2933, %v1277
  %v2938 = vmul.f32 %v2936, %v1277
  %v2939 = vadd.f32 %v2937, 1e-05
  %v2940 = vadd.f32 %v2938, 1e-05
  %v2941 = vrsqrt.pop %v2939
  %v2942 = vrsqrt.pop %v2940
  %v2943 = vmul.f32 %v2927, %v2941
  %v2944 = vmul.f32 %v2928, %v2942
  %v2945 = vlaneseq
  %v2946 = vshrl.u32 %v2945, 7
  %v2947 = vsub.s32 3, %v2946
  %v2948 = vrot.slane %v23, %v2947
  %v2949 = vmul.f32 %v2943, %v2948
  %v2950 = vmul.f32 %v2944, %v2948
  %v2951 = vlaneseq
  %v2952 = vshrl.u32 %v2951, 7
  %v2953 = vsub.s32 4, %v2952
  %v2954 = vrot.slane %v23, %v2953
  %v2955 = vadd.f32 %v2949, %v2954
  %v2956 = vadd.f32 %v2950, %v2954
  %2957 = vrot.lane.b32.xlu0 %v430, 16
  %v2958 = vpop.permute.xlu0 %2957
  %2959 = vrot.lane.b32.xlu0 %v431, 16
  %v2960 = vpop.permute.xlu0 %2959
  %2963 = vrot.lane.b32.xlu0 %v800, 32
  %v2964 = vpop.permute.xlu0 %2963
  %2965 = vrot.lane.b32.xlu0 %v801, 32
  %v2966 = vpop.permute.xlu0 %2965
  %2969 = vrot.lane.b32.xlu0 %v1087, 48
  %v2970 = vpop.permute.xlu0 %2969
  %2971 = vrot.lane.b32.xlu0 %v1088, 48
  %v2972 = vpop.permute.xlu0 %2971
  %v2975 = vsel %vm209, %v230, %v2958
  %v2976 = vsel %vm209, %v231, %v2960
  %v2977 = vsel %vm33, %v2975, %v2964
  %v2978 = vsel %vm33, %v2976, %v2966
  %vm2979 = vcmask 392192
  %v2980 = vsel %vm2979, %v2977, %v2970
  %v2981 = vsel %vm2979, %v2978, %v2972
  %2984 = vrot.lane.b32.xlu0 %v2980, 32
  %v2985 = vpop.permute.xlu0 %2984
  %2986 = vrot.lane.b32.xlu0 %v2981, 32
  %v2987 = vpop.permute.xlu0 %2986
  %v2990 = vsel %vm33, %v2955, %v2985
  %v2991 = vsel %vm33, %v2956, %v2987
  %vm2992 = vcmask 785408
  %v2993 = vsel %vm2992, %v2990, 0.0
  %v2994 = vsel %vm2992, %v2991, 0.0
  %2995 = vst [vmem:[%s4] sm:$0xff] %v2993
  %2996 = vst [vmem:[%s4 + $0x8] sm:$0xff] %v2994
  // Predicated region
  $region18: #{decoder_layer.1} parent=0 // pred_check
    _
  $region19: #{decoder_layer.1} parent=0 // pred_check_branch
    %2998 = sbr.rel (0) target = $region21
  $region20: #{decoder_layer.1} parent=0 // pred_region
    _
  $region21: #{decoder_layer.1} parent=0 // pred_fallthru
    _
  // Predicated region
  $region22: #{decoder_layer.1} parent=0 // pred_check
    _
  $region23: #{decoder_layer.1} parent=0 // pred_check_branch
    %3000 = sbr.rel (0) target = $region25
  $region24: #{decoder_layer.1} parent=0 // pred_region
    _
  $region25: #{decoder_layer.1} parent=0 // pred_fallthru
    _

</llo_original>
